<compile_context>
chip_gen: v5e
topology: v5e:2x2
jax: 0.10.0
libtpu: 0.0.40
codegen_flags: <defaults>
</compile_context>

<pallas_src>
import jax
import jax.numpy as jnp
from jax import lax
from jax.experimental import pallas as pl
from jax.experimental.pallas import tpu as pltpu


def _round_up(x, m):
    return (x + m - 1) // m * m


def conv_glu(x_nchw, weight, bias, kernel_size=(7, 7), *,
             compute_dtype=jnp.bfloat16, batch_block=None):
    """ConvGLU forward.

    x_nchw : (N, C_in, H, W)            -- PyTorch NCHW input
    weight : (2*C_out, C_in, KH, KW)    -- PyTorch Conv2d weight layout
    bias   : (2*C_out,)
    returns: (N, C_out, H, W)
    """
    KH, KW = kernel_size
    pad_h, pad_w = KH // 2, KW // 2
    N, C_in, H, W = x_nchw.shape
    C2 = int(weight.shape[0])
    C_out = C2 // 2

    Hp, Wp = H + 2 * pad_h, W + 2 * pad_w
    H_out, W_out = Hp - KH + 1, Wp - KW + 1          # == H, W for odd kernels

    itemsize = jnp.dtype(compute_dtype).itemsize
    pack = (4 // itemsize) * 8                       # sublane rows per native tile (f32:8, bf16:16)
    Cp_in = max(_round_up(C_in, pack), pack)         # channels padded -> unmasked tap slabs
    Cp_out = max(_round_up(C_out, 8), 8)             # f32 accumulator split granularity
    Kp = KH * KW * Cp_in                             # fused contraction size (tap-major)

    Pq = H_out * Wp                                  # extended (width-halo) output positions
    Pq_pad = _round_up(Pq, 128)                      # lane-dense output width
    max_off = (KH - 1) * Wp + (KW - 1)               # largest tap offset into the flat image
    L_need = max_off + Pq_pad                        # one-past-last flat index any tap reads
    extra_h = pl.cdiv(max(L_need - Hp * Wp, 0), Wp)  # extra bottom rows so tap reads stay in-bounds
    L = (Hp + extra_h) * Wp

    # Pick how many images per grid step (keep the im2col scratch under ~8 MiB).
    if batch_block is None:
        budget = 8 * 1024 * 1024
        batch_block = 1
        for b in range(N, 0, -1):
            if N % b == 0 and Kp * b * Pq_pad * itemsize <= budget:
                batch_block = b
                break
    B_blk = batch_block
    assert N % B_blk == 0, (N, B_blk)

    # ---- wrapper prep: ONE pad (channels + halo + tail rows), free reshape, no transpose of x ----
    x_pad = jnp.pad(x_nchw.astype(compute_dtype),
                    ((0, 0), (0, Cp_in - C_in),
                     (pad_h, pad_h + extra_h), (pad_w, pad_w)))
    x_flat = x_pad.reshape(N, Cp_in, L)              # row stride = Wp

    # Weights -> tap-major (kh, kw, c) rows with the channel group padded to Cp_in,
    # then both GLU halves stacked [lin; gate] and each half padded to Cp_out rows.
    w_t = jnp.transpose(weight, (0, 2, 3, 1))                          # (2*C_out, KH, KW, C_in)
    w_t = jnp.pad(w_t, ((0, 0), (0, 0), (0, 0), (0, Cp_in - C_in)))
    w_k = w_t.reshape(C2, Kp).astype(compute_dtype)
    w_fused = jnp.zeros((2 * Cp_out, Kp), compute_dtype)
    w_fused = w_fused.at[:C_out].set(w_k[:C_out])
    w_fused = w_fused.at[Cp_out:Cp_out + C_out].set(w_k[C_out:])
    b_fused = jnp.zeros((2 * Cp_out, 1), jnp.float32)
    b_fused = b_fused.at[:C_out, 0].set(bias[:C_out].astype(jnp.float32))
    b_fused = b_fused.at[Cp_out:Cp_out + C_out, 0].set(bias[C_out:].astype(jnp.float32))

    def kernel(x_ref, w_ref, b_ref, o_ref, patch_ref):
        # x_ref:     (B_blk, Cp_in, L)          flattened padded images (row stride Wp), bf16
        # w_ref:     (2*Cp_out, Kp)             fused [lin; gate] weights, bf16
        # b_ref:     (2*Cp_out, 1)              fused bias, f32
        # o_ref:     (B_blk, Cp_out, Pq_pad)    lane-dense extended output
        # patch_ref: (Kp, B_blk*Pq_pad)         im2col scratch, bf16

        # im2col: tap (kh, kw) of image b is ONE contiguous static-offset lane slice of
        # the flat image; the destination slab is a full sublane group (Cp_in rows) and
        # a 128-aligned Pq_pad lane chunk -> unmasked stores. Every row/lane is written.
        for b in range(B_blk):
            for kh in range(KH):
                for kw in range(KW):
                    t = kh * KW + kw
                    off = kh * Wp + kw
                    patch_ref[t * Cp_in:(t + 1) * Cp_in,
                              b * Pq_pad:(b + 1) * Pq_pad] = x_ref[b, :, off:off + Pq_pad]

        # Whole convolution + both GLU halves = one MXU matmul (K = KH*KW*Cp_in),
        # f32 accumulation, f32 epilogue.
        acc = jnp.dot(w_ref[...], patch_ref[...],
                      preferred_element_type=jnp.float32) + b_ref[...]
        lin, gate = acc[:Cp_out], acc[Cp_out:]        # sublane-aligned split (Cp_out % 8 == 0)
        res = lin * jax.nn.sigmoid(gate)
        for b in range(B_blk):                        # per-batch chunks start at multiples of 128
            o_ref[b] = res[:, b * Pq_pad:(b + 1) * Pq_pad].astype(o_ref.dtype)

    out_ext = pl.pallas_call(
        kernel,
        out_shape=jax.ShapeDtypeStruct((N, Cp_out, Pq_pad), x_nchw.dtype),
        grid_spec=pltpu.PrefetchScalarGridSpec(
            num_scalar_prefetch=0,
            grid=(N // B_blk,),
            in_specs=[
                pl.BlockSpec((B_blk, Cp_in, L), lambda n: (n, 0, 0)),
                pl.BlockSpec((2 * Cp_out, Kp), lambda n: (0, 0)),
                pl.BlockSpec((2 * Cp_out, 1), lambda n: (0, 0)),
            ],
            out_specs=pl.BlockSpec((B_blk, Cp_out, Pq_pad), lambda n: (n, 0, 0)),
            scratch_shapes=[pltpu.VMEM((Kp, B_blk * Pq_pad), compute_dtype)],
        ),
        compiler_params=pltpu.CompilerParams(
            dimension_semantics=("parallel",),
            vmem_limit_bytes=32 * 1024 * 1024),
        cost_estimate=pl.CostEstimate(
            flops=2 * N * H_out * W_out * (KH * KW * C_in) * C2,
            transcendentals=N * H_out * W_out * C_out,
            bytes_accessed=(itemsize * (N * Cp_in * L + 2 * Cp_out * Kp)
                            + 4 * (2 * Cp_out + N * Cp_out * Pq_pad)),
        ),
    )(x_flat, w_fused, b_fused)

    # Drop padded output channels, the lane tail, and the width-halo junk columns.
    out = out_ext[:, :C_out, :Pq].reshape(N, C_out, H_out, Wp)[:, :, :, :W_out]
    return out


def conv_glu_reference(x_nchw, weight, bias, kernel_size=(7, 7), conv_dtype=None):
    """Pure-JAX reference (mirrors nn.Conv2d + GLU). conv_dtype optionally casts the
    MXU operands (to mimic the kernel's bf16 operands with f32 accumulation)."""
    KH, KW = kernel_size
    pad_h, pad_w = KH // 2, KW // 2
    xc = x_nchw if conv_dtype is None else x_nchw.astype(conv_dtype)
    wc = weight if conv_dtype is None else weight.astype(conv_dtype)
    y = lax.conv_general_dilated(
        xc, wc,
        window_strides=(1, 1),
        padding=((pad_h, pad_h), (pad_w, pad_w)),
        dimension_numbers=("NCHW", "OIHW", "NCHW"),
        preferred_element_type=jnp.float32)
    y = y.astype(jnp.float32) + bias.astype(jnp.float32)[None, :, None, None]
    c = y.shape[1]
    return (y[:, :c // 2] * jax.nn.sigmoid(y[:, c // 2:])).astype(x_nchw.dtype)


if __name__ == "__main__":
    # Small deterministic setup: batch=2, in_ch=4, out_ch=4, spatial 16x16.
    key = jax.random.PRNGKey(0)
    k_x, k_w, k_b = jax.random.split(key, 3)

    N, C_in, H, W = 2, 4, 16, 16
    C_out = 4
    KH, KW = 7, 7

    x = jax.random.normal(k_x, (N, C_in, H, W), dtype=jnp.float32)
    weight = jax.random.normal(k_w, (2 * C_out, C_in, KH, KW), dtype=jnp.float32) * 0.1
    bias = jax.random.normal(k_b, (2 * C_out,), dtype=jnp.float32) * 0.1

    out = conv_glu(x, weight, bias, kernel_size=(KH, KW))
    out = jax.block_until_ready(out)
    assert out.shape == (N, C_out, H, W), out.shape

    # Tight check vs a reference using the same bf16 MXU operands / f32 accumulation.
    ref_bf16 = conv_glu_reference(x, weight, bias, (KH, KW), conv_dtype=jnp.bfloat16)
    assert jnp.allclose(out, ref_bf16, rtol=1e-3, atol=1e-3), "mismatch vs bf16-operand reference"

    # Loose sanity check vs full-f32 math (bounds the bf16 operand-rounding error).
    ref_f32 = conv_glu_reference(x, weight, bias, (KH, KW))
    assert jnp.allclose(out, ref_f32, rtol=6e-2, atol=6e-2), "mismatch vs f32 reference"

    print("KERNEL_OK")
</pallas_src>

<mosaic_0001>
module attributes {stable_mosaic.version = 11 : i64} {
  func.func @kernel(%arg0: i32, %arg1: memref<2x16x528xbf16, #tpu.memory_space<vmem>>, %arg2: memref<16x784xbf16, #tpu.memory_space<vmem>>, %arg3: memref<16x1xf32, #tpu.memory_space<vmem>>, %arg4: memref<2x8x384xf32, #tpu.memory_space<vmem>>, %arg5: memref<784x768xbf16, #tpu.memory_space<vmem>>) attributes {dimension_semantics = [#tpu.dimension_semantics<parallel>], iteration_bounds = array<i64: 1>, scalar_prefetch = 0 : i64, scratch_operands = 1 : i64, tpu.core_type = #tpu.core_type<tc>, window_params = [{transform_indices = @transform_0, window_bounds = array<i64: 2, 16, 528>}, {pipeline_mode = #tpu.pipeline_mode<synchronous>, transform_indices = @transform_1, window_bounds = array<i64: 16, 784>}, {pipeline_mode = #tpu.pipeline_mode<synchronous>, transform_indices = @transform_2, window_bounds = array<i64: 16, 1>}, {transform_indices = @transform_3, window_bounds = array<i64: 2, 8, 384>}]} {
    %c0 = arith.constant 0 : index
    %c0_0 = arith.constant 0 : index
    %c0_1 = arith.constant 0 : index
    %0 = vector.load %arg1[%c0, %c0_0, %c0_1] : memref<2x16x528xbf16, #tpu.memory_space<vmem>>, vector<1x16x384xbf16>
    %1 = vector.shape_cast %0 : vector<1x16x384xbf16> to vector<16x384xbf16>
    %c0_2 = arith.constant 0 : index
    %c0_3 = arith.constant 0 : index
    %2 = vector.load %arg5[%c0_2, %c0_3] : memref<784x768xbf16, #tpu.memory_space<vmem>>, vector<16x384xbf16>
    tpu.vector_store %arg5[%c0_2, %c0_3], %1 {strides = array<i32>} : memref<784x768xbf16, #tpu.memory_space<vmem>>, vector<16x384xbf16>,
    %c0_4 = arith.constant 0 : index
    %c0_5 = arith.constant 0 : index
    %c1 = arith.constant 1 : index
    %3 = vector.load %arg1[%c0_4, %c0_5, %c1] : memref<2x16x528xbf16, #tpu.memory_space<vmem>>, vector<1x16x384xbf16>
    %4 = vector.shape_cast %3 : vector<1x16x384xbf16> to vector<16x384xbf16>
    %c16 = arith.constant 16 : index
    %c0_6 = arith.constant 0 : index
    %5 = vector.load %arg5[%c16, %c0_6] : memref<784x768xbf16, #tpu.memory_space<vmem>>, vector<16x384xbf16>
    tpu.vector_store %arg5[%c16, %c0_6], %4 {strides = array<i32>} : memref<784x768xbf16, #tpu.memory_space<vmem>>, vector<16x384xbf16>,
    %c0_7 = arith.constant 0 : index
    %c0_8 = arith.constant 0 : index
    %c2 = arith.constant 2 : index
    %6 = vector.load %arg1[%c0_7, %c0_8, %c2] : memref<2x16x528xbf16, #tpu.memory_space<vmem>>, vector<1x16x384xbf16>
    %7 = vector.shape_cast %6 : vector<1x16x384xbf16> to vector<16x384xbf16>
    %c32 = arith.constant 32 : index
    %c0_9 = arith.constant 0 : index
    %8 = vector.load %arg5[%c32, %c0_9] : memref<784x768xbf16, #tpu.memory_space<vmem>>, vector<16x384xbf16>
    tpu.vector_store %arg5[%c32, %c0_9], %7 {strides = array<i32>} : memref<784x768xbf16, #tpu.memory_space<vmem>>, vector<16x384xbf16>,
    %c0_10 = arith.constant 0 : index
    %c0_11 = arith.constant 0 : index
    %c3 = arith.constant 3 : index
    %9 = vector.load %arg1[%c0_10, %c0_11, %c3] : memref<2x16x528xbf16, #tpu.memory_space<vmem>>, vector<1x16x384xbf16>
    %10 = vector.shape_cast %9 : vector<1x16x384xbf16> to vector<16x384xbf16>
    %c48 = arith.constant 48 : index
    %c0_12 = arith.constant 0 : index
    %11 = vector.load %arg5[%c48, %c0_12] : memref<784x768xbf16, #tpu.memory_space<vmem>>, vector<16x384xbf16>
    tpu.vector_store %arg5[%c48, %c0_12], %10 {strides = array<i32>} : memref<784x768xbf16, #tpu.memory_space<vmem>>, vector<16x384xbf16>,
    %c0_13 = arith.constant 0 : index
    %c0_14 = arith.constant 0 : index
    %c4 = arith.constant 4 : index
    %12 = vector.load %arg1[%c0_13, %c0_14, %c4] : memref<2x16x528xbf16, #tpu.memory_space<vmem>>, vector<1x16x384xbf16>
    %13 = vector.shape_cast %12 : vector<1x16x384xbf16> to vector<16x384xbf16>
    %c64 = arith.constant 64 : index
    %c0_15 = arith.constant 0 : index
    %14 = vector.load %arg5[%c64, %c0_15] : memref<784x768xbf16, #tpu.memory_space<vmem>>, vector<16x384xbf16>
    tpu.vector_store %arg5[%c64, %c0_15], %13 {strides = array<i32>} : memref<784x768xbf16, #tpu.memory_space<vmem>>, vector<16x384xbf16>,
    %c0_16 = arith.constant 0 : index
    %c0_17 = arith.constant 0 : index
    %c5 = arith.constant 5 : index
    %15 = vector.load %arg1[%c0_16, %c0_17, %c5] : memref<2x16x528xbf16, #tpu.memory_space<vmem>>, vector<1x16x384xbf16>
    %16 = vector.shape_cast %15 : vector<1x16x384xbf16> to vector<16x384xbf16>
    %c80 = arith.constant 80 : index
    %c0_18 = arith.constant 0 : index
    %17 = vector.load %arg5[%c80, %c0_18] : memref<784x768xbf16, #tpu.memory_space<vmem>>, vector<16x384xbf16>
    tpu.vector_store %arg5[%c80, %c0_18], %16 {strides = array<i32>} : memref<784x768xbf16, #tpu.memory_space<vmem>>, vector<16x384xbf16>,
    %c0_19 = arith.constant 0 : index
    %c0_20 = arith.constant 0 : index
    %c6 = arith.constant 6 : index
    %18 = vector.load %arg1[%c0_19, %c0_20, %c6] : memref<2x16x528xbf16, #tpu.memory_space<vmem>>, vector<1x16x384xbf16>
    %19 = vector.shape_cast %18 : vector<1x16x384xbf16> to vector<16x384xbf16>
    %c96 = arith.constant 96 : index
    %c0_21 = arith.constant 0 : index
    %20 = vector.load %arg5[%c96, %c0_21] : memref<784x768xbf16, #tpu.memory_space<vmem>>, vector<16x384xbf16>
    tpu.vector_store %arg5[%c96, %c0_21], %19 {strides = array<i32>} : memref<784x768xbf16, #tpu.memory_space<vmem>>, vector<16x384xbf16>,
    %c0_22 = arith.constant 0 : index
    %c0_23 = arith.constant 0 : index
    %c22 = arith.constant 22 : index
    %21 = vector.load %arg1[%c0_22, %c0_23, %c22] : memref<2x16x528xbf16, #tpu.memory_space<vmem>>, vector<1x16x384xbf16>
    %22 = vector.shape_cast %21 : vector<1x16x384xbf16> to vector<16x384xbf16>
    %c112 = arith.constant 112 : index
    %c0_24 = arith.constant 0 : index
    %23 = vector.load %arg5[%c112, %c0_24] : memref<784x768xbf16, #tpu.memory_space<vmem>>, vector<16x384xbf16>
    tpu.vector_store %arg5[%c112, %c0_24], %22 {strides = array<i32>} : memref<784x768xbf16, #tpu.memory_space<vmem>>, vector<16x384xbf16>,
    %c0_25 = arith.constant 0 : index
    %c0_26 = arith.constant 0 : index
    %c23 = arith.constant 23 : index
    %24 = vector.load %arg1[%c0_25, %c0_26, %c23] : memref<2x16x528xbf16, #tpu.memory_space<vmem>>, vector<1x16x384xbf16>
    %25 = vector.shape_cast %24 : vector<1x16x384xbf16> to vector<16x384xbf16>
    %c128 = arith.constant 128 : index
    %c0_27 = arith.constant 0 : index
    %26 = vector.load %arg5[%c128, %c0_27] : memref<784x768xbf16, #tpu.memory_space<vmem>>, vector<16x384xbf16>
    tpu.vector_store %arg5[%c128, %c0_27], %25 {strides = array<i32>} : memref<784x768xbf16, #tpu.memory_space<vmem>>, vector<16x384xbf16>,
    %c0_28 = arith.constant 0 : index
    %c0_29 = arith.constant 0 : index
    %c24 = arith.constant 24 : index
    %27 = vector.load %arg1[%c0_28, %c0_29, %c24] : memref<2x16x528xbf16, #tpu.memory_space<vmem>>, vector<1x16x384xbf16>
    %28 = vector.shape_cast %27 : vector<1x16x384xbf16> to vector<16x384xbf16>
    %c144 = arith.constant 144 : index
    %c0_30 = arith.constant 0 : index
    %29 = vector.load %arg5[%c144, %c0_30] : memref<784x768xbf16, #tpu.memory_space<vmem>>, vector<16x384xbf16>
    tpu.vector_store %arg5[%c144, %c0_30], %28 {strides = array<i32>} : memref<784x768xbf16, #tpu.memory_space<vmem>>, vector<16x384xbf16>,
    %c0_31 = arith.constant 0 : index
    %c0_32 = arith.constant 0 : index
    %c25 = arith.constant 25 : index
    %30 = vector.load %arg1[%c0_31, %c0_32, %c25] : memref<2x16x528xbf16, #tpu.memory_space<vmem>>, vector<1x16x384xbf16>
    %31 = vector.shape_cast %30 : vector<1x16x384xbf16> to vector<16x384xbf16>
    %c160 = arith.constant 160 : index
    %c0_33 = arith.constant 0 : index
    %32 = vector.load %arg5[%c160, %c0_33] : memref<784x768xbf16, #tpu.memory_space<vmem>>, vector<16x384xbf16>
    tpu.vector_store %arg5[%c160, %c0_33], %31 {strides = array<i32>} : memref<784x768xbf16, #tpu.memory_space<vmem>>, vector<16x384xbf16>,
    %c0_34 = arith.constant 0 : index
    %c0_35 = arith.constant 0 : index
    %c26 = arith.constant 26 : index
    %33 = vector.load %arg1[%c0_34, %c0_35, %c26] : memref<2x16x528xbf16, #tpu.memory_space<vmem>>, vector<1x16x384xbf16>
    %34 = vector.shape_cast %33 : vector<1x16x384xbf16> to vector<16x384xbf16>
    %c176 = arith.constant 176 : index
    %c0_36 = arith.constant 0 : index
    %35 = vector.load %arg5[%c176, %c0_36] : memref<784x768xbf16, #tpu.memory_space<vmem>>, vector<16x384xbf16>
    tpu.vector_store %arg5[%c176, %c0_36], %34 {strides = array<i32>} : memref<784x768xbf16, #tpu.memory_space<vmem>>, vector<16x384xbf16>,
    %c0_37 = arith.constant 0 : index
    %c0_38 = arith.constant 0 : index
    %c27 = arith.constant 27 : index
    %36 = vector.load %arg1[%c0_37, %c0_38, %c27] : memref<2x16x528xbf16, #tpu.memory_space<vmem>>, vector<1x16x384xbf16>
    %37 = vector.shape_cast %36 : vector<1x16x384xbf16> to vector<16x384xbf16>
    %c192 = arith.constant 192 : index
    %c0_39 = arith.constant 0 : index
    %38 = vector.load %arg5[%c192, %c0_39] : memref<784x768xbf16, #tpu.memory_space<vmem>>, vector<16x384xbf16>
    tpu.vector_store %arg5[%c192, %c0_39], %37 {strides = array<i32>} : memref<784x768xbf16, #tpu.memory_space<vmem>>, vector<16x384xbf16>,
    %c0_40 = arith.constant 0 : index
    %c0_41 = arith.constant 0 : index
    %c28 = arith.constant 28 : index
    %39 = vector.load %arg1[%c0_40, %c0_41, %c28] : memref<2x16x528xbf16, #tpu.memory_space<vmem>>, vector<1x16x384xbf16>
    %40 = vector.shape_cast %39 : vector<1x16x384xbf16> to vector<16x384xbf16>
    %c208 = arith.constant 208 : index
    %c0_42 = arith.constant 0 : index
    %41 = vector.load %arg5[%c208, %c0_42] : memref<784x768xbf16, #tpu.memory_space<vmem>>, vector<16x384xbf16>
    tpu.vector_store %arg5[%c208, %c0_42], %40 {strides = array<i32>} : memref<784x768xbf16, #tpu.memory_space<vmem>>, vector<16x384xbf16>,
    %c0_43 = arith.constant 0 : index
    %c0_44 = arith.constant 0 : index
    %c44 = arith.constant 44 : index
    %42 = vector.load %arg1[%c0_43, %c0_44, %c44] : memref<2x16x528xbf16, #tpu.memory_space<vmem>>, vector<1x16x384xbf16>
    %43 = vector.shape_cast %42 : vector<1x16x384xbf16> to vector<16x384xbf16>
    %c224 = arith.constant 224 : index
    %c0_45 = arith.constant 0 : index
    %44 = vector.load %arg5[%c224, %c0_45] : memref<784x768xbf16, #tpu.memory_space<vmem>>, vector<16x384xbf16>
    tpu.vector_store %arg5[%c224, %c0_45], %43 {strides = array<i32>} : memref<784x768xbf16, #tpu.memory_space<vmem>>, vector<16x384xbf16>,
    %c0_46 = arith.constant 0 : index
    %c0_47 = arith.constant 0 : index
    %c45 = arith.constant 45 : index
    %45 = vector.load %arg1[%c0_46, %c0_47, %c45] : memref<2x16x528xbf16, #tpu.memory_space<vmem>>, vector<1x16x384xbf16>
    %46 = vector.shape_cast %45 : vector<1x16x384xbf16> to vector<16x384xbf16>
    %c240 = arith.constant 240 : index
    %c0_48 = arith.constant 0 : index
    %47 = vector.load %arg5[%c240, %c0_48] : memref<784x768xbf16, #tpu.memory_space<vmem>>, vector<16x384xbf16>
    tpu.vector_store %arg5[%c240, %c0_48], %46 {strides = array<i32>} : memref<784x768xbf16, #tpu.memory_space<vmem>>, vector<16x384xbf16>,
    %c0_49 = arith.constant 0 : index
    %c0_50 = arith.constant 0 : index
    %c46 = arith.constant 46 : index
    %48 = vector.load %arg1[%c0_49, %c0_50, %c46] : memref<2x16x528xbf16, #tpu.memory_space<vmem>>, vector<1x16x384xbf16>
    %49 = vector.shape_cast %48 : vector<1x16x384xbf16> to vector<16x384xbf16>
    %c256 = arith.constant 256 : index
    %c0_51 = arith.constant 0 : index
    %50 = vector.load %arg5[%c256, %c0_51] : memref<784x768xbf16, #tpu.memory_space<vmem>>, vector<16x384xbf16>
    tpu.vector_store %arg5[%c256, %c0_51], %49 {strides = array<i32>} : memref<784x768xbf16, #tpu.memory_space<vmem>>, vector<16x384xbf16>,
    %c0_52 = arith.constant 0 : index
    %c0_53 = arith.constant 0 : index
    %c47 = arith.constant 47 : index
    %51 = vector.load %arg1[%c0_52, %c0_53, %c47] : memref<2x16x528xbf16, #tpu.memory_space<vmem>>, vector<1x16x384xbf16>
    %52 = vector.shape_cast %51 : vector<1x16x384xbf16> to vector<16x384xbf16>
    %c272 = arith.constant 272 : index
    %c0_54 = arith.constant 0 : index
    %53 = vector.load %arg5[%c272, %c0_54] : memref<784x768xbf16, #tpu.memory_space<vmem>>, vector<16x384xbf16>
    tpu.vector_store %arg5[%c272, %c0_54], %52 {strides = array<i32>} : memref<784x768xbf16, #tpu.memory_space<vmem>>, vector<16x384xbf16>,
    %c0_55 = arith.constant 0 : index
    %c0_56 = arith.constant 0 : index
    %c48_57 = arith.constant 48 : index
    %54 = vector.load %arg1[%c0_55, %c0_56, %c48_57] : memref<2x16x528xbf16, #tpu.memory_space<vmem>>, vector<1x16x384xbf16>
    %55 = vector.shape_cast %54 : vector<1x16x384xbf16> to vector<16x384xbf16>
    %c288 = arith.constant 288 : index
    %c0_58 = arith.constant 0 : index
    %56 = vector.load %arg5[%c288, %c0_58] : memref<784x768xbf16, #tpu.memory_space<vmem>>, vector<16x384xbf16>
    tpu.vector_store %arg5[%c288, %c0_58], %55 {strides = array<i32>} : memref<784x768xbf16, #tpu.memory_space<vmem>>, vector<16x384xbf16>,
    %c0_59 = arith.constant 0 : index
    %c0_60 = arith.constant 0 : index
    %c49 = arith.constant 49 : index
    %57 = vector.load %arg1[%c0_59, %c0_60, %c49] : memref<2x16x528xbf16, #tpu.memory_space<vmem>>, vector<1x16x384xbf16>
    %58 = vector.shape_cast %57 : vector<1x16x384xbf16> to vector<16x384xbf16>
    %c304 = arith.constant 304 : index
    %c0_61 = arith.constant 0 : index
    %59 = vector.load %arg5[%c304, %c0_61] : memref<784x768xbf16, #tpu.memory_space<vmem>>, vector<16x384xbf16>
    tpu.vector_store %arg5[%c304, %c0_61], %58 {strides = array<i32>} : memref<784x768xbf16, #tpu.memory_space<vmem>>, vector<16x384xbf16>,
    %c0_62 = arith.constant 0 : index
    %c0_63 = arith.constant 0 : index
    %c50 = arith.constant 50 : index
    %60 = vector.load %arg1[%c0_62, %c0_63, %c50] : memref<2x16x528xbf16, #tpu.memory_space<vmem>>, vector<1x16x384xbf16>
    %61 = vector.shape_cast %60 : vector<1x16x384xbf16> to vector<16x384xbf16>
    %c320 = arith.constant 320 : index
    %c0_64 = arith.constant 0 : index
    %62 = vector.load %arg5[%c320, %c0_64] : memref<784x768xbf16, #tpu.memory_space<vmem>>, vector<16x384xbf16>
    tpu.vector_store %arg5[%c320, %c0_64], %61 {strides = array<i32>} : memref<784x768xbf16, #tpu.memory_space<vmem>>, vector<16x384xbf16>,
    %c0_65 = arith.constant 0 : index
    %c0_66 = arith.constant 0 : index
    %c66 = arith.constant 66 : index
    %63 = vector.load %arg1[%c0_65, %c0_66, %c66] : memref<2x16x528xbf16, #tpu.memory_space<vmem>>, vector<1x16x384xbf16>
    %64 = vector.shape_cast %63 : vector<1x16x384xbf16> to vector<16x384xbf16>
    %c336 = arith.constant 336 : index
    %c0_67 = arith.constant 0 : index
    %65 = vector.load %arg5[%c336, %c0_67] : memref<784x768xbf16, #tpu.memory_space<vmem>>, vector<16x384xbf16>
    tpu.vector_store %arg5[%c336, %c0_67], %64 {strides = array<i32>} : memref<784x768xbf16, #tpu.memory_space<vmem>>, vector<16x384xbf16>,
    %c0_68 = arith.constant 0 : index
    %c0_69 = arith.constant 0 : index
    %c67 = arith.constant 67 : index
    %66 = vector.load %arg1[%c0_68, %c0_69, %c67] : memref<2x16x528xbf16, #tpu.memory_space<vmem>>, vector<1x16x384xbf16>
    %67 = vector.shape_cast %66 : vector<1x16x384xbf16> to vector<16x384xbf16>
    %c352 = arith.constant 352 : index
    %c0_70 = arith.constant 0 : index
    %68 = vector.load %arg5[%c352, %c0_70] : memref<784x768xbf16, #tpu.memory_space<vmem>>, vector<16x384xbf16>
    tpu.vector_store %arg5[%c352, %c0_70], %67 {strides = array<i32>} : memref<784x768xbf16, #tpu.memory_space<vmem>>, vector<16x384xbf16>,
    %c0_71 = arith.constant 0 : index
    %c0_72 = arith.constant 0 : index
    %c68 = arith.constant 68 : index
    %69 = vector.load %arg1[%c0_71, %c0_72, %c68] : memref<2x16x528xbf16, #tpu.memory_space<vmem>>, vector<1x16x384xbf16>
    %70 = vector.shape_cast %69 : vector<1x16x384xbf16> to vector<16x384xbf16>
    %c368 = arith.constant 368 : index
    %c0_73 = arith.constant 0 : index
    %71 = vector.load %arg5[%c368, %c0_73] : memref<784x768xbf16, #tpu.memory_space<vmem>>, vector<16x384xbf16>
    tpu.vector_store %arg5[%c368, %c0_73], %70 {strides = array<i32>} : memref<784x768xbf16, #tpu.memory_space<vmem>>, vector<16x384xbf16>,
    %c0_74 = arith.constant 0 : index
    %c0_75 = arith.constant 0 : index
    %c69 = arith.constant 69 : index
    %72 = vector.load %arg1[%c0_74, %c0_75, %c69] : memref<2x16x528xbf16, #tpu.memory_space<vmem>>, vector<1x16x384xbf16>
    %73 = vector.shape_cast %72 : vector<1x16x384xbf16> to vector<16x384xbf16>
    %c384 = arith.constant 384 : index
    %c0_76 = arith.constant 0 : index
    %74 = vector.load %arg5[%c384, %c0_76] : memref<784x768xbf16, #tpu.memory_space<vmem>>, vector<16x384xbf16>
    tpu.vector_store %arg5[%c384, %c0_76], %73 {strides = array<i32>} : memref<784x768xbf16, #tpu.memory_space<vmem>>, vector<16x384xbf16>,
    %c0_77 = arith.constant 0 : index
    %c0_78 = arith.constant 0 : index
    %c70 = arith.constant 70 : index
    %75 = vector.load %arg1[%c0_77, %c0_78, %c70] : memref<2x16x528xbf16, #tpu.memory_space<vmem>>, vector<1x16x384xbf16>
    %76 = vector.shape_cast %75 : vector<1x16x384xbf16> to vector<16x384xbf16>
    %c400 = arith.constant 400 : index
    %c0_79 = arith.constant 0 : index
    %77 = vector.load %arg5[%c400, %c0_79] : memref<784x768xbf16, #tpu.memory_space<vmem>>, vector<16x384xbf16>
    tpu.vector_store %arg5[%c400, %c0_79], %76 {strides = array<i32>} : memref<784x768xbf16, #tpu.memory_space<vmem>>, vector<16x384xbf16>,
    %c0_80 = arith.constant 0 : index
    %c0_81 = arith.constant 0 : index
    %c71 = arith.constant 71 : index
    %78 = vector.load %arg1[%c0_80, %c0_81, %c71] : memref<2x16x528xbf16, #tpu.memory_space<vmem>>, vector<1x16x384xbf16>
    %79 = vector.shape_cast %78 : vector<1x16x384xbf16> to vector<16x384xbf16>
    %c416 = arith.constant 416 : index
    %c0_82 = arith.constant 0 : index
    %80 = vector.load %arg5[%c416, %c0_82] : memref<784x768xbf16, #tpu.memory_space<vmem>>, vector<16x384xbf16>
    tpu.vector_store %arg5[%c416, %c0_82], %79 {strides = array<i32>} : memref<784x768xbf16, #tpu.memory_space<vmem>>, vector<16x384xbf16>,
    %c0_83 = arith.constant 0 : index
    %c0_84 = arith.constant 0 : index
    %c72 = arith.constant 72 : index
    %81 = vector.load %arg1[%c0_83, %c0_84, %c72] : memref<2x16x528xbf16, #tpu.memory_space<vmem>>, vector<1x16x384xbf16>
    %82 = vector.shape_cast %81 : vector<1x16x384xbf16> to vector<16x384xbf16>
    %c432 = arith.constant 432 : index
    %c0_85 = arith.constant 0 : index
    %83 = vector.load %arg5[%c432, %c0_85] : memref<784x768xbf16, #tpu.memory_space<vmem>>, vector<16x384xbf16>
    tpu.vector_store %arg5[%c432, %c0_85], %82 {strides = array<i32>} : memref<784x768xbf16, #tpu.memory_space<vmem>>, vector<16x384xbf16>,
    %c0_86 = arith.constant 0 : index
    %c0_87 = arith.constant 0 : index
    %c88 = arith.constant 88 : index
    %84 = vector.load %arg1[%c0_86, %c0_87, %c88] : memref<2x16x528xbf16, #tpu.memory_space<vmem>>, vector<1x16x384xbf16>
    %85 = vector.shape_cast %84 : vector<1x16x384xbf16> to vector<16x384xbf16>
    %c448 = arith.constant 448 : index
    %c0_88 = arith.constant 0 : index
    %86 = vector.load %arg5[%c448, %c0_88] : memref<784x768xbf16, #tpu.memory_space<vmem>>, vector<16x384xbf16>
    tpu.vector_store %arg5[%c448, %c0_88], %85 {strides = array<i32>} : memref<784x768xbf16, #tpu.memory_space<vmem>>, vector<16x384xbf16>,
    %c0_89 = arith.constant 0 : index
    %c0_90 = arith.constant 0 : index
    %c89 = arith.constant 89 : index
    %87 = vector.load %arg1[%c0_89, %c0_90, %c89] : memref<2x16x528xbf16, #tpu.memory_space<vmem>>, vector<1x16x384xbf16>
    %88 = vector.shape_cast %87 : vector<1x16x384xbf16> to vector<16x384xbf16>
    %c464 = arith.constant 464 : index
    %c0_91 = arith.constant 0 : index
    %89 = vector.load %arg5[%c464, %c0_91] : memref<784x768xbf16, #tpu.memory_space<vmem>>, vector<16x384xbf16>
    tpu.vector_store %arg5[%c464, %c0_91], %88 {strides = array<i32>} : memref<784x768xbf16, #tpu.memory_space<vmem>>, vector<16x384xbf16>,
    %c0_92 = arith.constant 0 : index
    %c0_93 = arith.constant 0 : index
    %c90 = arith.constant 90 : index
    %90 = vector.load %arg1[%c0_92, %c0_93, %c90] : memref<2x16x528xbf16, #tpu.memory_space<vmem>>, vector<1x16x384xbf16>
    %91 = vector.shape_cast %90 : vector<1x16x384xbf16> to vector<16x384xbf16>
    %c480 = arith.constant 480 : index
    %c0_94 = arith.constant 0 : index
    %92 = vector.load %arg5[%c480, %c0_94] : memref<784x768xbf16, #tpu.memory_space<vmem>>, vector<16x384xbf16>
    tpu.vector_store %arg5[%c480, %c0_94], %91 {strides = array<i32>} : memref<784x768xbf16, #tpu.memory_space<vmem>>, vector<16x384xbf16>,
    %c0_95 = arith.constant 0 : index
    %c0_96 = arith.constant 0 : index
    %c91 = arith.constant 91 : index
    %93 = vector.load %arg1[%c0_95, %c0_96, %c91] : memref<2x16x528xbf16, #tpu.memory_space<vmem>>, vector<1x16x384xbf16>
    %94 = vector.shape_cast %93 : vector<1x16x384xbf16> to vector<16x384xbf16>
    %c496 = arith.constant 496 : index
    %c0_97 = arith.constant 0 : index
    %95 = vector.load %arg5[%c496, %c0_97] : memref<784x768xbf16, #tpu.memory_space<vmem>>, vector<16x384xbf16>
    tpu.vector_store %arg5[%c496, %c0_97], %94 {strides = array<i32>} : memref<784x768xbf16, #tpu.memory_space<vmem>>, vector<16x384xbf16>,
    %c0_98 = arith.constant 0 : index
    %c0_99 = arith.constant 0 : index
    %c92 = arith.constant 92 : index
    %96 = vector.load %arg1[%c0_98, %c0_99, %c92] : memref<2x16x528xbf16, #tpu.memory_space<vmem>>, vector<1x16x384xbf16>
    %97 = vector.shape_cast %96 : vector<1x16x384xbf16> to vector<16x384xbf16>
    %c512 = arith.constant 512 : index
    %c0_100 = arith.constant 0 : index
    %98 = vector.load %arg5[%c512, %c0_100] : memref<784x768xbf16, #tpu.memory_space<vmem>>, vector<16x384xbf16>
    tpu.vector_store %arg5[%c512, %c0_100], %97 {strides = array<i32>} : memref<784x768xbf16, #tpu.memory_space<vmem>>, vector<16x384xbf16>,
    %c0_101 = arith.constant 0 : index
    %c0_102 = arith.constant 0 : index
    %c93 = arith.constant 93 : index
    %99 = vector.load %arg1[%c0_101, %c0_102, %c93] : memref<2x16x528xbf16, #tpu.memory_space<vmem>>, vector<1x16x384xbf16>
    %100 = vector.shape_cast %99 : vector<1x16x384xbf16> to vector<16x384xbf16>
    %c528 = arith.constant 528 : index
    %c0_103 = arith.constant 0 : index
    %101 = vector.load %arg5[%c528, %c0_103] : memref<784x768xbf16, #tpu.memory_space<vmem>>, vector<16x384xbf16>
    tpu.vector_store %arg5[%c528, %c0_103], %100 {strides = array<i32>} : memref<784x768xbf16, #tpu.memory_space<vmem>>, vector<16x384xbf16>,
    %c0_104 = arith.constant 0 : index
    %c0_105 = arith.constant 0 : index
    %c94 = arith.constant 94 : index
    %102 = vector.load %arg1[%c0_104, %c0_105, %c94] : memref<2x16x528xbf16, #tpu.memory_space<vmem>>, vector<1x16x384xbf16>
    %103 = vector.shape_cast %102 : vector<1x16x384xbf16> to vector<16x384xbf16>
    %c544 = arith.constant 544 : index
    %c0_106 = arith.constant 0 : index
    %104 = vector.load %arg5[%c544, %c0_106] : memref<784x768xbf16, #tpu.memory_space<vmem>>, vector<16x384xbf16>
    tpu.vector_store %arg5[%c544, %c0_106], %103 {strides = array<i32>} : memref<784x768xbf16, #tpu.memory_space<vmem>>, vector<16x384xbf16>,
    %c0_107 = arith.constant 0 : index
    %c0_108 = arith.constant 0 : index
    %c110 = arith.constant 110 : index
    %105 = vector.load %arg1[%c0_107, %c0_108, %c110] : memref<2x16x528xbf16, #tpu.memory_space<vmem>>, vector<1x16x384xbf16>
    %106 = vector.shape_cast %105 : vector<1x16x384xbf16> to vector<16x384xbf16>
    %c560 = arith.constant 560 : index
    %c0_109 = arith.constant 0 : index
    %107 = vector.load %arg5[%c560, %c0_109] : memref<784x768xbf16, #tpu.memory_space<vmem>>, vector<16x384xbf16>
    tpu.vector_store %arg5[%c560, %c0_109], %106 {strides = array<i32>} : memref<784x768xbf16, #tpu.memory_space<vmem>>, vector<16x384xbf16>,
    %c0_110 = arith.constant 0 : index
    %c0_111 = arith.constant 0 : index
    %c111 = arith.constant 111 : index
    %108 = vector.load %arg1[%c0_110, %c0_111, %c111] : memref<2x16x528xbf16, #tpu.memory_space<vmem>>, vector<1x16x384xbf16>
    %109 = vector.shape_cast %108 : vector<1x16x384xbf16> to vector<16x384xbf16>
    %c576 = arith.constant 576 : index
    %c0_112 = arith.constant 0 : index
    %110 = vector.load %arg5[%c576, %c0_112] : memref<784x768xbf16, #tpu.memory_space<vmem>>, vector<16x384xbf16>
    tpu.vector_store %arg5[%c576, %c0_112], %109 {strides = array<i32>} : memref<784x768xbf16, #tpu.memory_space<vmem>>, vector<16x384xbf16>,
    %c0_113 = arith.constant 0 : index
    %c0_114 = arith.constant 0 : index
    %c112_115 = arith.constant 112 : index
    %111 = vector.load %arg1[%c0_113, %c0_114, %c112_115] : memref<2x16x528xbf16, #tpu.memory_space<vmem>>, vector<1x16x384xbf16>
    %112 = vector.shape_cast %111 : vector<1x16x384xbf16> to vector<16x384xbf16>
    %c592 = arith.constant 592 : index
    %c0_116 = arith.constant 0 : index
    %113 = vector.load %arg5[%c592, %c0_116] : memref<784x768xbf16, #tpu.memory_space<vmem>>, vector<16x384xbf16>
    tpu.vector_store %arg5[%c592, %c0_116], %112 {strides = array<i32>} : memref<784x768xbf16, #tpu.memory_space<vmem>>, vector<16x384xbf16>,
    %c0_117 = arith.constant 0 : index
    %c0_118 = arith.constant 0 : index
    %c113 = arith.constant 113 : index
    %114 = vector.load %arg1[%c0_117, %c0_118, %c113] : memref<2x16x528xbf16, #tpu.memory_space<vmem>>, vector<1x16x384xbf16>
    %115 = vector.shape_cast %114 : vector<1x16x384xbf16> to vector<16x384xbf16>
    %c608 = arith.constant 608 : index
    %c0_119 = arith.constant 0 : index
    %116 = vector.load %arg5[%c608, %c0_119] : memref<784x768xbf16, #tpu.memory_space<vmem>>, vector<16x384xbf16>
    tpu.vector_store %arg5[%c608, %c0_119], %115 {strides = array<i32>} : memref<784x768xbf16, #tpu.memory_space<vmem>>, vector<16x384xbf16>,
    %c0_120 = arith.constant 0 : index
    %c0_121 = arith.constant 0 : index
    %c114 = arith.constant 114 : index
    %117 = vector.load %arg1[%c0_120, %c0_121, %c114] : memref<2x16x528xbf16, #tpu.memory_space<vmem>>, vector<1x16x384xbf16>
    %118 = vector.shape_cast %117 : vector<1x16x384xbf16> to vector<16x384xbf16>
    %c624 = arith.constant 624 : index
    %c0_122 = arith.constant 0 : index
    %119 = vector.load %arg5[%c624, %c0_122] : memref<784x768xbf16, #tpu.memory_space<vmem>>, vector<16x384xbf16>
    tpu.vector_store %arg5[%c624, %c0_122], %118 {strides = array<i32>} : memref<784x768xbf16, #tpu.memory_space<vmem>>, vector<16x384xbf16>,
    %c0_123 = arith.constant 0 : index
    %c0_124 = arith.constant 0 : index
    %c115 = arith.constant 115 : index
    %120 = vector.load %arg1[%c0_123, %c0_124, %c115] : memref<2x16x528xbf16, #tpu.memory_space<vmem>>, vector<1x16x384xbf16>
    %121 = vector.shape_cast %120 : vector<1x16x384xbf16> to vector<16x384xbf16>
    %c640 = arith.constant 640 : index
    %c0_125 = arith.constant 0 : index
    %122 = vector.load %arg5[%c640, %c0_125] : memref<784x768xbf16, #tpu.memory_space<vmem>>, vector<16x384xbf16>
    tpu.vector_store %arg5[%c640, %c0_125], %121 {strides = array<i32>} : memref<784x768xbf16, #tpu.memory_space<vmem>>, vector<16x384xbf16>,
    %c0_126 = arith.constant 0 : index
    %c0_127 = arith.constant 0 : index
    %c116 = arith.constant 116 : index
    %123 = vector.load %arg1[%c0_126, %c0_127, %c116] : memref<2x16x528xbf16, #tpu.memory_space<vmem>>, vector<1x16x384xbf16>
    %124 = vector.shape_cast %123 : vector<1x16x384xbf16> to vector<16x384xbf16>
    %c656 = arith.constant 656 : index
    %c0_128 = arith.constant 0 : index
    %125 = vector.load %arg5[%c656, %c0_128] : memref<784x768xbf16, #tpu.memory_space<vmem>>, vector<16x384xbf16>
    tpu.vector_store %arg5[%c656, %c0_128], %124 {strides = array<i32>} : memref<784x768xbf16, #tpu.memory_space<vmem>>, vector<16x384xbf16>,
    %c0_129 = arith.constant 0 : index
    %c0_130 = arith.constant 0 : index
    %c132 = arith.constant 132 : index
    %126 = vector.load %arg1[%c0_129, %c0_130, %c132] : memref<2x16x528xbf16, #tpu.memory_space<vmem>>, vector<1x16x384xbf16>
    %127 = vector.shape_cast %126 : vector<1x16x384xbf16> to vector<16x384xbf16>
    %c672 = arith.constant 672 : index
    %c0_131 = arith.constant 0 : index
    %128 = vector.load %arg5[%c672, %c0_131] : memref<784x768xbf16, #tpu.memory_space<vmem>>, vector<16x384xbf16>
    tpu.vector_store %arg5[%c672, %c0_131], %127 {strides = array<i32>} : memref<784x768xbf16, #tpu.memory_space<vmem>>, vector<16x384xbf16>,
    %c0_132 = arith.constant 0 : index
    %c0_133 = arith.constant 0 : index
    %c133 = arith.constant 133 : index
    %129 = vector.load %arg1[%c0_132, %c0_133, %c133] : memref<2x16x528xbf16, #tpu.memory_space<vmem>>, vector<1x16x384xbf16>
    %130 = vector.shape_cast %129 : vector<1x16x384xbf16> to vector<16x384xbf16>
    %c688 = arith.constant 688 : index
    %c0_134 = arith.constant 0 : index
    %131 = vector.load %arg5[%c688, %c0_134] : memref<784x768xbf16, #tpu.memory_space<vmem>>, vector<16x384xbf16>
    tpu.vector_store %arg5[%c688, %c0_134], %130 {strides = array<i32>} : memref<784x768xbf16, #tpu.memory_space<vmem>>, vector<16x384xbf16>,
    %c0_135 = arith.constant 0 : index
    %c0_136 = arith.constant 0 : index
    %c134 = arith.constant 134 : index
    %132 = vector.load %arg1[%c0_135, %c0_136, %c134] : memref<2x16x528xbf16, #tpu.memory_space<vmem>>, vector<1x16x384xbf16>
    %133 = vector.shape_cast %132 : vector<1x16x384xbf16> to vector<16x384xbf16>
    %c704 = arith.constant 704 : index
    %c0_137 = arith.constant 0 : index
    %134 = vector.load %arg5[%c704, %c0_137] : memref<784x768xbf16, #tpu.memory_space<vmem>>, vector<16x384xbf16>
    tpu.vector_store %arg5[%c704, %c0_137], %133 {strides = array<i32>} : memref<784x768xbf16, #tpu.memory_space<vmem>>, vector<16x384xbf16>,
    %c0_138 = arith.constant 0 : index
    %c0_139 = arith.constant 0 : index
    %c135 = arith.constant 135 : index
    %135 = vector.load %arg1[%c0_138, %c0_139, %c135] : memref<2x16x528xbf16, #tpu.memory_space<vmem>>, vector<1x16x384xbf16>
    %136 = vector.shape_cast %135 : vector<1x16x384xbf16> to vector<16x384xbf16>
    %c720 = arith.constant 720 : index
    %c0_140 = arith.constant 0 : index
    %137 = vector.load %arg5[%c720, %c0_140] : memref<784x768xbf16, #tpu.memory_space<vmem>>, vector<16x384xbf16>
    tpu.vector_store %arg5[%c720, %c0_140], %136 {strides = array<i32>} : memref<784x768xbf16, #tpu.memory_space<vmem>>, vector<16x384xbf16>,
    %c0_141 = arith.constant 0 : index
    %c0_142 = arith.constant 0 : index
    %c136 = arith.constant 136 : index
    %138 = vector.load %arg1[%c0_141, %c0_142, %c136] : memref<2x16x528xbf16, #tpu.memory_space<vmem>>, vector<1x16x384xbf16>
    %139 = vector.shape_cast %138 : vector<1x16x384xbf16> to vector<16x384xbf16>
    %c736 = arith.constant 736 : index
    %c0_143 = arith.constant 0 : index
    %140 = vector.load %arg5[%c736, %c0_143] : memref<784x768xbf16, #tpu.memory_space<vmem>>, vector<16x384xbf16>
    tpu.vector_store %arg5[%c736, %c0_143], %139 {strides = array<i32>} : memref<784x768xbf16, #tpu.memory_space<vmem>>, vector<16x384xbf16>,
    %c0_144 = arith.constant 0 : index
    %c0_145 = arith.constant 0 : index
    %c137 = arith.constant 137 : index
    %141 = vector.load %arg1[%c0_144, %c0_145, %c137] : memref<2x16x528xbf16, #tpu.memory_space<vmem>>, vector<1x16x384xbf16>
    %142 = vector.shape_cast %141 : vector<1x16x384xbf16> to vector<16x384xbf16>
    %c752 = arith.constant 752 : index
    %c0_146 = arith.constant 0 : index
    %143 = vector.load %arg5[%c752, %c0_146] : memref<784x768xbf16, #tpu.memory_space<vmem>>, vector<16x384xbf16>
    tpu.vector_store %arg5[%c752, %c0_146], %142 {strides = array<i32>} : memref<784x768xbf16, #tpu.memory_space<vmem>>, vector<16x384xbf16>,
    %c0_147 = arith.constant 0 : index
    %c0_148 = arith.constant 0 : index
    %c138 = arith.constant 138 : index
    %144 = vector.load %arg1[%c0_147, %c0_148, %c138] : memref<2x16x528xbf16, #tpu.memory_space<vmem>>, vector<1x16x384xbf16>
    %145 = vector.shape_cast %144 : vector<1x16x384xbf16> to vector<16x384xbf16>
    %c768 = arith.constant 768 : index
    %c0_149 = arith.constant 0 : index
    %146 = vector.load %arg5[%c768, %c0_149] : memref<784x768xbf16, #tpu.memory_space<vmem>>, vector<16x384xbf16>
    tpu.vector_store %arg5[%c768, %c0_149], %145 {strides = array<i32>} : memref<784x768xbf16, #tpu.memory_space<vmem>>, vector<16x384xbf16>,
    %c1_150 = arith.constant 1 : index
    %c0_151 = arith.constant 0 : index
    %c0_152 = arith.constant 0 : index
    %147 = vector.load %arg1[%c1_150, %c0_151, %c0_152] : memref<2x16x528xbf16, #tpu.memory_space<vmem>>, vector<1x16x384xbf16>
    %148 = vector.shape_cast %147 : vector<1x16x384xbf16> to vector<16x384xbf16>
    %c0_153 = arith.constant 0 : index
    %c384_154 = arith.constant 384 : index
    %149 = vector.load %arg5[%c0_153, %c384_154] : memref<784x768xbf16, #tpu.memory_space<vmem>>, vector<16x384xbf16>
    tpu.vector_store %arg5[%c0_153, %c384_154], %148 {strides = array<i32>} : memref<784x768xbf16, #tpu.memory_space<vmem>>, vector<16x384xbf16>,
    %c1_155 = arith.constant 1 : index
    %c0_156 = arith.constant 0 : index
    %c1_157 = arith.constant 1 : index
    %150 = vector.load %arg1[%c1_155, %c0_156, %c1_157] : memref<2x16x528xbf16, #tpu.memory_space<vmem>>, vector<1x16x384xbf16>
    %151 = vector.shape_cast %150 : vector<1x16x384xbf16> to vector<16x384xbf16>
    %c16_158 = arith.constant 16 : index
    %c384_159 = arith.constant 384 : index
    %152 = vector.load %arg5[%c16_158, %c384_159] : memref<784x768xbf16, #tpu.memory_space<vmem>>, vector<16x384xbf16>
    tpu.vector_store %arg5[%c16_158, %c384_159], %151 {strides = array<i32>} : memref<784x768xbf16, #tpu.memory_space<vmem>>, vector<16x384xbf16>,
    %c1_160 = arith.constant 1 : index
    %c0_161 = arith.constant 0 : index
    %c2_162 = arith.constant 2 : index
    %153 = vector.load %arg1[%c1_160, %c0_161, %c2_162] : memref<2x16x528xbf16, #tpu.memory_space<vmem>>, vector<1x16x384xbf16>
    %154 = vector.shape_cast %153 : vector<1x16x384xbf16> to vector<16x384xbf16>
    %c32_163 = arith.constant 32 : index
    %c384_164 = arith.constant 384 : index
    %155 = vector.load %arg5[%c32_163, %c384_164] : memref<784x768xbf16, #tpu.memory_space<vmem>>, vector<16x384xbf16>
    tpu.vector_store %arg5[%c32_163, %c384_164], %154 {strides = array<i32>} : memref<784x768xbf16, #tpu.memory_space<vmem>>, vector<16x384xbf16>,
    %c1_165 = arith.constant 1 : index
    %c0_166 = arith.constant 0 : index
    %c3_167 = arith.constant 3 : index
    %156 = vector.load %arg1[%c1_165, %c0_166, %c3_167] : memref<2x16x528xbf16, #tpu.memory_space<vmem>>, vector<1x16x384xbf16>
    %157 = vector.shape_cast %156 : vector<1x16x384xbf16> to vector<16x384xbf16>
    %c48_168 = arith.constant 48 : index
    %c384_169 = arith.constant 384 : index
    %158 = vector.load %arg5[%c48_168, %c384_169] : memref<784x768xbf16, #tpu.memory_space<vmem>>, vector<16x384xbf16>
    tpu.vector_store %arg5[%c48_168, %c384_169], %157 {strides = array<i32>} : memref<784x768xbf16, #tpu.memory_space<vmem>>, vector<16x384xbf16>,
    %c1_170 = arith.constant 1 : index
    %c0_171 = arith.constant 0 : index
    %c4_172 = arith.constant 4 : index
    %159 = vector.load %arg1[%c1_170, %c0_171, %c4_172] : memref<2x16x528xbf16, #tpu.memory_space<vmem>>, vector<1x16x384xbf16>
    %160 = vector.shape_cast %159 : vector<1x16x384xbf16> to vector<16x384xbf16>
    %c64_173 = arith.constant 64 : index
    %c384_174 = arith.constant 384 : index
    %161 = vector.load %arg5[%c64_173, %c384_174] : memref<784x768xbf16, #tpu.memory_space<vmem>>, vector<16x384xbf16>
    tpu.vector_store %arg5[%c64_173, %c384_174], %160 {strides = array<i32>} : memref<784x768xbf16, #tpu.memory_space<vmem>>, vector<16x384xbf16>,
    %c1_175 = arith.constant 1 : index
    %c0_176 = arith.constant 0 : index
    %c5_177 = arith.constant 5 : index
    %162 = vector.load %arg1[%c1_175, %c0_176, %c5_177] : memref<2x16x528xbf16, #tpu.memory_space<vmem>>, vector<1x16x384xbf16>
    %163 = vector.shape_cast %162 : vector<1x16x384xbf16> to vector<16x384xbf16>
    %c80_178 = arith.constant 80 : index
    %c384_179 = arith.constant 384 : index
    %164 = vector.load %arg5[%c80_178, %c384_179] : memref<784x768xbf16, #tpu.memory_space<vmem>>, vector<16x384xbf16>
    tpu.vector_store %arg5[%c80_178, %c384_179], %163 {strides = array<i32>} : memref<784x768xbf16, #tpu.memory_space<vmem>>, vector<16x384xbf16>,
    %c1_180 = arith.constant 1 : index
    %c0_181 = arith.constant 0 : index
    %c6_182 = arith.constant 6 : index
    %165 = vector.load %arg1[%c1_180, %c0_181, %c6_182] : memref<2x16x528xbf16, #tpu.memory_space<vmem>>, vector<1x16x384xbf16>
    %166 = vector.shape_cast %165 : vector<1x16x384xbf16> to vector<16x384xbf16>
    %c96_183 = arith.constant 96 : index
    %c384_184 = arith.constant 384 : index
    %167 = vector.load %arg5[%c96_183, %c384_184] : memref<784x768xbf16, #tpu.memory_space<vmem>>, vector<16x384xbf16>
    tpu.vector_store %arg5[%c96_183, %c384_184], %166 {strides = array<i32>} : memref<784x768xbf16, #tpu.memory_space<vmem>>, vector<16x384xbf16>,
    %c1_185 = arith.constant 1 : index
    %c0_186 = arith.constant 0 : index
    %c22_187 = arith.constant 22 : index
    %168 = vector.load %arg1[%c1_185, %c0_186, %c22_187] : memref<2x16x528xbf16, #tpu.memory_space<vmem>>, vector<1x16x384xbf16>
    %169 = vector.shape_cast %168 : vector<1x16x384xbf16> to vector<16x384xbf16>
    %c112_188 = arith.constant 112 : index
    %c384_189 = arith.constant 384 : index
    %170 = vector.load %arg5[%c112_188, %c384_189] : memref<784x768xbf16, #tpu.memory_space<vmem>>, vector<16x384xbf16>
    tpu.vector_store %arg5[%c112_188, %c384_189], %169 {strides = array<i32>} : memref<784x768xbf16, #tpu.memory_space<vmem>>, vector<16x384xbf16>,
    %c1_190 = arith.constant 1 : index
    %c0_191 = arith.constant 0 : index
    %c23_192 = arith.constant 23 : index
    %171 = vector.load %arg1[%c1_190, %c0_191, %c23_192] : memref<2x16x528xbf16, #tpu.memory_space<vmem>>, vector<1x16x384xbf16>
    %172 = vector.shape_cast %171 : vector<1x16x384xbf16> to vector<16x384xbf16>
    %c128_193 = arith.constant 128 : index
    %c384_194 = arith.constant 384 : index
    %173 = vector.load %arg5[%c128_193, %c384_194] : memref<784x768xbf16, #tpu.memory_space<vmem>>, vector<16x384xbf16>
    tpu.vector_store %arg5[%c128_193, %c384_194], %172 {strides = array<i32>} : memref<784x768xbf16, #tpu.memory_space<vmem>>, vector<16x384xbf16>,
    %c1_195 = arith.constant 1 : index
    %c0_196 = arith.constant 0 : index
    %c24_197 = arith.constant 24 : index
    %174 = vector.load %arg1[%c1_195, %c0_196, %c24_197] : memref<2x16x528xbf16, #tpu.memory_space<vmem>>, vector<1x16x384xbf16>
    %175 = vector.shape_cast %174 : vector<1x16x384xbf16> to vector<16x384xbf16>
    %c144_198 = arith.constant 144 : index
    %c384_199 = arith.constant 384 : index
    %176 = vector.load %arg5[%c144_198, %c384_199] : memref<784x768xbf16, #tpu.memory_space<vmem>>, vector<16x384xbf16>
    tpu.vector_store %arg5[%c144_198, %c384_199], %175 {strides = array<i32>} : memref<784x768xbf16, #tpu.memory_space<vmem>>, vector<16x384xbf16>,
    %c1_200 = arith.constant 1 : index
    %c0_201 = arith.constant 0 : index
    %c25_202 = arith.constant 25 : index
    %177 = vector.load %arg1[%c1_200, %c0_201, %c25_202] : memref<2x16x528xbf16, #tpu.memory_space<vmem>>, vector<1x16x384xbf16>
    %178 = vector.shape_cast %177 : vector<1x16x384xbf16> to vector<16x384xbf16>
    %c160_203 = arith.constant 160 : index
    %c384_204 = arith.constant 384 : index
    %179 = vector.load %arg5[%c160_203, %c384_204] : memref<784x768xbf16, #tpu.memory_space<vmem>>, vector<16x384xbf16>
    tpu.vector_store %arg5[%c160_203, %c384_204], %178 {strides = array<i32>} : memref<784x768xbf16, #tpu.memory_space<vmem>>, vector<16x384xbf16>,
    %c1_205 = arith.constant 1 : index
    %c0_206 = arith.constant 0 : index
    %c26_207 = arith.constant 26 : index
    %180 = vector.load %arg1[%c1_205, %c0_206, %c26_207] : memref<2x16x528xbf16, #tpu.memory_space<vmem>>, vector<1x16x384xbf16>
    %181 = vector.shape_cast %180 : vector<1x16x384xbf16> to vector<16x384xbf16>
    %c176_208 = arith.constant 176 : index
    %c384_209 = arith.constant 384 : index
    %182 = vector.load %arg5[%c176_208, %c384_209] : memref<784x768xbf16, #tpu.memory_space<vmem>>, vector<16x384xbf16>
    tpu.vector_store %arg5[%c176_208, %c384_209], %181 {strides = array<i32>} : memref<784x768xbf16, #tpu.memory_space<vmem>>, vector<16x384xbf16>,
    %c1_210 = arith.constant 1 : index
    %c0_211 = arith.constant 0 : index
    %c27_212 = arith.constant 27 : index
    %183 = vector.load %arg1[%c1_210, %c0_211, %c27_212] : memref<2x16x528xbf16, #tpu.memory_space<vmem>>, vector<1x16x384xbf16>
    %184 = vector.shape_cast %183 : vector<1x16x384xbf16> to vector<16x384xbf16>
    %c192_213 = arith.constant 192 : index
    %c384_214 = arith.constant 384 : index
    %185 = vector.load %arg5[%c192_213, %c384_214] : memref<784x768xbf16, #tpu.memory_space<vmem>>, vector<16x384xbf16>
    tpu.vector_store %arg5[%c192_213, %c384_214], %184 {strides = array<i32>} : memref<784x768xbf16, #tpu.memory_space<vmem>>, vector<16x384xbf16>,
    %c1_215 = arith.constant 1 : index
    %c0_216 = arith.constant 0 : index
    %c28_217 = arith.constant 28 : index
    %186 = vector.load %arg1[%c1_215, %c0_216, %c28_217] : memref<2x16x528xbf16, #tpu.memory_space<vmem>>, vector<1x16x384xbf16>
    %187 = vector.shape_cast %186 : vector<1x16x384xbf16> to vector<16x384xbf16>
    %c208_218 = arith.constant 208 : index
    %c384_219 = arith.constant 384 : index
    %188 = vector.load %arg5[%c208_218, %c384_219] : memref<784x768xbf16, #tpu.memory_space<vmem>>, vector<16x384xbf16>
    tpu.vector_store %arg5[%c208_218, %c384_219], %187 {strides = array<i32>} : memref<784x768xbf16, #tpu.memory_space<vmem>>, vector<16x384xbf16>,
    %c1_220 = arith.constant 1 : index
    %c0_221 = arith.constant 0 : index
    %c44_222 = arith.constant 44 : index
    %189 = vector.load %arg1[%c1_220, %c0_221, %c44_222] : memref<2x16x528xbf16, #tpu.memory_space<vmem>>, vector<1x16x384xbf16>
    %190 = vector.shape_cast %189 : vector<1x16x384xbf16> to vector<16x384xbf16>
    %c224_223 = arith.constant 224 : index
    %c384_224 = arith.constant 384 : index
    %191 = vector.load %arg5[%c224_223, %c384_224] : memref<784x768xbf16, #tpu.memory_space<vmem>>, vector<16x384xbf16>
    tpu.vector_store %arg5[%c224_223, %c384_224], %190 {strides = array<i32>} : memref<784x768xbf16, #tpu.memory_space<vmem>>, vector<16x384xbf16>,
    %c1_225 = arith.constant 1 : index
    %c0_226 = arith.constant 0 : index
    %c45_227 = arith.constant 45 : index
    %192 = vector.load %arg1[%c1_225, %c0_226, %c45_227] : memref<2x16x528xbf16, #tpu.memory_space<vmem>>, vector<1x16x384xbf16>
    %193 = vector.shape_cast %192 : vector<1x16x384xbf16> to vector<16x384xbf16>
    %c240_228 = arith.constant 240 : index
    %c384_229 = arith.constant 384 : index
    %194 = vector.load %arg5[%c240_228, %c384_229] : memref<784x768xbf16, #tpu.memory_space<vmem>>, vector<16x384xbf16>
    tpu.vector_store %arg5[%c240_228, %c384_229], %193 {strides = array<i32>} : memref<784x768xbf16, #tpu.memory_space<vmem>>, vector<16x384xbf16>,
    %c1_230 = arith.constant 1 : index
    %c0_231 = arith.constant 0 : index
    %c46_232 = arith.constant 46 : index
    %195 = vector.load %arg1[%c1_230, %c0_231, %c46_232] : memref<2x16x528xbf16, #tpu.memory_space<vmem>>, vector<1x16x384xbf16>
    %196 = vector.shape_cast %195 : vector<1x16x384xbf16> to vector<16x384xbf16>
    %c256_233 = arith.constant 256 : index
    %c384_234 = arith.constant 384 : index
    %197 = vector.load %arg5[%c256_233, %c384_234] : memref<784x768xbf16, #tpu.memory_space<vmem>>, vector<16x384xbf16>
    tpu.vector_store %arg5[%c256_233, %c384_234], %196 {strides = array<i32>} : memref<784x768xbf16, #tpu.memory_space<vmem>>, vector<16x384xbf16>,
    %c1_235 = arith.constant 1 : index
    %c0_236 = arith.constant 0 : index
    %c47_237 = arith.constant 47 : index
    %198 = vector.load %arg1[%c1_235, %c0_236, %c47_237] : memref<2x16x528xbf16, #tpu.memory_space<vmem>>, vector<1x16x384xbf16>
    %199 = vector.shape_cast %198 : vector<1x16x384xbf16> to vector<16x384xbf16>
    %c272_238 = arith.constant 272 : index
    %c384_239 = arith.constant 384 : index
    %200 = vector.load %arg5[%c272_238, %c384_239] : memref<784x768xbf16, #tpu.memory_space<vmem>>, vector<16x384xbf16>
    tpu.vector_store %arg5[%c272_238, %c384_239], %199 {strides = array<i32>} : memref<784x768xbf16, #tpu.memory_space<vmem>>, vector<16x384xbf16>,
    %c1_240 = arith.constant 1 : index
    %c0_241 = arith.constant 0 : index
    %c48_242 = arith.constant 48 : index
    %201 = vector.load %arg1[%c1_240, %c0_241, %c48_242] : memref<2x16x528xbf16, #tpu.memory_space<vmem>>, vector<1x16x384xbf16>
    %202 = vector.shape_cast %201 : vector<1x16x384xbf16> to vector<16x384xbf16>
    %c288_243 = arith.constant 288 : index
    %c384_244 = arith.constant 384 : index
    %203 = vector.load %arg5[%c288_243, %c384_244] : memref<784x768xbf16, #tpu.memory_space<vmem>>, vector<16x384xbf16>
    tpu.vector_store %arg5[%c288_243, %c384_244], %202 {strides = array<i32>} : memref<784x768xbf16, #tpu.memory_space<vmem>>, vector<16x384xbf16>,
    %c1_245 = arith.constant 1 : index
    %c0_246 = arith.constant 0 : index
    %c49_247 = arith.constant 49 : index
    %204 = vector.load %arg1[%c1_245, %c0_246, %c49_247] : memref<2x16x528xbf16, #tpu.memory_space<vmem>>, vector<1x16x384xbf16>
    %205 = vector.shape_cast %204 : vector<1x16x384xbf16> to vector<16x384xbf16>
    %c304_248 = arith.constant 304 : index
    %c384_249 = arith.constant 384 : index
    %206 = vector.load %arg5[%c304_248, %c384_249] : memref<784x768xbf16, #tpu.memory_space<vmem>>, vector<16x384xbf16>
    tpu.vector_store %arg5[%c304_248, %c384_249], %205 {strides = array<i32>} : memref<784x768xbf16, #tpu.memory_space<vmem>>, vector<16x384xbf16>,
    %c1_250 = arith.constant 1 : index
    %c0_251 = arith.constant 0 : index
    %c50_252 = arith.constant 50 : index
    %207 = vector.load %arg1[%c1_250, %c0_251, %c50_252] : memref<2x16x528xbf16, #tpu.memory_space<vmem>>, vector<1x16x384xbf16>
    %208 = vector.shape_cast %207 : vector<1x16x384xbf16> to vector<16x384xbf16>
    %c320_253 = arith.constant 320 : index
    %c384_254 = arith.constant 384 : index
    %209 = vector.load %arg5[%c320_253, %c384_254] : memref<784x768xbf16, #tpu.memory_space<vmem>>, vector<16x384xbf16>
    tpu.vector_store %arg5[%c320_253, %c384_254], %208 {strides = array<i32>} : memref<784x768xbf16, #tpu.memory_space<vmem>>, vector<16x384xbf16>,
    %c1_255 = arith.constant 1 : index
    %c0_256 = arith.constant 0 : index
    %c66_257 = arith.constant 66 : index
    %210 = vector.load %arg1[%c1_255, %c0_256, %c66_257] : memref<2x16x528xbf16, #tpu.memory_space<vmem>>, vector<1x16x384xbf16>
    %211 = vector.shape_cast %210 : vector<1x16x384xbf16> to vector<16x384xbf16>
    %c336_258 = arith.constant 336 : index
    %c384_259 = arith.constant 384 : index
    %212 = vector.load %arg5[%c336_258, %c384_259] : memref<784x768xbf16, #tpu.memory_space<vmem>>, vector<16x384xbf16>
    tpu.vector_store %arg5[%c336_258, %c384_259], %211 {strides = array<i32>} : memref<784x768xbf16, #tpu.memory_space<vmem>>, vector<16x384xbf16>,
    %c1_260 = arith.constant 1 : index
    %c0_261 = arith.constant 0 : index
    %c67_262 = arith.constant 67 : index
    %213 = vector.load %arg1[%c1_260, %c0_261, %c67_262] : memref<2x16x528xbf16, #tpu.memory_space<vmem>>, vector<1x16x384xbf16>
    %214 = vector.shape_cast %213 : vector<1x16x384xbf16> to vector<16x384xbf16>
    %c352_263 = arith.constant 352 : index
    %c384_264 = arith.constant 384 : index
    %215 = vector.load %arg5[%c352_263, %c384_264] : memref<784x768xbf16, #tpu.memory_space<vmem>>, vector<16x384xbf16>
    tpu.vector_store %arg5[%c352_263, %c384_264], %214 {strides = array<i32>} : memref<784x768xbf16, #tpu.memory_space<vmem>>, vector<16x384xbf16>,
    %c1_265 = arith.constant 1 : index
    %c0_266 = arith.constant 0 : index
    %c68_267 = arith.constant 68 : index
    %216 = vector.load %arg1[%c1_265, %c0_266, %c68_267] : memref<2x16x528xbf16, #tpu.memory_space<vmem>>, vector<1x16x384xbf16>
    %217 = vector.shape_cast %216 : vector<1x16x384xbf16> to vector<16x384xbf16>
    %c368_268 = arith.constant 368 : index
    %c384_269 = arith.constant 384 : index
    %218 = vector.load %arg5[%c368_268, %c384_269] : memref<784x768xbf16, #tpu.memory_space<vmem>>, vector<16x384xbf16>
    tpu.vector_store %arg5[%c368_268, %c384_269], %217 {strides = array<i32>} : memref<784x768xbf16, #tpu.memory_space<vmem>>, vector<16x384xbf16>,
    %c1_270 = arith.constant 1 : index
    %c0_271 = arith.constant 0 : index
    %c69_272 = arith.constant 69 : index
    %219 = vector.load %arg1[%c1_270, %c0_271, %c69_272] : memref<2x16x528xbf16, #tpu.memory_space<vmem>>, vector<1x16x384xbf16>
    %220 = vector.shape_cast %219 : vector<1x16x384xbf16> to vector<16x384xbf16>
    %c384_273 = arith.constant 384 : index
    %c384_274 = arith.constant 384 : index
    %221 = vector.load %arg5[%c384_273, %c384_274] : memref<784x768xbf16, #tpu.memory_space<vmem>>, vector<16x384xbf16>
    tpu.vector_store %arg5[%c384_273, %c384_274], %220 {strides = array<i32>} : memref<784x768xbf16, #tpu.memory_space<vmem>>, vector<16x384xbf16>,
    %c1_275 = arith.constant 1 : index
    %c0_276 = arith.constant 0 : index
    %c70_277 = arith.constant 70 : index
    %222 = vector.load %arg1[%c1_275, %c0_276, %c70_277] : memref<2x16x528xbf16, #tpu.memory_space<vmem>>, vector<1x16x384xbf16>
    %223 = vector.shape_cast %222 : vector<1x16x384xbf16> to vector<16x384xbf16>
    %c400_278 = arith.constant 400 : index
    %c384_279 = arith.constant 384 : index
    %224 = vector.load %arg5[%c400_278, %c384_279] : memref<784x768xbf16, #tpu.memory_space<vmem>>, vector<16x384xbf16>
    tpu.vector_store %arg5[%c400_278, %c384_279], %223 {strides = array<i32>} : memref<784x768xbf16, #tpu.memory_space<vmem>>, vector<16x384xbf16>,
    %c1_280 = arith.constant 1 : index
    %c0_281 = arith.constant 0 : index
    %c71_282 = arith.constant 71 : index
    %225 = vector.load %arg1[%c1_280, %c0_281, %c71_282] : memref<2x16x528xbf16, #tpu.memory_space<vmem>>, vector<1x16x384xbf16>
    %226 = vector.shape_cast %225 : vector<1x16x384xbf16> to vector<16x384xbf16>
    %c416_283 = arith.constant 416 : index
    %c384_284 = arith.constant 384 : index
    %227 = vector.load %arg5[%c416_283, %c384_284] : memref<784x768xbf16, #tpu.memory_space<vmem>>, vector<16x384xbf16>
    tpu.vector_store %arg5[%c416_283, %c384_284], %226 {strides = array<i32>} : memref<784x768xbf16, #tpu.memory_space<vmem>>, vector<16x384xbf16>,
    %c1_285 = arith.constant 1 : index
    %c0_286 = arith.constant 0 : index
    %c72_287 = arith.constant 72 : index
    %228 = vector.load %arg1[%c1_285, %c0_286, %c72_287] : memref<2x16x528xbf16, #tpu.memory_space<vmem>>, vector<1x16x384xbf16>
    %229 = vector.shape_cast %228 : vector<1x16x384xbf16> to vector<16x384xbf16>
    %c432_288 = arith.constant 432 : index
    %c384_289 = arith.constant 384 : index
    %230 = vector.load %arg5[%c432_288, %c384_289] : memref<784x768xbf16, #tpu.memory_space<vmem>>, vector<16x384xbf16>
    tpu.vector_store %arg5[%c432_288, %c384_289], %229 {strides = array<i32>} : memref<784x768xbf16, #tpu.memory_space<vmem>>, vector<16x384xbf16>,
    %c1_290 = arith.constant 1 : index
    %c0_291 = arith.constant 0 : index
    %c88_292 = arith.constant 88 : index
    %231 = vector.load %arg1[%c1_290, %c0_291, %c88_292] : memref<2x16x528xbf16, #tpu.memory_space<vmem>>, vector<1x16x384xbf16>
    %232 = vector.shape_cast %231 : vector<1x16x384xbf16> to vector<16x384xbf16>
    %c448_293 = arith.constant 448 : index
    %c384_294 = arith.constant 384 : index
    %233 = vector.load %arg5[%c448_293, %c384_294] : memref<784x768xbf16, #tpu.memory_space<vmem>>, vector<16x384xbf16>
    tpu.vector_store %arg5[%c448_293, %c384_294], %232 {strides = array<i32>} : memref<784x768xbf16, #tpu.memory_space<vmem>>, vector<16x384xbf16>,
    %c1_295 = arith.constant 1 : index
    %c0_296 = arith.constant 0 : index
    %c89_297 = arith.constant 89 : index
    %234 = vector.load %arg1[%c1_295, %c0_296, %c89_297] : memref<2x16x528xbf16, #tpu.memory_space<vmem>>, vector<1x16x384xbf16>
    %235 = vector.shape_cast %234 : vector<1x16x384xbf16> to vector<16x384xbf16>
    %c464_298 = arith.constant 464 : index
    %c384_299 = arith.constant 384 : index
    %236 = vector.load %arg5[%c464_298, %c384_299] : memref<784x768xbf16, #tpu.memory_space<vmem>>, vector<16x384xbf16>
    tpu.vector_store %arg5[%c464_298, %c384_299], %235 {strides = array<i32>} : memref<784x768xbf16, #tpu.memory_space<vmem>>, vector<16x384xbf16>,
    %c1_300 = arith.constant 1 : index
    %c0_301 = arith.constant 0 : index
    %c90_302 = arith.constant 90 : index
    %237 = vector.load %arg1[%c1_300, %c0_301, %c90_302] : memref<2x16x528xbf16, #tpu.memory_space<vmem>>, vector<1x16x384xbf16>
    %238 = vector.shape_cast %237 : vector<1x16x384xbf16> to vector<16x384xbf16>
    %c480_303 = arith.constant 480 : index
    %c384_304 = arith.constant 384 : index
    %239 = vector.load %arg5[%c480_303, %c384_304] : memref<784x768xbf16, #tpu.memory_space<vmem>>, vector<16x384xbf16>
    tpu.vector_store %arg5[%c480_303, %c384_304], %238 {strides = array<i32>} : memref<784x768xbf16, #tpu.memory_space<vmem>>, vector<16x384xbf16>,
    %c1_305 = arith.constant 1 : index
    %c0_306 = arith.constant 0 : index
    %c91_307 = arith.constant 91 : index
    %240 = vector.load %arg1[%c1_305, %c0_306, %c91_307] : memref<2x16x528xbf16, #tpu.memory_space<vmem>>, vector<1x16x384xbf16>
    %241 = vector.shape_cast %240 : vector<1x16x384xbf16> to vector<16x384xbf16>
    %c496_308 = arith.constant 496 : index
    %c384_309 = arith.constant 384 : index
    %242 = vector.load %arg5[%c496_308, %c384_309] : memref<784x768xbf16, #tpu.memory_space<vmem>>, vector<16x384xbf16>
    tpu.vector_store %arg5[%c496_308, %c384_309], %241 {strides = array<i32>} : memref<784x768xbf16, #tpu.memory_space<vmem>>, vector<16x384xbf16>,
    %c1_310 = arith.constant 1 : index
    %c0_311 = arith.constant 0 : index
    %c92_312 = arith.constant 92 : index
    %243 = vector.load %arg1[%c1_310, %c0_311, %c92_312] : memref<2x16x528xbf16, #tpu.memory_space<vmem>>, vector<1x16x384xbf16>
    %244 = vector.shape_cast %243 : vector<1x16x384xbf16> to vector<16x384xbf16>
    %c512_313 = arith.constant 512 : index
    %c384_314 = arith.constant 384 : index
    %245 = vector.load %arg5[%c512_313, %c384_314] : memref<784x768xbf16, #tpu.memory_space<vmem>>, vector<16x384xbf16>
    tpu.vector_store %arg5[%c512_313, %c384_314], %244 {strides = array<i32>} : memref<784x768xbf16, #tpu.memory_space<vmem>>, vector<16x384xbf16>,
    %c1_315 = arith.constant 1 : index
    %c0_316 = arith.constant 0 : index
    %c93_317 = arith.constant 93 : index
    %246 = vector.load %arg1[%c1_315, %c0_316, %c93_317] : memref<2x16x528xbf16, #tpu.memory_space<vmem>>, vector<1x16x384xbf16>
    %247 = vector.shape_cast %246 : vector<1x16x384xbf16> to vector<16x384xbf16>
    %c528_318 = arith.constant 528 : index
    %c384_319 = arith.constant 384 : index
    %248 = vector.load %arg5[%c528_318, %c384_319] : memref<784x768xbf16, #tpu.memory_space<vmem>>, vector<16x384xbf16>
    tpu.vector_store %arg5[%c528_318, %c384_319], %247 {strides = array<i32>} : memref<784x768xbf16, #tpu.memory_space<vmem>>, vector<16x384xbf16>,
    %c1_320 = arith.constant 1 : index
    %c0_321 = arith.constant 0 : index
    %c94_322 = arith.constant 94 : index
    %249 = vector.load %arg1[%c1_320, %c0_321, %c94_322] : memref<2x16x528xbf16, #tpu.memory_space<vmem>>, vector<1x16x384xbf16>
    %250 = vector.shape_cast %249 : vector<1x16x384xbf16> to vector<16x384xbf16>
    %c544_323 = arith.constant 544 : index
    %c384_324 = arith.constant 384 : index
    %251 = vector.load %arg5[%c544_323, %c384_324] : memref<784x768xbf16, #tpu.memory_space<vmem>>, vector<16x384xbf16>
    tpu.vector_store %arg5[%c544_323, %c384_324], %250 {strides = array<i32>} : memref<784x768xbf16, #tpu.memory_space<vmem>>, vector<16x384xbf16>,
    %c1_325 = arith.constant 1 : index
    %c0_326 = arith.constant 0 : index
    %c110_327 = arith.constant 110 : index
    %252 = vector.load %arg1[%c1_325, %c0_326, %c110_327] : memref<2x16x528xbf16, #tpu.memory_space<vmem>>, vector<1x16x384xbf16>
    %253 = vector.shape_cast %252 : vector<1x16x384xbf16> to vector<16x384xbf16>
    %c560_328 = arith.constant 560 : index
    %c384_329 = arith.constant 384 : index
    %254 = vector.load %arg5[%c560_328, %c384_329] : memref<784x768xbf16, #tpu.memory_space<vmem>>, vector<16x384xbf16>
    tpu.vector_store %arg5[%c560_328, %c384_329], %253 {strides = array<i32>} : memref<784x768xbf16, #tpu.memory_space<vmem>>, vector<16x384xbf16>,
    %c1_330 = arith.constant 1 : index
    %c0_331 = arith.constant 0 : index
    %c111_332 = arith.constant 111 : index
    %255 = vector.load %arg1[%c1_330, %c0_331, %c111_332] : memref<2x16x528xbf16, #tpu.memory_space<vmem>>, vector<1x16x384xbf16>
    %256 = vector.shape_cast %255 : vector<1x16x384xbf16> to vector<16x384xbf16>
    %c576_333 = arith.constant 576 : index
    %c384_334 = arith.constant 384 : index
    %257 = vector.load %arg5[%c576_333, %c384_334] : memref<784x768xbf16, #tpu.memory_space<vmem>>, vector<16x384xbf16>
    tpu.vector_store %arg5[%c576_333, %c384_334], %256 {strides = array<i32>} : memref<784x768xbf16, #tpu.memory_space<vmem>>, vector<16x384xbf16>,
    %c1_335 = arith.constant 1 : index
    %c0_336 = arith.constant 0 : index
    %c112_337 = arith.constant 112 : index
    %258 = vector.load %arg1[%c1_335, %c0_336, %c112_337] : memref<2x16x528xbf16, #tpu.memory_space<vmem>>, vector<1x16x384xbf16>
    %259 = vector.shape_cast %258 : vector<1x16x384xbf16> to vector<16x384xbf16>
    %c592_338 = arith.constant 592 : index
    %c384_339 = arith.constant 384 : index
    %260 = vector.load %arg5[%c592_338, %c384_339] : memref<784x768xbf16, #tpu.memory_space<vmem>>, vector<16x384xbf16>
    tpu.vector_store %arg5[%c592_338, %c384_339], %259 {strides = array<i32>} : memref<784x768xbf16, #tpu.memory_space<vmem>>, vector<16x384xbf16>,
    %c1_340 = arith.constant 1 : index
    %c0_341 = arith.constant 0 : index
    %c113_342 = arith.constant 113 : index
    %261 = vector.load %arg1[%c1_340, %c0_341, %c113_342] : memref<2x16x528xbf16, #tpu.memory_space<vmem>>, vector<1x16x384xbf16>
    %262 = vector.shape_cast %261 : vector<1x16x384xbf16> to vector<16x384xbf16>
    %c608_343 = arith.constant 608 : index
    %c384_344 = arith.constant 384 : index
    %263 = vector.load %arg5[%c608_343, %c384_344] : memref<784x768xbf16, #tpu.memory_space<vmem>>, vector<16x384xbf16>
    tpu.vector_store %arg5[%c608_343, %c384_344], %262 {strides = array<i32>} : memref<784x768xbf16, #tpu.memory_space<vmem>>, vector<16x384xbf16>,
    %c1_345 = arith.constant 1 : index
    %c0_346 = arith.constant 0 : index
    %c114_347 = arith.constant 114 : index
    %264 = vector.load %arg1[%c1_345, %c0_346, %c114_347] : memref<2x16x528xbf16, #tpu.memory_space<vmem>>, vector<1x16x384xbf16>
    %265 = vector.shape_cast %264 : vector<1x16x384xbf16> to vector<16x384xbf16>
    %c624_348 = arith.constant 624 : index
    %c384_349 = arith.constant 384 : index
    %266 = vector.load %arg5[%c624_348, %c384_349] : memref<784x768xbf16, #tpu.memory_space<vmem>>, vector<16x384xbf16>
    tpu.vector_store %arg5[%c624_348, %c384_349], %265 {strides = array<i32>} : memref<784x768xbf16, #tpu.memory_space<vmem>>, vector<16x384xbf16>,
    %c1_350 = arith.constant 1 : index
    %c0_351 = arith.constant 0 : index
    %c115_352 = arith.constant 115 : index
    %267 = vector.load %arg1[%c1_350, %c0_351, %c115_352] : memref<2x16x528xbf16, #tpu.memory_space<vmem>>, vector<1x16x384xbf16>
    %268 = vector.shape_cast %267 : vector<1x16x384xbf16> to vector<16x384xbf16>
    %c640_353 = arith.constant 640 : index
    %c384_354 = arith.constant 384 : index
    %269 = vector.load %arg5[%c640_353, %c384_354] : memref<784x768xbf16, #tpu.memory_space<vmem>>, vector<16x384xbf16>
    tpu.vector_store %arg5[%c640_353, %c384_354], %268 {strides = array<i32>} : memref<784x768xbf16, #tpu.memory_space<vmem>>, vector<16x384xbf16>,
    %c1_355 = arith.constant 1 : index
    %c0_356 = arith.constant 0 : index
    %c116_357 = arith.constant 116 : index
    %270 = vector.load %arg1[%c1_355, %c0_356, %c116_357] : memref<2x16x528xbf16, #tpu.memory_space<vmem>>, vector<1x16x384xbf16>
    %271 = vector.shape_cast %270 : vector<1x16x384xbf16> to vector<16x384xbf16>
    %c656_358 = arith.constant 656 : index
    %c384_359 = arith.constant 384 : index
    %272 = vector.load %arg5[%c656_358, %c384_359] : memref<784x768xbf16, #tpu.memory_space<vmem>>, vector<16x384xbf16>
    tpu.vector_store %arg5[%c656_358, %c384_359], %271 {strides = array<i32>} : memref<784x768xbf16, #tpu.memory_space<vmem>>, vector<16x384xbf16>,
    %c1_360 = arith.constant 1 : index
    %c0_361 = arith.constant 0 : index
    %c132_362 = arith.constant 132 : index
    %273 = vector.load %arg1[%c1_360, %c0_361, %c132_362] : memref<2x16x528xbf16, #tpu.memory_space<vmem>>, vector<1x16x384xbf16>
    %274 = vector.shape_cast %273 : vector<1x16x384xbf16> to vector<16x384xbf16>
    %c672_363 = arith.constant 672 : index
    %c384_364 = arith.constant 384 : index
    %275 = vector.load %arg5[%c672_363, %c384_364] : memref<784x768xbf16, #tpu.memory_space<vmem>>, vector<16x384xbf16>
    tpu.vector_store %arg5[%c672_363, %c384_364], %274 {strides = array<i32>} : memref<784x768xbf16, #tpu.memory_space<vmem>>, vector<16x384xbf16>,
    %c1_365 = arith.constant 1 : index
    %c0_366 = arith.constant 0 : index
    %c133_367 = arith.constant 133 : index
    %276 = vector.load %arg1[%c1_365, %c0_366, %c133_367] : memref<2x16x528xbf16, #tpu.memory_space<vmem>>, vector<1x16x384xbf16>
    %277 = vector.shape_cast %276 : vector<1x16x384xbf16> to vector<16x384xbf16>
    %c688_368 = arith.constant 688 : index
    %c384_369 = arith.constant 384 : index
    %278 = vector.load %arg5[%c688_368, %c384_369] : memref<784x768xbf16, #tpu.memory_space<vmem>>, vector<16x384xbf16>
    tpu.vector_store %arg5[%c688_368, %c384_369], %277 {strides = array<i32>} : memref<784x768xbf16, #tpu.memory_space<vmem>>, vector<16x384xbf16>,
    %c1_370 = arith.constant 1 : index
    %c0_371 = arith.constant 0 : index
    %c134_372 = arith.constant 134 : index
    %279 = vector.load %arg1[%c1_370, %c0_371, %c134_372] : memref<2x16x528xbf16, #tpu.memory_space<vmem>>, vector<1x16x384xbf16>
    %280 = vector.shape_cast %279 : vector<1x16x384xbf16> to vector<16x384xbf16>
    %c704_373 = arith.constant 704 : index
    %c384_374 = arith.constant 384 : index
    %281 = vector.load %arg5[%c704_373, %c384_374] : memref<784x768xbf16, #tpu.memory_space<vmem>>, vector<16x384xbf16>
    tpu.vector_store %arg5[%c704_373, %c384_374], %280 {strides = array<i32>} : memref<784x768xbf16, #tpu.memory_space<vmem>>, vector<16x384xbf16>,
    %c1_375 = arith.constant 1 : index
    %c0_376 = arith.constant 0 : index
    %c135_377 = arith.constant 135 : index
    %282 = vector.load %arg1[%c1_375, %c0_376, %c135_377] : memref<2x16x528xbf16, #tpu.memory_space<vmem>>, vector<1x16x384xbf16>
    %283 = vector.shape_cast %282 : vector<1x16x384xbf16> to vector<16x384xbf16>
    %c720_378 = arith.constant 720 : index
    %c384_379 = arith.constant 384 : index
    %284 = vector.load %arg5[%c720_378, %c384_379] : memref<784x768xbf16, #tpu.memory_space<vmem>>, vector<16x384xbf16>
    tpu.vector_store %arg5[%c720_378, %c384_379], %283 {strides = array<i32>} : memref<784x768xbf16, #tpu.memory_space<vmem>>, vector<16x384xbf16>,
    %c1_380 = arith.constant 1 : index
    %c0_381 = arith.constant 0 : index
    %c136_382 = arith.constant 136 : index
    %285 = vector.load %arg1[%c1_380, %c0_381, %c136_382] : memref<2x16x528xbf16, #tpu.memory_space<vmem>>, vector<1x16x384xbf16>
    %286 = vector.shape_cast %285 : vector<1x16x384xbf16> to vector<16x384xbf16>
    %c736_383 = arith.constant 736 : index
    %c384_384 = arith.constant 384 : index
    %287 = vector.load %arg5[%c736_383, %c384_384] : memref<784x768xbf16, #tpu.memory_space<vmem>>, vector<16x384xbf16>
    tpu.vector_store %arg5[%c736_383, %c384_384], %286 {strides = array<i32>} : memref<784x768xbf16, #tpu.memory_space<vmem>>, vector<16x384xbf16>,
    %c1_385 = arith.constant 1 : index
    %c0_386 = arith.constant 0 : index
    %c137_387 = arith.constant 137 : index
    %288 = vector.load %arg1[%c1_385, %c0_386, %c137_387] : memref<2x16x528xbf16, #tpu.memory_space<vmem>>, vector<1x16x384xbf16>
    %289 = vector.shape_cast %288 : vector<1x16x384xbf16> to vector<16x384xbf16>
    %c752_388 = arith.constant 752 : index
    %c384_389 = arith.constant 384 : index
    %290 = vector.load %arg5[%c752_388, %c384_389] : memref<784x768xbf16, #tpu.memory_space<vmem>>, vector<16x384xbf16>
    tpu.vector_store %arg5[%c752_388, %c384_389], %289 {strides = array<i32>} : memref<784x768xbf16, #tpu.memory_space<vmem>>, vector<16x384xbf16>,
    %c1_390 = arith.constant 1 : index
    %c0_391 = arith.constant 0 : index
    %c138_392 = arith.constant 138 : index
    %291 = vector.load %arg1[%c1_390, %c0_391, %c138_392] : memref<2x16x528xbf16, #tpu.memory_space<vmem>>, vector<1x16x384xbf16>
    %292 = vector.shape_cast %291 : vector<1x16x384xbf16> to vector<16x384xbf16>
    %c768_393 = arith.constant 768 : index
    %c384_394 = arith.constant 384 : index
    %293 = vector.load %arg5[%c768_393, %c384_394] : memref<784x768xbf16, #tpu.memory_space<vmem>>, vector<16x384xbf16>
    tpu.vector_store %arg5[%c768_393, %c384_394], %292 {strides = array<i32>} : memref<784x768xbf16, #tpu.memory_space<vmem>>, vector<16x384xbf16>,
    %c0_395 = arith.constant 0 : index
    %c0_396 = arith.constant 0 : index
    %294 = vector.load %arg2[%c0_395, %c0_396] : memref<16x784xbf16, #tpu.memory_space<vmem>>, vector<16x784xbf16>
    %c0_397 = arith.constant 0 : index
    %c0_398 = arith.constant 0 : index
    %295 = vector.load %arg5[%c0_397, %c0_398] : memref<784x768xbf16, #tpu.memory_space<vmem>>, vector<784x768xbf16>
    %cst = arith.constant dense<0.000000e+00> : vector<16x768xf32>
    %296 = tpu.matmul %294, %295, %cst {dimension_numbers = #tpu.dot_dimension_numbers<[1], [0], [0], [1], [0, 0, 1, 1], [], []>} : vector<16x784xbf16>, vector<784x768xbf16>, vector<16x768xf32> -> vector<16x768xf32>
    %c0_399 = arith.constant 0 : index
    %c0_400 = arith.constant 0 : index
    %297 = vector.load %arg3[%c0_399, %c0_400] : memref<16x1xf32, #tpu.memory_space<vmem>>, vector<16x1xf32>
    %298 = vector.broadcast %297 : vector<16x1xf32> to vector<16x768xf32>
    %299 = arith.addf %296, %298 : vector<16x768xf32>
    %300 = vector.extract_strided_slice %299 {offsets = [0, 0], sizes = [8, 768], strides = [1, 1]} : vector<16x768xf32> to vector<8x768xf32>
    %301 = vector.extract_strided_slice %299 {offsets = [8, 0], sizes = [8, 768], strides = [1, 1]} : vector<16x768xf32> to vector<8x768xf32>
    %302 = arith.negf %301 : vector<8x768xf32>
    %303 = math.exp %302 : vector<8x768xf32>
    %cst_401 = arith.constant 1.000000e+00 : f32
    %304 = vector.broadcast %cst_401 : f32 to vector<8x768xf32>
    %305 = arith.addf %304, %303 : vector<8x768xf32>
    %306 = arith.divf %304, %305 : vector<8x768xf32>
    %307 = arith.mulf %300, %306 : vector<8x768xf32>
    %308 = vector.extract_strided_slice %307 {offsets = [0, 0], sizes = [8, 384], strides = [1, 1]} : vector<8x768xf32> to vector<8x384xf32>
    %c0_402 = arith.constant 0 : index
    %c0_403 = arith.constant 0 : index
    %c0_404 = arith.constant 0 : index
    %309 = vector.load %arg4[%c0_402, %c0_403, %c0_404] : memref<2x8x384xf32, #tpu.memory_space<vmem>>, vector<1x8x384xf32>
    %310 = vector.shape_cast %309 : vector<1x8x384xf32> to vector<8x384xf32>
    %311 = vector.shape_cast %308 : vector<8x384xf32> to vector<1x8x384xf32>
    tpu.vector_store %arg4[%c0_402, %c0_403, %c0_404], %311 {strides = array<i32>} : memref<2x8x384xf32, #tpu.memory_space<vmem>>, vector<1x8x384xf32>,
    %312 = vector.extract_strided_slice %307 {offsets = [0, 384], sizes = [8, 384], strides = [1, 1]} : vector<8x768xf32> to vector<8x384xf32>
    %c1_405 = arith.constant 1 : index
    %c0_406 = arith.constant 0 : index
    %c0_407 = arith.constant 0 : index
    %313 = vector.load %arg4[%c1_405, %c0_406, %c0_407] : memref<2x8x384xf32, #tpu.memory_space<vmem>>, vector<1x8x384xf32>
    %314 = vector.shape_cast %313 : vector<1x8x384xf32> to vector<8x384xf32>
    %315 = vector.shape_cast %312 : vector<8x384xf32> to vector<1x8x384xf32>
    tpu.vector_store %arg4[%c1_405, %c0_406, %c0_407], %315 {strides = array<i32>} : memref<2x8x384xf32, #tpu.memory_space<vmem>>, vector<1x8x384xf32>,
    return
  }
  func.func @transform_0(%arg0: i32) -> (i32, i32, i32) {
    %c0_i32 = arith.constant 0 : i32
    %c0_i32_0 = arith.constant 0 : i32
    %c0_i32_1 = arith.constant 0 : i32
    return %arg0, %c0_i32, %c0_i32_0 : i32, i32, i32
  }
  func.func @transform_1(%arg0: i32) -> (i32, i32) {
    %c0_i32 = arith.constant 0 : i32
    %c0_i32_0 = arith.constant 0 : i32
    %c0_i32_1 = arith.constant 0 : i32
    return %c0_i32, %c0_i32_0 : i32, i32
  }
  func.func @transform_2(%arg0: i32) -> (i32, i32) {
    %c0_i32 = arith.constant 0 : i32
    %c0_i32_0 = arith.constant 0 : i32
    %c0_i32_1 = arith.constant 0 : i32
    return %c0_i32, %c0_i32_0 : i32, i32
  }
  func.func @transform_3(%arg0: i32) -> (i32, i32, i32) {
    %c0_i32 = arith.constant 0 : i32
    %c0_i32_0 = arith.constant 0 : i32
    %c0_i32_1 = arith.constant 0 : i32
    return %arg0, %c0_i32, %c0_i32_0 : i32, i32, i32
  }
}

</mosaic_0001>

<llo_original>
// kernel: tpu_custom_call.1
$region0: #{tpu_custom_call.1}
  #allocation0 [shape = 'u32[]', space=smem, size = 0x4, offset = 0x4, fixed_abs, tag = 'smem constant byte address 0x4 - core index']
  #allocation1 [shape = 'u32[72,128]{1,0:T(1,128)}', space=vmem, size = 0x9000, scoped, tag = 'internal scratch']
  #allocation2 [shape = 'bf16[784,768]{1,0:T(8,128)(2,1)}', space=vmem, size = 0x126000, scoped, tag = 'scratch operand']
  %s0 = inlined_call_operand.hbm [shape: bf16[2,16,528], index: 0, kind: input, shape index: {}]
  %s1 = inlined_call_operand.hbm [shape: bf16[16,784], index: 1, kind: input, shape index: {}]
  %s2 = inlined_call_operand.vmem [shape: f32[16,1], index: 2, kind: input, shape index: {}]
  %s3 = inlined_call_operand.hbm [shape: f32[2,8,384], index: 3, kind: output, shape index: {}]
  %s4 = sld [smem:[#allocation0]]
  $region30: #{tpu_custom_call.1} parent=0
    _
  %s6 = ssub.s32 1, %s4
  %s7 = scalar_select 0, %s6, %s4
  $region1: #{tpu_custom_call.1} parent=0
    #allocation3 [shape = 'u8[40960]{0}', space=vmem, size = 0xa000, scoped, tag = 'input window, operand 0, single buffered']
    #allocation4 [shape = 's32[1]{0}', space=sflag, size = 0x4, scoped, tag = 'scoped memory for tpu_custom_call.1']
    #allocation5 [shape = 's32[1]{0}', space=sflag, size = 0x4, scoped, tag = 'scoped memory for tpu_custom_call.1']
    #allocation6 [shape = 'u8[28672]{0}', space=vmem, size = 0x7000, scoped, tag = 'input window, operand 1, single buffered']
    #allocation7 [shape = 's32[1]{0}', space=sflag, size = 0x4, scoped, tag = 'scoped memory for tpu_custom_call.1']
    #allocation8 [shape = 'u8[24576]{0}', space=vmem, size = 0x6000, scoped, tag = 'output window, operand 0, single buffered']
    %8 = vsyncpa [#allocation4], 0
    %9 = vsyncpa [#allocation7], 0
    %10 = vsyncpa [#allocation5], 0
    // Predicated region
    $region2: #{tpu_custom_call.1} parent=1 // pred_check
      _
    $region3: #{tpu_custom_call.1} parent=1 // pred_check_branch
      %12 = sbr.rel (0) target = $region5
    $region4: #{tpu_custom_call.1} parent=1 // pred_region
      %14 = vsyncadd [#allocation4], 0
      %s15 = sshll.u32 %s0, 4
      %s16 = int_to_ptr.hbm [resolvable:$true] %s15
      %s17 = sshll.u32 [#allocation3], 4
      %s18 = int_to_ptr.vmem [resolvable:$true] %s17
      %23 = dma.hbm_to_vmem [thread:$0]  %s16, 1280, %s18, [#allocation4], 320, 320, 20
    $region5: #{tpu_custom_call.1} parent=1 // pred_fallthru
      _
    // Predicated region
    $region6: #{tpu_custom_call.1} parent=1 // pred_check
      _
    $region7: #{tpu_custom_call.1} parent=1 // pred_check_branch
      %25 = sbr.rel (0) target = $region9
    $region8: #{tpu_custom_call.1} parent=1 // pred_region
      %27 = vsyncadd [#allocation7], 0
      %s28 = sshll.u32 %s1, 4
      %s29 = int_to_ptr.hbm [resolvable:$true] %s28
      %s30 = sshll.u32 [#allocation6], 4
      %s31 = int_to_ptr.vmem [resolvable:$true] %s30
      %36 = dma.hbm_to_vmem [thread:$0]  %s29, 896, %s31, [#allocation7], 448, 448, 28
    $region9: #{tpu_custom_call.1} parent=1 // pred_fallthru
      _
    // Predicated region
    $region10: #{tpu_custom_call.1} parent=1 // pred_check
      _
    $region11: #{tpu_custom_call.1} parent=1 // pred_check_branch
      %38 = sbr.rel (0) target = $region13
    $region12: #{tpu_custom_call.1} parent=1 // pred_region
      _
    $region13: #{tpu_custom_call.1} parent=1 // pred_fallthru
      _
    // Predicated region
    $region14: #{tpu_custom_call.1} parent=1 // pred_check
      _
    $region15: #{tpu_custom_call.1} parent=1 // pred_check_branch
      %40 = sbr.rel (0) target = $region17
    $region16: #{tpu_custom_call.1} parent=1 // pred_region
      %42 = dma.done [#allocation4], 1280
    $region17: #{tpu_custom_call.1} parent=1 // pred_fallthru
      _
    // Predicated region
    $region18: #{tpu_custom_call.1} parent=1 // pred_check
      _
    $region19: #{tpu_custom_call.1} parent=1 // pred_check_branch
      %44 = sbr.rel (0) target = $region21
    $region20: #{tpu_custom_call.1} parent=1 // pred_region
      %46 = dma.done [#allocation7], 896
    $region21: #{tpu_custom_call.1} parent=1 // pred_fallthru
      _
    %v48 = vld [vmem:[#allocation3] sm:$0xff]
    %v49 = vld [vmem:[#allocation3 + $0x8] sm:$0xf]
    %v50 = vld [vmem:[#allocation3 + $0x14] sm:$0xff]
    %v51 = vld [vmem:[#allocation3 + $0x1c] sm:$0xf]
    %52 = vst [vmem:[#allocation2] sm:$0xff] %v48
    %53 = vst [vmem:[#allocation2 + $0x8] sm:$0xf] %v49
    %54 = vst [vmem:[#allocation2 + $0x18] sm:$0xff] %v50
    %55 = vst [vmem:[#allocation2 + $0x20] sm:$0xf] %v51
    %v56 = vld [vmem:[#allocation3] sm:$0xff]
    %v57 = vld [vmem:[#allocation3 + $0x8] sm:$0xff]
    %v58 = vld [vmem:[#allocation3 + $0x14] sm:$0xff]
    %v59 = vld [vmem:[#allocation3 + $0x1c] sm:$0xff]
    %64 = vrot.lane.b32.xlu0 %v56, 127
    %v65 = vpop.permute.xlu0 %64
    %66 = vrot.lane.b32.xlu0 %v57, 127
    %v67 = vpop.permute.xlu0 %66
    %68 = vrot.lane.b32.xlu0 %v58, 127
    %v69 = vpop.permute.xlu0 %68
    %70 = vrot.lane.b32.xlu0 %v59, 127
    %v71 = vpop.permute.xlu0 %70
    %v72 = vrot.slane %v65, 4
    %v73 = vrot.slane %v67, 4
    %v74 = vrot.slane %v69, 4
    %v75 = vrot.slane %v71, 4
    %vm76 = vcmask 1043456
    %v77 = vsel %vm76, %v72, %v73
    %vm78 = vcmask 1039360
    %v79 = vsel %vm78, %v65, %v77
    %v80 = vsel %vm78, %v67, %v73
    %v81 = vsel %vm76, %v74, %v75
    %v82 = vsel %vm78, %v69, %v81
    %v83 = vsel %vm78, %v71, %v75
    %88 = vst [vmem:[#allocation2 + $0x30] sm:$0xff] %v79
    %89 = vst [vmem:[#allocation2 + $0x38] sm:$0xf] %v80
    %90 = vst [vmem:[#allocation2 + $0x48] sm:$0xff] %v82
    %91 = vst [vmem:[#allocation2 + $0x50] sm:$0xf] %v83
    %v92 = vld [vmem:[#allocation3] sm:$0xff]
    %v93 = vld [vmem:[#allocation3 + $0x8] sm:$0xff]
    %v94 = vld [vmem:[#allocation3 + $0x14] sm:$0xff]
    %v95 = vld [vmem:[#allocation3 + $0x1c] sm:$0xff]
    %100 = vrot.lane.b32.xlu0 %v92, 126
    %v101 = vpop.permute.xlu0 %100
    %102 = vrot.lane.b32.xlu0 %v93, 126
    %v103 = vpop.permute.xlu0 %102
    %104 = vrot.lane.b32.xlu0 %v94, 126
    %v105 = vpop.permute.xlu0 %104
    %106 = vrot.lane.b32.xlu0 %v95, 126
    %v107 = vpop.permute.xlu0 %106
    %v108 = vrot.slane %v101, 4
    %v109 = vrot.slane %v103, 4
    %v110 = vrot.slane %v105, 4
    %v111 = vrot.slane %v107, 4
    %v112 = vsel %vm76, %v108, %v109
    %vm113 = vcmask 1031168
    %v114 = vsel %vm113, %v101, %v112
    %v115 = vsel %vm113, %v103, %v109
    %v116 = vsel %vm76, %v110, %v111
    %v117 = vsel %vm113, %v105, %v116
    %v118 = vsel %vm113, %v107, %v111
    %123 = vst [vmem:[#allocation2 + $0x60] sm:$0xff] %v114
    %124 = vst [vmem:[#allocation2 + $0x68] sm:$0xf] %v115
    %125 = vst [vmem:[#allocation2 + $0x78] sm:$0xff] %v117
    %126 = vst [vmem:[#allocation2 + $0x80] sm:$0xf] %v118
    %v127 = vld [vmem:[#allocation3] sm:$0xff]
    %v128 = vld [vmem:[#allocation3 + $0x8] sm:$0xff]
    %v129 = vld [vmem:[#allocation3 + $0x14] sm:$0xff]
    %v130 = vld [vmem:[#allocation3 + $0x1c] sm:$0xff]
    %135 = vrot.lane.b32.xlu0 %v127, 125
    %v136 = vpop.permute.xlu0 %135
    %137 = vrot.lane.b32.xlu0 %v128, 125
    %v138 = vpop.permute.xlu0 %137
    %139 = vrot.lane.b32.xlu0 %v129, 125
    %v140 = vpop.permute.xlu0 %139
    %141 = vrot.lane.b32.xlu0 %v130, 125
    %v142 = vpop.permute.xlu0 %141
    %v143 = vrot.slane %v136, 4
    %v144 = vrot.slane %v138, 4
    %v145 = vrot.slane %v140, 4
    %v146 = vrot.slane %v142, 4
    %v147 = vsel %vm76, %v143, %v144
    %vm148 = vcmask 1022976
    %v149 = vsel %vm148, %v136, %v147
    %v150 = vsel %vm148, %v138, %v144
    %v151 = vsel %vm76, %v145, %v146
    %v152 = vsel %vm148, %v140, %v151
    %v153 = vsel %vm148, %v142, %v146
    %158 = vst [vmem:[#allocation2 + $0x90] sm:$0xff] %v149
    %159 = vst [vmem:[#allocation2 + $0x98] sm:$0xf] %v150
    %160 = vst [vmem:[#allocation2 + $0xa8] sm:$0xff] %v152
    %161 = vst [vmem:[#allocation2 + $0xb0] sm:$0xf] %v153
    %v162 = vld [vmem:[#allocation3] sm:$0xff]
    %v163 = vld [vmem:[#allocation3 + $0x8] sm:$0xff]
    %v164 = vld [vmem:[#allocation3 + $0x14] sm:$0xff]
    %v165 = vld [vmem:[#allocation3 + $0x1c] sm:$0xff]
    %170 = vrot.lane.b32.xlu0 %v162, 124
    %v171 = vpop.permute.xlu0 %170
    %172 = vrot.lane.b32.xlu0 %v163, 124
    %v173 = vpop.permute.xlu0 %172
    %174 = vrot.lane.b32.xlu0 %v164, 124
    %v175 = vpop.permute.xlu0 %174
    %176 = vrot.lane.b32.xlu0 %v165, 124
    %v177 = vpop.permute.xlu0 %176
    %v178 = vrot.slane %v171, 4
    %v179 = vrot.slane %v173, 4
    %v180 = vrot.slane %v175, 4
    %v181 = vrot.slane %v177, 4
    %v182 = vsel %vm76, %v178, %v179
    %vm183 = vcmask 1014784
    %v184 = vsel %vm183, %v171, %v182
    %v185 = vsel %vm183, %v173, %v179
    %v186 = vsel %vm76, %v180, %v181
    %v187 = vsel %vm183, %v175, %v186
    %v188 = vsel %vm183, %v177, %v181
    %193 = vst [vmem:[#allocation2 + $0xc0] sm:$0xff] %v184
    %194 = vst [vmem:[#allocation2 + $0xc8] sm:$0xf] %v185
    %195 = vst [vmem:[#allocation2 + $0xd8] sm:$0xff] %v187
    %196 = vst [vmem:[#allocation2 + $0xe0] sm:$0xf] %v188
    %v197 = vld [vmem:[#allocation3] sm:$0xff]
    %v198 = vld [vmem:[#allocation3 + $0x8] sm:$0xff]
    %v199 = vld [vmem:[#allocation3 + $0x14] sm:$0xff]
    %v200 = vld [vmem:[#allocation3 + $0x1c] sm:$0xff]
    %205 = vrot.lane.b32.xlu0 %v197, 123
    %v206 = vpop.permute.xlu0 %205
    %207 = vrot.lane.b32.xlu0 %v198, 123
    %v208 = vpop.permute.xlu0 %207
    %209 = vrot.lane.b32.xlu0 %v199, 123
    %v210 = vpop.permute.xlu0 %209
    %211 = vrot.lane.b32.xlu0 %v200, 123
    %v212 = vpop.permute.xlu0 %211
    %v213 = vrot.slane %v206, 4
    %v214 = vrot.slane %v208, 4
    %v215 = vrot.slane %v210, 4
    %v216 = vrot.slane %v212, 4
    %v217 = vsel %vm76, %v213, %v214
    %vm218 = vcmask 1006592
    %v219 = vsel %vm218, %v206, %v217
    %v220 = vsel %vm218, %v208, %v214
    %v221 = vsel %vm76, %v215, %v216
    %v222 = vsel %vm218, %v210, %v221
    %v223 = vsel %vm218, %v212, %v216
    %228 = vst [vmem:[#allocation2 + $0xf0] sm:$0xff] %v219
    %229 = vst [vmem:[#allocation2 + $0xf8] sm:$0xf] %v220
    %230 = vst [vmem:[#allocation2 + $0x108] sm:$0xff] %v222
    %231 = vst [vmem:[#allocation2 + $0x110] sm:$0xf] %v223
    %v232 = vld [vmem:[#allocation3] sm:$0xff]
    %v233 = vld [vmem:[#allocation3 + $0x8] sm:$0xff]
    %v234 = vld [vmem:[#allocation3 + $0x14] sm:$0xff]
    %v235 = vld [vmem:[#allocation3 + $0x1c] sm:$0xff]
    %240 = vrot.lane.b32.xlu0 %v232, 122
    %v241 = vpop.permute.xlu0 %240
    %242 = vrot.lane.b32.xlu0 %v233, 122
    %v243 = vpop.permute.xlu0 %242
    %244 = vrot.lane.b32.xlu0 %v234, 122
    %v245 = vpop.permute.xlu0 %244
    %246 = vrot.lane.b32.xlu0 %v235, 122
    %v247 = vpop.permute.xlu0 %246
    %v248 = vrot.slane %v241, 4
    %v249 = vrot.slane %v243, 4
    %v250 = vrot.slane %v245, 4
    %v251 = vrot.slane %v247, 4
    %v252 = vsel %vm76, %v248, %v249
    %vm253 = vcmask 998400
    %v254 = vsel %vm253, %v241, %v252
    %v255 = vsel %vm253, %v243, %v249
    %v256 = vsel %vm76, %v250, %v251
    %v257 = vsel %vm253, %v245, %v256
    %v258 = vsel %vm253, %v247, %v251
    %263 = vst [vmem:[#allocation2 + $0x120] sm:$0xff] %v254
    %264 = vst [vmem:[#allocation2 + $0x128] sm:$0xf] %v255
    %265 = vst [vmem:[#allocation2 + $0x138] sm:$0xff] %v257
    %266 = vst [vmem:[#allocation2 + $0x140] sm:$0xf] %v258
    %v267 = vld [vmem:[#allocation3] sm:$0xff]
    %v268 = vld [vmem:[#allocation3 + $0x8] sm:$0xff]
    %v269 = vld [vmem:[#allocation3 + $0x14] sm:$0xff]
    %v270 = vld [vmem:[#allocation3 + $0x1c] sm:$0xff]
    %275 = vrot.lane.b32.xlu0 %v267, 106
    %v276 = vpop.permute.xlu0 %275
    %277 = vrot.lane.b32.xlu0 %v268, 106
    %v278 = vpop.permute.xlu0 %277
    %279 = vrot.lane.b32.xlu0 %v269, 106
    %v280 = vpop.permute.xlu0 %279
    %281 = vrot.lane.b32.xlu0 %v270, 106
    %v282 = vpop.permute.xlu0 %281
    %v283 = vrot.slane %v276, 4
    %v284 = vrot.slane %v278, 4
    %v285 = vrot.slane %v280, 4
    %v286 = vrot.slane %v282, 4
    %v287 = vsel %vm76, %v283, %v284
    %vm288 = vcmask 867328
    %v289 = vsel %vm288, %v276, %v287
    %v290 = vsel %vm288, %v278, %v284
    %v291 = vsel %vm76, %v285, %v286
    %v292 = vsel %vm288, %v280, %v291
    %v293 = vsel %vm288, %v282, %v286
    %298 = vst [vmem:[#allocation2 + $0x150] sm:$0xff] %v289
    %299 = vst [vmem:[#allocation2 + $0x158] sm:$0xf] %v290
    %300 = vst [vmem:[#allocation2 + $0x168] sm:$0xff] %v292
    %301 = vst [vmem:[#allocation2 + $0x170] sm:$0xf] %v293
    %v302 = vld [vmem:[#allocation3] sm:$0xff]
    %v303 = vld [vmem:[#allocation3 + $0x8] sm:$0xff]
    %v304 = vld [vmem:[#allocation3 + $0x14] sm:$0xff]
    %v305 = vld [vmem:[#allocation3 + $0x1c] sm:$0xff]
    %310 = vrot.lane.b32.xlu0 %v302, 105
    %v311 = vpop.permute.xlu0 %310
    %312 = vrot.lane.b32.xlu0 %v303, 105
    %v313 = vpop.permute.xlu0 %312
    %314 = vrot.lane.b32.xlu0 %v304, 105
    %v315 = vpop.permute.xlu0 %314
    %316 = vrot.lane.b32.xlu0 %v305, 105
    %v317 = vpop.permute.xlu0 %316
    %v318 = vrot.slane %v311, 4
    %v319 = vrot.slane %v313, 4
    %v320 = vrot.slane %v315, 4
    %v321 = vrot.slane %v317, 4
    %v322 = vsel %vm76, %v318, %v319
    %vm323 = vcmask 859136
    %v324 = vsel %vm323, %v311, %v322
    %v325 = vsel %vm323, %v313, %v319
    %v326 = vsel %vm76, %v320, %v321
    %v327 = vsel %vm323, %v315, %v326
    %v328 = vsel %vm323, %v317, %v321
    %333 = vst [vmem:[#allocation2 + $0x180] sm:$0xff] %v324
    %334 = vst [vmem:[#allocation2 + $0x188] sm:$0xf] %v325
    %335 = vst [vmem:[#allocation2 + $0x198] sm:$0xff] %v327
    %336 = vst [vmem:[#allocation2 + $0x1a0] sm:$0xf] %v328
    %v337 = vld [vmem:[#allocation3] sm:$0xff]
    %v338 = vld [vmem:[#allocation3 + $0x8] sm:$0xff]
    %v339 = vld [vmem:[#allocation3 + $0x14] sm:$0xff]
    %v340 = vld [vmem:[#allocation3 + $0x1c] sm:$0xff]
    %345 = vrot.lane.b32.xlu0 %v337, 104
    %v346 = vpop.permute.xlu0 %345
    %347 = vrot.lane.b32.xlu0 %v338, 104
    %v348 = vpop.permute.xlu0 %347
    %349 = vrot.lane.b32.xlu0 %v339, 104
    %v350 = vpop.permute.xlu0 %349
    %351 = vrot.lane.b32.xlu0 %v340, 104
    %v352 = vpop.permute.xlu0 %351
    %v353 = vrot.slane %v346, 4
    %v354 = vrot.slane %v348, 4
    %v355 = vrot.slane %v350, 4
    %v356 = vrot.slane %v352, 4
    %v357 = vsel %vm76, %v353, %v354
    %vm358 = vcmask 850944
    %v359 = vsel %vm358, %v346, %v357
    %v360 = vsel %vm358, %v348, %v354
    %v361 = vsel %vm76, %v355, %v356
    %v362 = vsel %vm358, %v350, %v361
    %v363 = vsel %vm358, %v352, %v356
    %368 = vst [vmem:[#allocation2 + $0x1b0] sm:$0xff] %v359
    %369 = vst [vmem:[#allocation2 + $0x1b8] sm:$0xf] %v360
    %370 = vst [vmem:[#allocation2 + $0x1c8] sm:$0xff] %v362
    %371 = vst [vmem:[#allocation2 + $0x1d0] sm:$0xf] %v363
    %v372 = vld [vmem:[#allocation3] sm:$0xff]
    %v373 = vld [vmem:[#allocation3 + $0x8] sm:$0xff]
    %v374 = vld [vmem:[#allocation3 + $0x14] sm:$0xff]
    %v375 = vld [vmem:[#allocation3 + $0x1c] sm:$0xff]
    %380 = vrot.lane.b32.xlu0 %v372, 103
    %v381 = vpop.permute.xlu0 %380
    %382 = vrot.lane.b32.xlu0 %v373, 103
    %v383 = vpop.permute.xlu0 %382
    %384 = vrot.lane.b32.xlu0 %v374, 103
    %v385 = vpop.permute.xlu0 %384
    %386 = vrot.lane.b32.xlu0 %v375, 103
    %v387 = vpop.permute.xlu0 %386
    %v388 = vrot.slane %v381, 4
    %v389 = vrot.slane %v383, 4
    %v390 = vrot.slane %v385, 4
    %v391 = vrot.slane %v387, 4
    %v392 = vsel %vm76, %v388, %v389
    %vm393 = vcmask 842752
    %v394 = vsel %vm393, %v381, %v392
    %v395 = vsel %vm393, %v383, %v389
    %v396 = vsel %vm76, %v390, %v391
    %v397 = vsel %vm393, %v385, %v396
    %v398 = vsel %vm393, %v387, %v391
    %403 = vst [vmem:[#allocation2 + $0x1e0] sm:$0xff] %v394
    %404 = vst [vmem:[#allocation2 + $0x1e8] sm:$0xf] %v395
    %405 = vst [vmem:[#allocation2 + $0x1f8] sm:$0xff] %v397
    %406 = vst [vmem:[#allocation2 + $0x200] sm:$0xf] %v398
    %v407 = vld [vmem:[#allocation3] sm:$0xff]
    %v408 = vld [vmem:[#allocation3 + $0x8] sm:$0xff]
    %v409 = vld [vmem:[#allocation3 + $0x14] sm:$0xff]
    %v410 = vld [vmem:[#allocation3 + $0x1c] sm:$0xff]
    %415 = vrot.lane.b32.xlu0 %v407, 102
    %v416 = vpop.permute.xlu0 %415
    %417 = vrot.lane.b32.xlu0 %v408, 102
    %v418 = vpop.permute.xlu0 %417
    %419 = vrot.lane.b32.xlu0 %v409, 102
    %v420 = vpop.permute.xlu0 %419
    %421 = vrot.lane.b32.xlu0 %v410, 102
    %v422 = vpop.permute.xlu0 %421
    %v423 = vrot.slane %v416, 4
    %v424 = vrot.slane %v418, 4
    %v425 = vrot.slane %v420, 4
    %v426 = vrot.slane %v422, 4
    %v427 = vsel %vm76, %v423, %v424
    %vm428 = vcmask 834560
    %v429 = vsel %vm428, %v416, %v427
    %v430 = vsel %vm428, %v418, %v424
    %v431 = vsel %vm76, %v425, %v426
    %v432 = vsel %vm428, %v420, %v431
    %v433 = vsel %vm428, %v422, %v426
    %438 = vst [vmem:[#allocation2 + $0x210] sm:$0xff] %v429
    %439 = vst [vmem:[#allocation2 + $0x218] sm:$0xf] %v430
    %440 = vst [vmem:[#allocation2 + $0x228] sm:$0xff] %v432
    %441 = vst [vmem:[#allocation2 + $0x230] sm:$0xf] %v433
    %v442 = vld [vmem:[#allocation3] sm:$0xff]
    %v443 = vld [vmem:[#allocation3 + $0x8] sm:$0xff]
    %v444 = vld [vmem:[#allocation3 + $0x14] sm:$0xff]
    %v445 = vld [vmem:[#allocation3 + $0x1c] sm:$0xff]
    %450 = vrot.lane.b32.xlu0 %v442, 101
    %v451 = vpop.permute.xlu0 %450
    %452 = vrot.lane.b32.xlu0 %v443, 101
    %v453 = vpop.permute.xlu0 %452
    %454 = vrot.lane.b32.xlu0 %v444, 101
    %v455 = vpop.permute.xlu0 %454
    %456 = vrot.lane.b32.xlu0 %v445, 101
    %v457 = vpop.permute.xlu0 %456
    %v458 = vrot.slane %v451, 4
    %v459 = vrot.slane %v453, 4
    %v460 = vrot.slane %v455, 4
    %v461 = vrot.slane %v457, 4
    %v462 = vsel %vm76, %v458, %v459
    %vm463 = vcmask 826368
    %v464 = vsel %vm463, %v451, %v462
    %v465 = vsel %vm463, %v453, %v459
    %v466 = vsel %vm76, %v460, %v461
    %v467 = vsel %vm463, %v455, %v466
    %v468 = vsel %vm463, %v457, %v461
    %473 = vst [vmem:[#allocation2 + $0x240] sm:$0xff] %v464
    %474 = vst [vmem:[#allocation2 + $0x248] sm:$0xf] %v465
    %475 = vst [vmem:[#allocation2 + $0x258] sm:$0xff] %v467
    %476 = vst [vmem:[#allocation2 + $0x260] sm:$0xf] %v468
    %v477 = vld [vmem:[#allocation3] sm:$0xff]
    %v478 = vld [vmem:[#allocation3 + $0x8] sm:$0xff]
    %v479 = vld [vmem:[#allocation3 + $0x14] sm:$0xff]
    %v480 = vld [vmem:[#allocation3 + $0x1c] sm:$0xff]
    %485 = vrot.lane.b32.xlu0 %v477, 100
    %v486 = vpop.permute.xlu0 %485
    %487 = vrot.lane.b32.xlu0 %v478, 100
    %v488 = vpop.permute.xlu0 %487
    %489 = vrot.lane.b32.xlu0 %v479, 100
    %v490 = vpop.permute.xlu0 %489
    %491 = vrot.lane.b32.xlu0 %v480, 100
    %v492 = vpop.permute.xlu0 %491
    %v493 = vrot.slane %v486, 4
    %v494 = vrot.slane %v488, 4
    %v495 = vrot.slane %v490, 4
    %v496 = vrot.slane %v492, 4
    %v497 = vsel %vm76, %v493, %v494
    %vm498 = vcmask 818176
    %v499 = vsel %vm498, %v486, %v497
    %v500 = vsel %vm498, %v488, %v494
    %v501 = vsel %vm76, %v495, %v496
    %v502 = vsel %vm498, %v490, %v501
    %v503 = vsel %vm498, %v492, %v496
    %508 = vst [vmem:[#allocation2 + $0x270] sm:$0xff] %v499
    %509 = vst [vmem:[#allocation2 + $0x278] sm:$0xf] %v500
    %510 = vst [vmem:[#allocation2 + $0x288] sm:$0xff] %v502
    %511 = vst [vmem:[#allocation2 + $0x290] sm:$0xf] %v503
    %v512 = vld [vmem:[#allocation3] sm:$0xff]
    %v513 = vld [vmem:[#allocation3 + $0x8] sm:$0xff]
    %v514 = vld [vmem:[#allocation3 + $0x14] sm:$0xff]
    %v515 = vld [vmem:[#allocation3 + $0x1c] sm:$0xff]
    %520 = vrot.lane.b32.xlu0 %v512, 84
    %v521 = vpop.permute.xlu0 %520
    %522 = vrot.lane.b32.xlu0 %v513, 84
    %v523 = vpop.permute.xlu0 %522
    %524 = vrot.lane.b32.xlu0 %v514, 84
    %v525 = vpop.permute.xlu0 %524
    %526 = vrot.lane.b32.xlu0 %v515, 84
    %v527 = vpop.permute.xlu0 %526
    %v528 = vrot.slane %v521, 4
    %v529 = vrot.slane %v523, 4
    %v530 = vrot.slane %v525, 4
    %v531 = vrot.slane %v527, 4
    %v532 = vsel %vm76, %v528, %v529
    %vm533 = vcmask 687104
    %v534 = vsel %vm533, %v521, %v532
    %v535 = vsel %vm533, %v523, %v529
    %v536 = vsel %vm76, %v530, %v531
    %v537 = vsel %vm533, %v525, %v536
    %v538 = vsel %vm533, %v527, %v531
    %543 = vst [vmem:[#allocation2 + $0x2a0] sm:$0xff] %v534
    %544 = vst [vmem:[#allocation2 + $0x2a8] sm:$0xf] %v535
    %545 = vst [vmem:[#allocation2 + $0x2b8] sm:$0xff] %v537
    %546 = vst [vmem:[#allocation2 + $0x2c0] sm:$0xf] %v538
    %v547 = vld [vmem:[#allocation3] sm:$0xff]
    %v548 = vld [vmem:[#allocation3 + $0x8] sm:$0xff]
    %v549 = vld [vmem:[#allocation3 + $0x14] sm:$0xff]
    %v550 = vld [vmem:[#allocation3 + $0x1c] sm:$0xff]
    %555 = vrot.lane.b32.xlu0 %v547, 83
    %v556 = vpop.permute.xlu0 %555
    %557 = vrot.lane.b32.xlu0 %v548, 83
    %v558 = vpop.permute.xlu0 %557
    %559 = vrot.lane.b32.xlu0 %v549, 83
    %v560 = vpop.permute.xlu0 %559
    %561 = vrot.lane.b32.xlu0 %v550, 83
    %v562 = vpop.permute.xlu0 %561
    %v563 = vrot.slane %v556, 4
    %v564 = vrot.slane %v558, 4
    %v565 = vrot.slane %v560, 4
    %v566 = vrot.slane %v562, 4
    %v567 = vsel %vm76, %v563, %v564
    %vm568 = vcmask 678912
    %v569 = vsel %vm568, %v556, %v567
    %v570 = vsel %vm568, %v558, %v564
    %v571 = vsel %vm76, %v565, %v566
    %v572 = vsel %vm568, %v560, %v571
    %v573 = vsel %vm568, %v562, %v566
    %578 = vst [vmem:[#allocation2 + $0x2d0] sm:$0xff] %v569
    %579 = vst [vmem:[#allocation2 + $0x2d8] sm:$0xf] %v570
    %580 = vst [vmem:[#allocation2 + $0x2e8] sm:$0xff] %v572
    %581 = vst [vmem:[#allocation2 + $0x2f0] sm:$0xf] %v573
    %v582 = vld [vmem:[#allocation3] sm:$0xff]
    %v583 = vld [vmem:[#allocation3 + $0x8] sm:$0xff]
    %v584 = vld [vmem:[#allocation3 + $0x14] sm:$0xff]
    %v585 = vld [vmem:[#allocation3 + $0x1c] sm:$0xff]
    %590 = vrot.lane.b32.xlu0 %v582, 82
    %v591 = vpop.permute.xlu0 %590
    %592 = vrot.lane.b32.xlu0 %v583, 82
    %v593 = vpop.permute.xlu0 %592
    %594 = vrot.lane.b32.xlu0 %v584, 82
    %v595 = vpop.permute.xlu0 %594
    %596 = vrot.lane.b32.xlu0 %v585, 82
    %v597 = vpop.permute.xlu0 %596
    %v598 = vrot.slane %v591, 4
    %v599 = vrot.slane %v593, 4
    %v600 = vrot.slane %v595, 4
    %v601 = vrot.slane %v597, 4
    %v602 = vsel %vm76, %v598, %v599
    %vm603 = vcmask 670720
    %v604 = vsel %vm603, %v591, %v602
    %v605 = vsel %vm603, %v593, %v599
    %v606 = vsel %vm76, %v600, %v601
    %v607 = vsel %vm603, %v595, %v606
    %v608 = vsel %vm603, %v597, %v601
    %613 = vst [vmem:[#allocation2 + $0x300] sm:$0xff] %v604
    %614 = vst [vmem:[#allocation2 + $0x308] sm:$0xf] %v605
    %615 = vst [vmem:[#allocation2 + $0x318] sm:$0xff] %v607
    %616 = vst [vmem:[#allocation2 + $0x320] sm:$0xf] %v608
    %v617 = vld [vmem:[#allocation3] sm:$0xff]
    %v618 = vld [vmem:[#allocation3 + $0x8] sm:$0xff]
    %v619 = vld [vmem:[#allocation3 + $0x14] sm:$0xff]
    %v620 = vld [vmem:[#allocation3 + $0x1c] sm:$0xff]
    %625 = vrot.lane.b32.xlu0 %v617, 81
    %v626 = vpop.permute.xlu0 %625
    %627 = vrot.lane.b32.xlu0 %v618, 81
    %v628 = vpop.permute.xlu0 %627
    %629 = vrot.lane.b32.xlu0 %v619, 81
    %v630 = vpop.permute.xlu0 %629
    %631 = vrot.lane.b32.xlu0 %v620, 81
    %v632 = vpop.permute.xlu0 %631
    %v633 = vrot.slane %v626, 4
    %v634 = vrot.slane %v628, 4
    %v635 = vrot.slane %v630, 4
    %v636 = vrot.slane %v632, 4
    %v637 = vsel %vm76, %v633, %v634
    %vm638 = vcmask 662528
    %v639 = vsel %vm638, %v626, %v637
    %v640 = vsel %vm638, %v628, %v634
    %v641 = vsel %vm76, %v635, %v636
    %v642 = vsel %vm638, %v630, %v641
    %v643 = vsel %vm638, %v632, %v636
    %648 = vst [vmem:[#allocation2 + $0x330] sm:$0xff] %v639
    %649 = vst [vmem:[#allocation2 + $0x338] sm:$0xf] %v640
    %650 = vst [vmem:[#allocation2 + $0x348] sm:$0xff] %v642
    %651 = vst [vmem:[#allocation2 + $0x350] sm:$0xf] %v643
    %v652 = vld [vmem:[#allocation3] sm:$0xff]
    %v653 = vld [vmem:[#allocation3 + $0x8] sm:$0xff]
    %v654 = vld [vmem:[#allocation3 + $0x14] sm:$0xff]
    %v655 = vld [vmem:[#allocation3 + $0x1c] sm:$0xff]
    %660 = vrot.lane.b32.xlu0 %v652, 80
    %v661 = vpop.permute.xlu0 %660
    %662 = vrot.lane.b32.xlu0 %v653, 80
    %v663 = vpop.permute.xlu0 %662
    %664 = vrot.lane.b32.xlu0 %v654, 80
    %v665 = vpop.permute.xlu0 %664
    %666 = vrot.lane.b32.xlu0 %v655, 80
    %v667 = vpop.permute.xlu0 %666
    %v668 = vrot.slane %v661, 4
    %v669 = vrot.slane %v663, 4
    %v670 = vrot.slane %v665, 4
    %v671 = vrot.slane %v667, 4
    %v672 = vsel %vm76, %v668, %v669
    %vm673 = vcmask 654336
    %v674 = vsel %vm673, %v661, %v672
    %v675 = vsel %vm673, %v663, %v669
    %v676 = vsel %vm76, %v670, %v671
    %v677 = vsel %vm673, %v665, %v676
    %v678 = vsel %vm673, %v667, %v671
    %683 = vst [vmem:[#allocation2 + $0x360] sm:$0xff] %v674
    %684 = vst [vmem:[#allocation2 + $0x368] sm:$0xf] %v675
    %685 = vst [vmem:[#allocation2 + $0x378] sm:$0xff] %v677
    %686 = vst [vmem:[#allocation2 + $0x380] sm:$0xf] %v678
    %v687 = vld [vmem:[#allocation3] sm:$0xff]
    %v688 = vld [vmem:[#allocation3 + $0x8] sm:$0xff]
    %v689 = vld [vmem:[#allocation3 + $0x14] sm:$0xff]
    %v690 = vld [vmem:[#allocation3 + $0x1c] sm:$0xff]
    %695 = vrot.lane.b32.xlu0 %v687, 79
    %v696 = vpop.permute.xlu0 %695
    %697 = vrot.lane.b32.xlu0 %v688, 79
    %v698 = vpop.permute.xlu0 %697
    %699 = vrot.lane.b32.xlu0 %v689, 79
    %v700 = vpop.permute.xlu0 %699
    %701 = vrot.lane.b32.xlu0 %v690, 79
    %v702 = vpop.permute.xlu0 %701
    %v703 = vrot.slane %v696, 4
    %v704 = vrot.slane %v698, 4
    %v705 = vrot.slane %v700, 4
    %v706 = vrot.slane %v702, 4
    %v707 = vsel %vm76, %v703, %v704
    %vm708 = vcmask 646144
    %v709 = vsel %vm708, %v696, %v707
    %v710 = vsel %vm708, %v698, %v704
    %v711 = vsel %vm76, %v705, %v706
    %v712 = vsel %vm708, %v700, %v711
    %v713 = vsel %vm708, %v702, %v706
    %718 = vst [vmem:[#allocation2 + $0x390] sm:$0xff] %v709
    %719 = vst [vmem:[#allocation2 + $0x398] sm:$0xf] %v710
    %720 = vst [vmem:[#allocation2 + $0x3a8] sm:$0xff] %v712
    %721 = vst [vmem:[#allocation2 + $0x3b0] sm:$0xf] %v713
    %v722 = vld [vmem:[#allocation3] sm:$0xff]
    %v723 = vld [vmem:[#allocation3 + $0x8] sm:$0xff]
    %v724 = vld [vmem:[#allocation3 + $0x14] sm:$0xff]
    %v725 = vld [vmem:[#allocation3 + $0x1c] sm:$0xff]
    %730 = vrot.lane.b32.xlu0 %v722, 78
    %v731 = vpop.permute.xlu0 %730
    %732 = vrot.lane.b32.xlu0 %v723, 78
    %v733 = vpop.permute.xlu0 %732
    %734 = vrot.lane.b32.xlu0 %v724, 78
    %v735 = vpop.permute.xlu0 %734
    %736 = vrot.lane.b32.xlu0 %v725, 78
    %v737 = vpop.permute.xlu0 %736
    %v738 = vrot.slane %v731, 4
    %v739 = vrot.slane %v733, 4
    %v740 = vrot.slane %v735, 4
    %v741 = vrot.slane %v737, 4
    %v742 = vsel %vm76, %v738, %v739
    %vm743 = vcmask 637952
    %v744 = vsel %vm743, %v731, %v742
    %v745 = vsel %vm743, %v733, %v739
    %v746 = vsel %vm76, %v740, %v741
    %v747 = vsel %vm743, %v735, %v746
    %v748 = vsel %vm743, %v737, %v741
    %753 = vst [vmem:[#allocation2 + $0x3c0] sm:$0xff] %v744
    %754 = vst [vmem:[#allocation2 + $0x3c8] sm:$0xf] %v745
    %755 = vst [vmem:[#allocation2 + $0x3d8] sm:$0xff] %v747
    %756 = vst [vmem:[#allocation2 + $0x3e0] sm:$0xf] %v748
    %v757 = vld [vmem:[#allocation3] sm:$0xff]
    %v758 = vld [vmem:[#allocation3 + $0x8] sm:$0xff]
    %v759 = vld [vmem:[#allocation3 + $0x14] sm:$0xff]
    %v760 = vld [vmem:[#allocation3 + $0x1c] sm:$0xff]
    %765 = vrot.lane.b32.xlu0 %v757, 62
    %v766 = vpop.permute.xlu0 %765
    %767 = vrot.lane.b32.xlu0 %v758, 62
    %v768 = vpop.permute.xlu0 %767
    %769 = vrot.lane.b32.xlu0 %v759, 62
    %v770 = vpop.permute.xlu0 %769
    %771 = vrot.lane.b32.xlu0 %v760, 62
    %v772 = vpop.permute.xlu0 %771
    %v773 = vrot.slane %v766, 4
    %v774 = vrot.slane %v768, 4
    %v775 = vrot.slane %v770, 4
    %v776 = vrot.slane %v772, 4
    %v777 = vsel %vm76, %v773, %v774
    %vm778 = vcmask 506880
    %v779 = vsel %vm778, %v766, %v777
    %v780 = vsel %vm778, %v768, %v774
    %v781 = vsel %vm76, %v775, %v776
    %v782 = vsel %vm778, %v770, %v781
    %v783 = vsel %vm778, %v772, %v776
    %788 = vst [vmem:[#allocation2 + $0x3f0] sm:$0xff] %v779
    %789 = vst [vmem:[#allocation2 + $0x3f8] sm:$0xf] %v780
    %790 = vst [vmem:[#allocation2 + $0x408] sm:$0xff] %v782
    %791 = vst [vmem:[#allocation2 + $0x410] sm:$0xf] %v783
    %v792 = vld [vmem:[#allocation3] sm:$0xff]
    %v793 = vld [vmem:[#allocation3 + $0x8] sm:$0xff]
    %v794 = vld [vmem:[#allocation3 + $0x14] sm:$0xff]
    %v795 = vld [vmem:[#allocation3 + $0x1c] sm:$0xff]
    %800 = vrot.lane.b32.xlu0 %v792, 61
    %v801 = vpop.permute.xlu0 %800
    %802 = vrot.lane.b32.xlu0 %v793, 61
    %v803 = vpop.permute.xlu0 %802
    %804 = vrot.lane.b32.xlu0 %v794, 61
    %v805 = vpop.permute.xlu0 %804
    %806 = vrot.lane.b32.xlu0 %v795, 61
    %v807 = vpop.permute.xlu0 %806
    %v808 = vrot.slane %v801, 4
    %v809 = vrot.slane %v803, 4
    %v810 = vrot.slane %v805, 4
    %v811 = vrot.slane %v807, 4
    %v812 = vsel %vm76, %v808, %v809
    %vm813 = vcmask 498688
    %v814 = vsel %vm813, %v801, %v812
    %v815 = vsel %vm813, %v803, %v809
    %v816 = vsel %vm76, %v810, %v811
    %v817 = vsel %vm813, %v805, %v816
    %v818 = vsel %vm813, %v807, %v811
    %823 = vst [vmem:[#allocation2 + $0x420] sm:$0xff] %v814
    %824 = vst [vmem:[#allocation2 + $0x428] sm:$0xf] %v815
    %825 = vst [vmem:[#allocation2 + $0x438] sm:$0xff] %v817
    %826 = vst [vmem:[#allocation2 + $0x440] sm:$0xf] %v818
    %v827 = vld [vmem:[#allocation3] sm:$0xff]
    %v828 = vld [vmem:[#allocation3 + $0x8] sm:$0xff]
    %v829 = vld [vmem:[#allocation3 + $0x14] sm:$0xff]
    %v830 = vld [vmem:[#allocation3 + $0x1c] sm:$0xff]
    %835 = vrot.lane.b32.xlu0 %v827, 60
    %v836 = vpop.permute.xlu0 %835
    %837 = vrot.lane.b32.xlu0 %v828, 60
    %v838 = vpop.permute.xlu0 %837
    %839 = vrot.lane.b32.xlu0 %v829, 60
    %v840 = vpop.permute.xlu0 %839
    %841 = vrot.lane.b32.xlu0 %v830, 60
    %v842 = vpop.permute.xlu0 %841
    %v843 = vrot.slane %v836, 4
    %v844 = vrot.slane %v838, 4
    %v845 = vrot.slane %v840, 4
    %v846 = vrot.slane %v842, 4
    %v847 = vsel %vm76, %v843, %v844
    %vm848 = vcmask 490496
    %v849 = vsel %vm848, %v836, %v847
    %v850 = vsel %vm848, %v838, %v844
    %v851 = vsel %vm76, %v845, %v846
    %v852 = vsel %vm848, %v840, %v851
    %v853 = vsel %vm848, %v842, %v846
    %858 = vst [vmem:[#allocation2 + $0x450] sm:$0xff] %v849
    %859 = vst [vmem:[#allocation2 + $0x458] sm:$0xf] %v850
    %860 = vst [vmem:[#allocation2 + $0x468] sm:$0xff] %v852
    %861 = vst [vmem:[#allocation2 + $0x470] sm:$0xf] %v853
    %v862 = vld [vmem:[#allocation3] sm:$0xff]
    %v863 = vld [vmem:[#allocation3 + $0x8] sm:$0xff]
    %v864 = vld [vmem:[#allocation3 + $0x14] sm:$0xff]
    %v865 = vld [vmem:[#allocation3 + $0x1c] sm:$0xff]
    %870 = vrot.lane.b32.xlu0 %v862, 59
    %v871 = vpop.permute.xlu0 %870
    %872 = vrot.lane.b32.xlu0 %v863, 59
    %v873 = vpop.permute.xlu0 %872
    %874 = vrot.lane.b32.xlu0 %v864, 59
    %v875 = vpop.permute.xlu0 %874
    %876 = vrot.lane.b32.xlu0 %v865, 59
    %v877 = vpop.permute.xlu0 %876
    %v878 = vrot.slane %v871, 4
    %v879 = vrot.slane %v873, 4
    %v880 = vrot.slane %v875, 4
    %v881 = vrot.slane %v877, 4
    %v882 = vsel %vm76, %v878, %v879
    %vm883 = vcmask 482304
    %v884 = vsel %vm883, %v871, %v882
    %v885 = vsel %vm883, %v873, %v879
    %v886 = vsel %vm76, %v880, %v881
    %v887 = vsel %vm883, %v875, %v886
    %v888 = vsel %vm883, %v877, %v881
    %893 = vst [vmem:[#allocation2 + $0x480] sm:$0xff] %v884
    %894 = vst [vmem:[#allocation2 + $0x488] sm:$0xf] %v885
    %895 = vst [vmem:[#allocation2 + $0x498] sm:$0xff] %v887
    %896 = vst [vmem:[#allocation2 + $0x4a0] sm:$0xf] %v888
    %v897 = vld [vmem:[#allocation3] sm:$0xff]
    %v898 = vld [vmem:[#allocation3 + $0x8] sm:$0xff]
    %v899 = vld [vmem:[#allocation3 + $0x14] sm:$0xff]
    %v900 = vld [vmem:[#allocation3 + $0x1c] sm:$0xff]
    %905 = vrot.lane.b32.xlu0 %v897, 58
    %v906 = vpop.permute.xlu0 %905
    %907 = vrot.lane.b32.xlu0 %v898, 58
    %v908 = vpop.permute.xlu0 %907
    %909 = vrot.lane.b32.xlu0 %v899, 58
    %v910 = vpop.permute.xlu0 %909
    %911 = vrot.lane.b32.xlu0 %v900, 58
    %v912 = vpop.permute.xlu0 %911
    %v913 = vrot.slane %v906, 4
    %v914 = vrot.slane %v908, 4
    %v915 = vrot.slane %v910, 4
    %v916 = vrot.slane %v912, 4
    %v917 = vsel %vm76, %v913, %v914
    %vm918 = vcmask 474112
    %v919 = vsel %vm918, %v906, %v917
    %v920 = vsel %vm918, %v908, %v914
    %v921 = vsel %vm76, %v915, %v916
    %v922 = vsel %vm918, %v910, %v921
    %v923 = vsel %vm918, %v912, %v916
    %928 = vst [vmem:[#allocation2 + $0x4b0] sm:$0xff] %v919
    %929 = vst [vmem:[#allocation2 + $0x4b8] sm:$0xf] %v920
    %930 = vst [vmem:[#allocation2 + $0x4c8] sm:$0xff] %v922
    %931 = vst [vmem:[#allocation2 + $0x4d0] sm:$0xf] %v923
    %v932 = vld [vmem:[#allocation3] sm:$0xff]
    %v933 = vld [vmem:[#allocation3 + $0x8] sm:$0xff]
    %v934 = vld [vmem:[#allocation3 + $0x14] sm:$0xff]
    %v935 = vld [vmem:[#allocation3 + $0x1c] sm:$0xff]
    %940 = vrot.lane.b32.xlu0 %v932, 57
    %v941 = vpop.permute.xlu0 %940
    %942 = vrot.lane.b32.xlu0 %v933, 57
    %v943 = vpop.permute.xlu0 %942
    %944 = vrot.lane.b32.xlu0 %v934, 57
    %v945 = vpop.permute.xlu0 %944
    %946 = vrot.lane.b32.xlu0 %v935, 57
    %v947 = vpop.permute.xlu0 %946
    %v948 = vrot.slane %v941, 4
    %v949 = vrot.slane %v943, 4
    %v950 = vrot.slane %v945, 4
    %v951 = vrot.slane %v947, 4
    %v952 = vsel %vm76, %v948, %v949
    %vm953 = vcmask 465920
    %v954 = vsel %vm953, %v941, %v952
    %v955 = vsel %vm953, %v943, %v949
    %v956 = vsel %vm76, %v950, %v951
    %v957 = vsel %vm953, %v945, %v956
    %v958 = vsel %vm953, %v947, %v951
    %963 = vst [vmem:[#allocation2 + $0x4e0] sm:$0xff] %v954
    %964 = vst [vmem:[#allocation2 + $0x4e8] sm:$0xf] %v955
    %965 = vst [vmem:[#allocation2 + $0x4f8] sm:$0xff] %v957
    %966 = vst [vmem:[#allocation2 + $0x500] sm:$0xf] %v958
    %v967 = vld [vmem:[#allocation3] sm:$0xff]
    %v968 = vld [vmem:[#allocation3 + $0x8] sm:$0xff]
    %v969 = vld [vmem:[#allocation3 + $0x14] sm:$0xff]
    %v970 = vld [vmem:[#allocation3 + $0x1c] sm:$0xff]
    %975 = vrot.lane.b32.xlu0 %v967, 56
    %v976 = vpop.permute.xlu0 %975
    %977 = vrot.lane.b32.xlu0 %v968, 56
    %v978 = vpop.permute.xlu0 %977
    %979 = vrot.lane.b32.xlu0 %v969, 56
    %v980 = vpop.permute.xlu0 %979
    %981 = vrot.lane.b32.xlu0 %v970, 56
    %v982 = vpop.permute.xlu0 %981
    %v983 = vrot.slane %v976, 4
    %v984 = vrot.slane %v978, 4
    %v985 = vrot.slane %v980, 4
    %v986 = vrot.slane %v982, 4
    %v987 = vsel %vm76, %v983, %v984
    %vm988 = vcmask 457728
    %v989 = vsel %vm988, %v976, %v987
    %v990 = vsel %vm988, %v978, %v984
    %v991 = vsel %vm76, %v985, %v986
    %v992 = vsel %vm988, %v980, %v991
    %v993 = vsel %vm988, %v982, %v986
    %998 = vst [vmem:[#allocation2 + $0x510] sm:$0xff] %v989
    %999 = vst [vmem:[#allocation2 + $0x518] sm:$0xf] %v990
    %1000 = vst [vmem:[#allocation2 + $0x528] sm:$0xff] %v992
    %1001 = vst [vmem:[#allocation2 + $0x530] sm:$0xf] %v993
    %v1002 = vld [vmem:[#allocation3] sm:$0xff]
    %v1003 = vld [vmem:[#allocation3 + $0x8] sm:$0xff]
    %v1004 = vld [vmem:[#allocation3 + $0x14] sm:$0xff]
    %v1005 = vld [vmem:[#allocation3 + $0x1c] sm:$0xff]
    %1010 = vrot.lane.b32.xlu0 %v1002, 40
    %v1011 = vpop.permute.xlu0 %1010
    %1012 = vrot.lane.b32.xlu0 %v1003, 40
    %v1013 = vpop.permute.xlu0 %1012
    %1014 = vrot.lane.b32.xlu0 %v1004, 40
    %v1015 = vpop.permute.xlu0 %1014
    %1016 = vrot.lane.b32.xlu0 %v1005, 40
    %v1017 = vpop.permute.xlu0 %1016
    %v1018 = vrot.slane %v1011, 4
    %v1019 = vrot.slane %v1013, 4
    %v1020 = vrot.slane %v1015, 4
    %v1021 = vrot.slane %v1017, 4
    %v1022 = vsel %vm76, %v1018, %v1019
    %vm1023 = vcmask 326656
    %v1024 = vsel %vm1023, %v1011, %v1022
    %v1025 = vsel %vm1023, %v1013, %v1019
    %v1026 = vsel %vm76, %v1020, %v1021
    %v1027 = vsel %vm1023, %v1015, %v1026
    %v1028 = vsel %vm1023, %v1017, %v1021
    %1033 = vst [vmem:[#allocation2 + $0x540] sm:$0xff] %v1024
    %1034 = vst [vmem:[#allocation2 + $0x548] sm:$0xf] %v1025
    %1035 = vst [vmem:[#allocation2 + $0x558] sm:$0xff] %v1027
    %1036 = vst [vmem:[#allocation2 + $0x560] sm:$0xf] %v1028
    %v1037 = vld [vmem:[#allocation3] sm:$0xff]
    %v1038 = vld [vmem:[#allocation3 + $0x8] sm:$0xff]
    %v1039 = vld [vmem:[#allocation3 + $0x14] sm:$0xff]
    %v1040 = vld [vmem:[#allocation3 + $0x1c] sm:$0xff]
    %1045 = vrot.lane.b32.xlu0 %v1037, 39
    %v1046 = vpop.permute.xlu0 %1045
    %1047 = vrot.lane.b32.xlu0 %v1038, 39
    %v1048 = vpop.permute.xlu0 %1047
    %1049 = vrot.lane.b32.xlu0 %v1039, 39
    %v1050 = vpop.permute.xlu0 %1049
    %1051 = vrot.lane.b32.xlu0 %v1040, 39
    %v1052 = vpop.permute.xlu0 %1051
    %v1053 = vrot.slane %v1046, 4
    %v1054 = vrot.slane %v1048, 4
    %v1055 = vrot.slane %v1050, 4
    %v1056 = vrot.slane %v1052, 4
    %v1057 = vsel %vm76, %v1053, %v1054
    %vm1058 = vcmask 318464
    %v1059 = vsel %vm1058, %v1046, %v1057
    %v1060 = vsel %vm1058, %v1048, %v1054
    %v1061 = vsel %vm76, %v1055, %v1056
    %v1062 = vsel %vm1058, %v1050, %v1061
    %v1063 = vsel %vm1058, %v1052, %v1056
    %1068 = vst [vmem:[#allocation2 + $0x570] sm:$0xff] %v1059
    %1069 = vst [vmem:[#allocation2 + $0x578] sm:$0xf] %v1060
    %1070 = vst [vmem:[#allocation2 + $0x588] sm:$0xff] %v1062
    %1071 = vst [vmem:[#allocation2 + $0x590] sm:$0xf] %v1063
    %v1072 = vld [vmem:[#allocation3] sm:$0xff]
    %v1073 = vld [vmem:[#allocation3 + $0x8] sm:$0xff]
    %v1074 = vld [vmem:[#allocation3 + $0x14] sm:$0xff]
    %v1075 = vld [vmem:[#allocation3 + $0x1c] sm:$0xff]
    %1080 = vrot.lane.b32.xlu0 %v1072, 38
    %v1081 = vpop.permute.xlu0 %1080
    %1082 = vrot.lane.b32.xlu0 %v1073, 38
    %v1083 = vpop.permute.xlu0 %1082
    %1084 = vrot.lane.b32.xlu0 %v1074, 38
    %v1085 = vpop.permute.xlu0 %1084
    %1086 = vrot.lane.b32.xlu0 %v1075, 38
    %v1087 = vpop.permute.xlu0 %1086
    %v1088 = vrot.slane %v1081, 4
    %v1089 = vrot.slane %v1083, 4
    %v1090 = vrot.slane %v1085, 4
    %v1091 = vrot.slane %v1087, 4
    %v1092 = vsel %vm76, %v1088, %v1089
    %vm1093 = vcmask 310272
    %v1094 = vsel %vm1093, %v1081, %v1092
    %v1095 = vsel %vm1093, %v1083, %v1089
    %v1096 = vsel %vm76, %v1090, %v1091
    %v1097 = vsel %vm1093, %v1085, %v1096
    %v1098 = vsel %vm1093, %v1087, %v1091
    %1103 = vst [vmem:[#allocation2 + $0x5a0] sm:$0xff] %v1094
    %1104 = vst [vmem:[#allocation2 + $0x5a8] sm:$0xf] %v1095
    %1105 = vst [vmem:[#allocation2 + $0x5b8] sm:$0xff] %v1097
    %1106 = vst [vmem:[#allocation2 + $0x5c0] sm:$0xf] %v1098
    %v1107 = vld [vmem:[#allocation3] sm:$0xff]
    %v1108 = vld [vmem:[#allocation3 + $0x8] sm:$0xff]
    %v1109 = vld [vmem:[#allocation3 + $0x14] sm:$0xff]
    %v1110 = vld [vmem:[#allocation3 + $0x1c] sm:$0xff]
    %1115 = vrot.lane.b32.xlu0 %v1107, 37
    %v1116 = vpop.permute.xlu0 %1115
    %1117 = vrot.lane.b32.xlu0 %v1108, 37
    %v1118 = vpop.permute.xlu0 %1117
    %1119 = vrot.lane.b32.xlu0 %v1109, 37
    %v1120 = vpop.permute.xlu0 %1119
    %1121 = vrot.lane.b32.xlu0 %v1110, 37
    %v1122 = vpop.permute.xlu0 %1121
    %v1123 = vrot.slane %v1116, 4
    %v1124 = vrot.slane %v1118, 4
    %v1125 = vrot.slane %v1120, 4
    %v1126 = vrot.slane %v1122, 4
    %v1127 = vsel %vm76, %v1123, %v1124
    %vm1128 = vcmask 302080
    %v1129 = vsel %vm1128, %v1116, %v1127
    %v1130 = vsel %vm1128, %v1118, %v1124
    %v1131 = vsel %vm76, %v1125, %v1126
    %v1132 = vsel %vm1128, %v1120, %v1131
    %v1133 = vsel %vm1128, %v1122, %v1126
    %1138 = vst [vmem:[#allocation2 + $0x5d0] sm:$0xff] %v1129
    %1139 = vst [vmem:[#allocation2 + $0x5d8] sm:$0xf] %v1130
    %1140 = vst [vmem:[#allocation2 + $0x5e8] sm:$0xff] %v1132
    %1141 = vst [vmem:[#allocation2 + $0x5f0] sm:$0xf] %v1133
    %v1142 = vld [vmem:[#allocation3] sm:$0xff]
    %v1143 = vld [vmem:[#allocation3 + $0x8] sm:$0xff]
    %v1144 = vld [vmem:[#allocation3 + $0x14] sm:$0xff]
    %v1145 = vld [vmem:[#allocation3 + $0x1c] sm:$0xff]
    %1150 = vrot.lane.b32.xlu0 %v1142, 36
    %v1151 = vpop.permute.xlu0 %1150
    %1152 = vrot.lane.b32.xlu0 %v1143, 36
    %v1153 = vpop.permute.xlu0 %1152
    %1154 = vrot.lane.b32.xlu0 %v1144, 36
    %v1155 = vpop.permute.xlu0 %1154
    %1156 = vrot.lane.b32.xlu0 %v1145, 36
    %v1157 = vpop.permute.xlu0 %1156
    %v1158 = vrot.slane %v1151, 4
    %v1159 = vrot.slane %v1153, 4
    %v1160 = vrot.slane %v1155, 4
    %v1161 = vrot.slane %v1157, 4
    %v1162 = vsel %vm76, %v1158, %v1159
    %vm1163 = vcmask 293888
    %v1164 = vsel %vm1163, %v1151, %v1162
    %v1165 = vsel %vm1163, %v1153, %v1159
    %v1166 = vsel %vm76, %v1160, %v1161
    %v1167 = vsel %vm1163, %v1155, %v1166
    %v1168 = vsel %vm1163, %v1157, %v1161
    %1173 = vst [vmem:[#allocation2 + $0x600] sm:$0xff] %v1164
    %1174 = vst [vmem:[#allocation2 + $0x608] sm:$0xf] %v1165
    %1175 = vst [vmem:[#allocation2 + $0x618] sm:$0xff] %v1167
    %1176 = vst [vmem:[#allocation2 + $0x620] sm:$0xf] %v1168
    %v1177 = vld [vmem:[#allocation3] sm:$0xff]
    %v1178 = vld [vmem:[#allocation3 + $0x8] sm:$0xff]
    %v1179 = vld [vmem:[#allocation3 + $0x14] sm:$0xff]
    %v1180 = vld [vmem:[#allocation3 + $0x1c] sm:$0xff]
    %1185 = vrot.lane.b32.xlu0 %v1177, 35
    %v1186 = vpop.permute.xlu0 %1185
    %1187 = vrot.lane.b32.xlu0 %v1178, 35
    %v1188 = vpop.permute.xlu0 %1187
    %1189 = vrot.lane.b32.xlu0 %v1179, 35
    %v1190 = vpop.permute.xlu0 %1189
    %1191 = vrot.lane.b32.xlu0 %v1180, 35
    %v1192 = vpop.permute.xlu0 %1191
    %v1193 = vrot.slane %v1186, 4
    %v1194 = vrot.slane %v1188, 4
    %v1195 = vrot.slane %v1190, 4
    %v1196 = vrot.slane %v1192, 4
    %v1197 = vsel %vm76, %v1193, %v1194
    %vm1198 = vcmask 285696
    %v1199 = vsel %vm1198, %v1186, %v1197
    %v1200 = vsel %vm1198, %v1188, %v1194
    %v1201 = vsel %vm76, %v1195, %v1196
    %v1202 = vsel %vm1198, %v1190, %v1201
    %v1203 = vsel %vm1198, %v1192, %v1196
    %1208 = vst [vmem:[#allocation2 + $0x630] sm:$0xff] %v1199
    %1209 = vst [vmem:[#allocation2 + $0x638] sm:$0xf] %v1200
    %1210 = vst [vmem:[#allocation2 + $0x648] sm:$0xff] %v1202
    %1211 = vst [vmem:[#allocation2 + $0x650] sm:$0xf] %v1203
    %v1212 = vld [vmem:[#allocation3] sm:$0xff]
    %v1213 = vld [vmem:[#allocation3 + $0x8] sm:$0xff]
    %v1214 = vld [vmem:[#allocation3 + $0x14] sm:$0xff]
    %v1215 = vld [vmem:[#allocation3 + $0x1c] sm:$0xff]
    %1220 = vrot.lane.b32.xlu0 %v1212, 34
    %v1221 = vpop.permute.xlu0 %1220
    %1222 = vrot.lane.b32.xlu0 %v1213, 34
    %v1223 = vpop.permute.xlu0 %1222
    %1224 = vrot.lane.b32.xlu0 %v1214, 34
    %v1225 = vpop.permute.xlu0 %1224
    %1226 = vrot.lane.b32.xlu0 %v1215, 34
    %v1227 = vpop.permute.xlu0 %1226
    %v1228 = vrot.slane %v1221, 4
    %v1229 = vrot.slane %v1223, 4
    %v1230 = vrot.slane %v1225, 4
    %v1231 = vrot.slane %v1227, 4
    %v1232 = vsel %vm76, %v1228, %v1229
    %vm1233 = vcmask 277504
    %v1234 = vsel %vm1233, %v1221, %v1232
    %v1235 = vsel %vm1233, %v1223, %v1229
    %v1236 = vsel %vm76, %v1230, %v1231
    %v1237 = vsel %vm1233, %v1225, %v1236
    %v1238 = vsel %vm1233, %v1227, %v1231
    %1243 = vst [vmem:[#allocation2 + $0x660] sm:$0xff] %v1234
    %1244 = vst [vmem:[#allocation2 + $0x668] sm:$0xf] %v1235
    %1245 = vst [vmem:[#allocation2 + $0x678] sm:$0xff] %v1237
    %1246 = vst [vmem:[#allocation2 + $0x680] sm:$0xf] %v1238
    %v1247 = vld [vmem:[#allocation3] sm:$0xff]
    %v1248 = vld [vmem:[#allocation3 + $0x8] sm:$0xff]
    %v1249 = vld [vmem:[#allocation3 + $0x14] sm:$0xff]
    %v1250 = vld [vmem:[#allocation3 + $0x1c] sm:$0xff]
    %1255 = vrot.lane.b32.xlu0 %v1247, 18
    %v1256 = vpop.permute.xlu0 %1255
    %1257 = vrot.lane.b32.xlu0 %v1248, 18
    %v1258 = vpop.permute.xlu0 %1257
    %1259 = vrot.lane.b32.xlu0 %v1249, 18
    %v1260 = vpop.permute.xlu0 %1259
    %1261 = vrot.lane.b32.xlu0 %v1250, 18
    %v1262 = vpop.permute.xlu0 %1261
    %v1263 = vrot.slane %v1256, 4
    %v1264 = vrot.slane %v1258, 4
    %v1265 = vrot.slane %v1260, 4
    %v1266 = vrot.slane %v1262, 4
    %v1267 = vsel %vm76, %v1263, %v1264
    %vm1268 = vcmask 146432
    %v1269 = vsel %vm1268, %v1256, %v1267
    %v1270 = vsel %vm1268, %v1258, %v1264
    %v1271 = vsel %vm76, %v1265, %v1266
    %v1272 = vsel %vm1268, %v1260, %v1271
    %v1273 = vsel %vm1268, %v1262, %v1266
    %1278 = vst [vmem:[#allocation2 + $0x690] sm:$0xff] %v1269
    %1279 = vst [vmem:[#allocation2 + $0x698] sm:$0xf] %v1270
    %1280 = vst [vmem:[#allocation2 + $0x6a8] sm:$0xff] %v1272
    %1281 = vst [vmem:[#allocation2 + $0x6b0] sm:$0xf] %v1273
    %v1282 = vld [vmem:[#allocation3] sm:$0xff]
    %v1283 = vld [vmem:[#allocation3 + $0x8] sm:$0xff]
    %v1284 = vld [vmem:[#allocation3 + $0x14] sm:$0xff]
    %v1285 = vld [vmem:[#allocation3 + $0x1c] sm:$0xff]
    %1290 = vrot.lane.b32.xlu0 %v1282, 17
    %v1291 = vpop.permute.xlu0 %1290
    %1292 = vrot.lane.b32.xlu0 %v1283, 17
    %v1293 = vpop.permute.xlu0 %1292
    %1294 = vrot.lane.b32.xlu0 %v1284, 17
    %v1295 = vpop.permute.xlu0 %1294
    %1296 = vrot.lane.b32.xlu0 %v1285, 17
    %v1297 = vpop.permute.xlu0 %1296
    %v1298 = vrot.slane %v1291, 4
    %v1299 = vrot.slane %v1293, 4
    %v1300 = vrot.slane %v1295, 4
    %v1301 = vrot.slane %v1297, 4
    %v1302 = vsel %vm76, %v1298, %v1299
    %vm1303 = vcmask 138240
    %v1304 = vsel %vm1303, %v1291, %v1302
    %v1305 = vsel %vm1303, %v1293, %v1299
    %v1306 = vsel %vm76, %v1300, %v1301
    %v1307 = vsel %vm1303, %v1295, %v1306
    %v1308 = vsel %vm1303, %v1297, %v1301
    %1313 = vst [vmem:[#allocation2 + $0x6c0] sm:$0xff] %v1304
    %1314 = vst [vmem:[#allocation2 + $0x6c8] sm:$0xf] %v1305
    %1315 = vst [vmem:[#allocation2 + $0x6d8] sm:$0xff] %v1307
    %1316 = vst [vmem:[#allocation2 + $0x6e0] sm:$0xf] %v1308
    %v1317 = vld [vmem:[#allocation3] sm:$0xff]
    %v1318 = vld [vmem:[#allocation3 + $0x8] sm:$0xff]
    %v1319 = vld [vmem:[#allocation3 + $0x14] sm:$0xff]
    %v1320 = vld [vmem:[#allocation3 + $0x1c] sm:$0xff]
    %1325 = vrot.lane.b32.xlu0 %v1317, 16
    %v1326 = vpop.permute.xlu0 %1325
    %1327 = vrot.lane.b32.xlu0 %v1318, 16
    %v1328 = vpop.permute.xlu0 %1327
    %1329 = vrot.lane.b32.xlu0 %v1319, 16
    %v1330 = vpop.permute.xlu0 %1329
    %1331 = vrot.lane.b32.xlu0 %v1320, 16
    %v1332 = vpop.permute.xlu0 %1331
    %v1333 = vrot.slane %v1326, 4
    %v1334 = vrot.slane %v1328, 4
    %v1335 = vrot.slane %v1330, 4
    %v1336 = vrot.slane %v1332, 4
    %v1337 = vsel %vm76, %v1333, %v1334
    %vm1338 = vcmask 130048
    %v1339 = vsel %vm1338, %v1326, %v1337
    %v1340 = vsel %vm1338, %v1328, %v1334
    %v1341 = vsel %vm76, %v1335, %v1336
    %v1342 = vsel %vm1338, %v1330, %v1341
    %v1343 = vsel %vm1338, %v1332, %v1336
    %1348 = vst [vmem:[#allocation2 + $0x6f0] sm:$0xff] %v1339
    %1349 = vst [vmem:[#allocation2 + $0x6f8] sm:$0xf] %v1340
    %1350 = vst [vmem:[#allocation2 + $0x708] sm:$0xff] %v1342
    %1351 = vst [vmem:[#allocation2 + $0x710] sm:$0xf] %v1343
    %v1352 = vld [vmem:[#allocation3] sm:$0xff]
    %v1353 = vld [vmem:[#allocation3 + $0x8] sm:$0xff]
    %v1354 = vld [vmem:[#allocation3 + $0x14] sm:$0xff]
    %v1355 = vld [vmem:[#allocation3 + $0x1c] sm:$0xff]
    %1360 = vrot.lane.b32.xlu0 %v1352, 15
    %v1361 = vpop.permute.xlu0 %1360
    %1362 = vrot.lane.b32.xlu0 %v1353, 15
    %v1363 = vpop.permute.xlu0 %1362
    %1364 = vrot.lane.b32.xlu0 %v1354, 15
    %v1365 = vpop.permute.xlu0 %1364
    %1366 = vrot.lane.b32.xlu0 %v1355, 15
    %v1367 = vpop.permute.xlu0 %1366
    %v1368 = vrot.slane %v1361, 4
    %v1369 = vrot.slane %v1363, 4
    %v1370 = vrot.slane %v1365, 4
    %v1371 = vrot.slane %v1367, 4
    %v1372 = vsel %vm76, %v1368, %v1369
    %vm1373 = vcmask 121856
    %v1374 = vsel %vm1373, %v1361, %v1372
    %v1375 = vsel %vm1373, %v1363, %v1369
    %v1376 = vsel %vm76, %v1370, %v1371
    %v1377 = vsel %vm1373, %v1365, %v1376
    %v1378 = vsel %vm1373, %v1367, %v1371
    %1383 = vst [vmem:[#allocation2 + $0x720] sm:$0xff] %v1374
    %1384 = vst [vmem:[#allocation2 + $0x728] sm:$0xf] %v1375
    %1385 = vst [vmem:[#allocation2 + $0x738] sm:$0xff] %v1377
    %1386 = vst [vmem:[#allocation2 + $0x740] sm:$0xf] %v1378
    %v1387 = vld [vmem:[#allocation3] sm:$0xff]
    %v1388 = vld [vmem:[#allocation3 + $0x8] sm:$0xff]
    %v1389 = vld [vmem:[#allocation3 + $0x14] sm:$0xff]
    %v1390 = vld [vmem:[#allocation3 + $0x1c] sm:$0xff]
    %1395 = vrot.lane.b32.xlu0 %v1387, 14
    %v1396 = vpop.permute.xlu0 %1395
    %1397 = vrot.lane.b32.xlu0 %v1388, 14
    %v1398 = vpop.permute.xlu0 %1397
    %1399 = vrot.lane.b32.xlu0 %v1389, 14
    %v1400 = vpop.permute.xlu0 %1399
    %1401 = vrot.lane.b32.xlu0 %v1390, 14
    %v1402 = vpop.permute.xlu0 %1401
    %v1403 = vrot.slane %v1396, 4
    %v1404 = vrot.slane %v1398, 4
    %v1405 = vrot.slane %v1400, 4
    %v1406 = vrot.slane %v1402, 4
    %v1407 = vsel %vm76, %v1403, %v1404
    %vm1408 = vcmask 113664
    %v1409 = vsel %vm1408, %v1396, %v1407
    %v1410 = vsel %vm1408, %v1398, %v1404
    %v1411 = vsel %vm76, %v1405, %v1406
    %v1412 = vsel %vm1408, %v1400, %v1411
    %v1413 = vsel %vm1408, %v1402, %v1406
    %1418 = vst [vmem:[#allocation2 + $0x750] sm:$0xff] %v1409
    %1419 = vst [vmem:[#allocation2 + $0x758] sm:$0xf] %v1410
    %1420 = vst [vmem:[#allocation2 + $0x768] sm:$0xff] %v1412
    %1421 = vst [vmem:[#allocation2 + $0x770] sm:$0xf] %v1413
    %v1422 = vld [vmem:[#allocation3] sm:$0xff]
    %v1423 = vld [vmem:[#allocation3 + $0x8] sm:$0xff]
    %v1424 = vld [vmem:[#allocation3 + $0x14] sm:$0xff]
    %v1425 = vld [vmem:[#allocation3 + $0x1c] sm:$0xff]
    %1430 = vrot.lane.b32.xlu0 %v1422, 13
    %v1431 = vpop.permute.xlu0 %1430
    %1432 = vrot.lane.b32.xlu0 %v1423, 13
    %v1433 = vpop.permute.xlu0 %1432
    %1434 = vrot.lane.b32.xlu0 %v1424, 13
    %v1435 = vpop.permute.xlu0 %1434
    %1436 = vrot.lane.b32.xlu0 %v1425, 13
    %v1437 = vpop.permute.xlu0 %1436
    %v1438 = vrot.slane %v1431, 4
    %v1439 = vrot.slane %v1433, 4
    %v1440 = vrot.slane %v1435, 4
    %v1441 = vrot.slane %v1437, 4
    %v1442 = vsel %vm76, %v1438, %v1439
    %vm1443 = vcmask 105472
    %v1444 = vsel %vm1443, %v1431, %v1442
    %v1445 = vsel %vm1443, %v1433, %v1439
    %v1446 = vsel %vm76, %v1440, %v1441
    %v1447 = vsel %vm1443, %v1435, %v1446
    %v1448 = vsel %vm1443, %v1437, %v1441
    %1453 = vst [vmem:[#allocation2 + $0x780] sm:$0xff] %v1444
    %1454 = vst [vmem:[#allocation2 + $0x788] sm:$0xf] %v1445
    %1455 = vst [vmem:[#allocation2 + $0x798] sm:$0xff] %v1447
    %1456 = vst [vmem:[#allocation2 + $0x7a0] sm:$0xf] %v1448
    %v1457 = vld [vmem:[#allocation3] sm:$0xff]
    %v1458 = vld [vmem:[#allocation3 + $0x8] sm:$0xff]
    %v1459 = vld [vmem:[#allocation3 + $0x14] sm:$0xff]
    %v1460 = vld [vmem:[#allocation3 + $0x1c] sm:$0xff]
    %1465 = vrot.lane.b32.xlu0 %v1457, 12
    %v1466 = vpop.permute.xlu0 %1465
    %1467 = vrot.lane.b32.xlu0 %v1458, 12
    %v1468 = vpop.permute.xlu0 %1467
    %1469 = vrot.lane.b32.xlu0 %v1459, 12
    %v1470 = vpop.permute.xlu0 %1469
    %1471 = vrot.lane.b32.xlu0 %v1460, 12
    %v1472 = vpop.permute.xlu0 %1471
    %v1473 = vrot.slane %v1466, 4
    %v1474 = vrot.slane %v1468, 4
    %v1475 = vrot.slane %v1470, 4
    %v1476 = vrot.slane %v1472, 4
    %v1477 = vsel %vm76, %v1473, %v1474
    %vm1478 = vcmask 97280
    %v1479 = vsel %vm1478, %v1466, %v1477
    %v1480 = vsel %vm1478, %v1468, %v1474
    %v1481 = vsel %vm76, %v1475, %v1476
    %v1482 = vsel %vm1478, %v1470, %v1481
    %v1483 = vsel %vm1478, %v1472, %v1476
    %1488 = vst [vmem:[#allocation2 + $0x7b0] sm:$0xff] %v1479
    %1489 = vst [vmem:[#allocation2 + $0x7b8] sm:$0xf] %v1480
    %1490 = vst [vmem:[#allocation2 + $0x7c8] sm:$0xff] %v1482
    %1491 = vst [vmem:[#allocation2 + $0x7d0] sm:$0xf] %v1483
    %v1492 = vld [vmem:[#allocation3 + $0x4] sm:$0xff]
    %v1493 = vld [vmem:[#allocation3 + $0xc] sm:$0xff]
    %v1494 = vld [vmem:[#allocation3 + $0x18] sm:$0xff]
    %v1495 = vld [vmem:[#allocation3 + $0x20] sm:$0xff]
    %1500 = vrot.lane.b32.xlu0 %v1492, 124
    %v1501 = vpop.permute.xlu0 %1500
    %1502 = vrot.lane.b32.xlu0 %v1493, 124
    %v1503 = vpop.permute.xlu0 %1502
    %1504 = vrot.lane.b32.xlu0 %v1494, 124
    %v1505 = vpop.permute.xlu0 %1504
    %1506 = vrot.lane.b32.xlu0 %v1495, 124
    %v1507 = vpop.permute.xlu0 %1506
    %v1508 = vrot.slane %v1501, 4
    %v1509 = vrot.slane %v1503, 4
    %v1510 = vrot.slane %v1505, 4
    %v1511 = vrot.slane %v1507, 4
    %v1512 = vsel %vm76, %v1508, %v1509
    %v1513 = vsel %vm183, %v1501, %v1512
    %v1514 = vsel %vm183, %v1503, %v1509
    %v1515 = vsel %vm76, %v1510, %v1511
    %v1516 = vsel %vm183, %v1505, %v1515
    %v1517 = vsel %vm183, %v1507, %v1511
    %1522 = vst [vmem:[#allocation2 + $0x7e0] sm:$0xff] %v1513
    %1523 = vst [vmem:[#allocation2 + $0x7e8] sm:$0xf] %v1514
    %1524 = vst [vmem:[#allocation2 + $0x7f8] sm:$0xff] %v1516
    %1525 = vst [vmem:[#allocation2 + $0x800] sm:$0xf] %v1517
    %v1526 = vld [vmem:[#allocation3 + $0x4] sm:$0xff]
    %v1527 = vld [vmem:[#allocation3 + $0xc] sm:$0xff]
    %v1528 = vld [vmem:[#allocation3 + $0x18] sm:$0xff]
    %v1529 = vld [vmem:[#allocation3 + $0x20] sm:$0xff]
    %1534 = vrot.lane.b32.xlu0 %v1526, 123
    %v1535 = vpop.permute.xlu0 %1534
    %1536 = vrot.lane.b32.xlu0 %v1527, 123
    %v1537 = vpop.permute.xlu0 %1536
    %1538 = vrot.lane.b32.xlu0 %v1528, 123
    %v1539 = vpop.permute.xlu0 %1538
    %1540 = vrot.lane.b32.xlu0 %v1529, 123
    %v1541 = vpop.permute.xlu0 %1540
    %v1542 = vrot.slane %v1535, 4
    %v1543 = vrot.slane %v1537, 4
    %v1544 = vrot.slane %v1539, 4
    %v1545 = vrot.slane %v1541, 4
    %v1546 = vsel %vm76, %v1542, %v1543
    %v1547 = vsel %vm218, %v1535, %v1546
    %v1548 = vsel %vm218, %v1537, %v1543
    %v1549 = vsel %vm76, %v1544, %v1545
    %v1550 = vsel %vm218, %v1539, %v1549
    %v1551 = vsel %vm218, %v1541, %v1545
    %1556 = vst [vmem:[#allocation2 + $0x810] sm:$0xff] %v1547
    %1557 = vst [vmem:[#allocation2 + $0x818] sm:$0xf] %v1548
    %1558 = vst [vmem:[#allocation2 + $0x828] sm:$0xff] %v1550
    %1559 = vst [vmem:[#allocation2 + $0x830] sm:$0xf] %v1551
    %v1560 = vld [vmem:[#allocation3 + $0x4] sm:$0xff]
    %v1561 = vld [vmem:[#allocation3 + $0xc] sm:$0xff]
    %v1562 = vld [vmem:[#allocation3 + $0x18] sm:$0xff]
    %v1563 = vld [vmem:[#allocation3 + $0x20] sm:$0xff]
    %1568 = vrot.lane.b32.xlu0 %v1560, 122
    %v1569 = vpop.permute.xlu0 %1568
    %1570 = vrot.lane.b32.xlu0 %v1561, 122
    %v1571 = vpop.permute.xlu0 %1570
    %1572 = vrot.lane.b32.xlu0 %v1562, 122
    %v1573 = vpop.permute.xlu0 %1572
    %1574 = vrot.lane.b32.xlu0 %v1563, 122
    %v1575 = vpop.permute.xlu0 %1574
    %v1576 = vrot.slane %v1569, 4
    %v1577 = vrot.slane %v1571, 4
    %v1578 = vrot.slane %v1573, 4
    %v1579 = vrot.slane %v1575, 4
    %v1580 = vsel %vm76, %v1576, %v1577
    %v1581 = vsel %vm253, %v1569, %v1580
    %v1582 = vsel %vm253, %v1571, %v1577
    %v1583 = vsel %vm76, %v1578, %v1579
    %v1584 = vsel %vm253, %v1573, %v1583
    %v1585 = vsel %vm253, %v1575, %v1579
    %1590 = vst [vmem:[#allocation2 + $0x840] sm:$0xff] %v1581
    %1591 = vst [vmem:[#allocation2 + $0x848] sm:$0xf] %v1582
    %1592 = vst [vmem:[#allocation2 + $0x858] sm:$0xff] %v1584
    %1593 = vst [vmem:[#allocation2 + $0x860] sm:$0xf] %v1585
    %v1594 = vld [vmem:[#allocation3 + $0x4] sm:$0xff]
    %v1595 = vld [vmem:[#allocation3 + $0xc] sm:$0xff]
    %v1596 = vld [vmem:[#allocation3 + $0x18] sm:$0xff]
    %v1597 = vld [vmem:[#allocation3 + $0x20] sm:$0xff]
    %1602 = vrot.lane.b32.xlu0 %v1594, 121
    %v1603 = vpop.permute.xlu0 %1602
    %1604 = vrot.lane.b32.xlu0 %v1595, 121
    %v1605 = vpop.permute.xlu0 %1604
    %1606 = vrot.lane.b32.xlu0 %v1596, 121
    %v1607 = vpop.permute.xlu0 %1606
    %1608 = vrot.lane.b32.xlu0 %v1597, 121
    %v1609 = vpop.permute.xlu0 %1608
    %v1610 = vrot.slane %v1603, 4
    %v1611 = vrot.slane %v1605, 4
    %v1612 = vrot.slane %v1607, 4
    %v1613 = vrot.slane %v1609, 4
    %v1614 = vsel %vm76, %v1610, %v1611
    %vm1615 = vcmask 990208
    %v1616 = vsel %vm1615, %v1603, %v1614
    %v1617 = vsel %vm1615, %v1605, %v1611
    %v1618 = vsel %vm76, %v1612, %v1613
    %v1619 = vsel %vm1615, %v1607, %v1618
    %v1620 = vsel %vm1615, %v1609, %v1613
    %1625 = vst [vmem:[#allocation2 + $0x870] sm:$0xff] %v1616
    %1626 = vst [vmem:[#allocation2 + $0x878] sm:$0xf] %v1617
    %1627 = vst [vmem:[#allocation2 + $0x888] sm:$0xff] %v1619
    %1628 = vst [vmem:[#allocation2 + $0x890] sm:$0xf] %v1620
    %v1629 = vld [vmem:[#allocation3 + $0x4] sm:$0xff]
    %v1630 = vld [vmem:[#allocation3 + $0xc] sm:$0xff]
    %v1631 = vld [vmem:[#allocation3 + $0x18] sm:$0xff]
    %v1632 = vld [vmem:[#allocation3 + $0x20] sm:$0xff]
    %1637 = vrot.lane.b32.xlu0 %v1629, 120
    %v1638 = vpop.permute.xlu0 %1637
    %1639 = vrot.lane.b32.xlu0 %v1630, 120
    %v1640 = vpop.permute.xlu0 %1639
    %1641 = vrot.lane.b32.xlu0 %v1631, 120
    %v1642 = vpop.permute.xlu0 %1641
    %1643 = vrot.lane.b32.xlu0 %v1632, 120
    %v1644 = vpop.permute.xlu0 %1643
    %v1645 = vrot.slane %v1638, 4
    %v1646 = vrot.slane %v1640, 4
    %v1647 = vrot.slane %v1642, 4
    %v1648 = vrot.slane %v1644, 4
    %v1649 = vsel %vm76, %v1645, %v1646
    %vm1650 = vcmask 982016
    %v1651 = vsel %vm1650, %v1638, %v1649
    %v1652 = vsel %vm1650, %v1640, %v1646
    %v1653 = vsel %vm76, %v1647, %v1648
    %v1654 = vsel %vm1650, %v1642, %v1653
    %v1655 = vsel %vm1650, %v1644, %v1648
    %1660 = vst [vmem:[#allocation2 + $0x8a0] sm:$0xff] %v1651
    %1661 = vst [vmem:[#allocation2 + $0x8a8] sm:$0xf] %v1652
    %1662 = vst [vmem:[#allocation2 + $0x8b8] sm:$0xff] %v1654
    %1663 = vst [vmem:[#allocation2 + $0x8c0] sm:$0xf] %v1655
    %v1664 = vld [vmem:[#allocation3 + $0x4] sm:$0xff]
    %v1665 = vld [vmem:[#allocation3 + $0xc] sm:$0xff]
    %v1666 = vld [vmem:[#allocation3 + $0x18] sm:$0xff]
    %v1667 = vld [vmem:[#allocation3 + $0x20] sm:$0xff]
    %1672 = vrot.lane.b32.xlu0 %v1664, 119
    %v1673 = vpop.permute.xlu0 %1672
    %1674 = vrot.lane.b32.xlu0 %v1665, 119
    %v1675 = vpop.permute.xlu0 %1674
    %1676 = vrot.lane.b32.xlu0 %v1666, 119
    %v1677 = vpop.permute.xlu0 %1676
    %1678 = vrot.lane.b32.xlu0 %v1667, 119
    %v1679 = vpop.permute.xlu0 %1678
    %v1680 = vrot.slane %v1673, 4
    %v1681 = vrot.slane %v1675, 4
    %v1682 = vrot.slane %v1677, 4
    %v1683 = vrot.slane %v1679, 4
    %v1684 = vsel %vm76, %v1680, %v1681
    %vm1685 = vcmask 973824
    %v1686 = vsel %vm1685, %v1673, %v1684
    %v1687 = vsel %vm1685, %v1675, %v1681
    %v1688 = vsel %vm76, %v1682, %v1683
    %v1689 = vsel %vm1685, %v1677, %v1688
    %v1690 = vsel %vm1685, %v1679, %v1683
    %1695 = vst [vmem:[#allocation2 + $0x8d0] sm:$0xff] %v1686
    %1696 = vst [vmem:[#allocation2 + $0x8d8] sm:$0xf] %v1687
    %1697 = vst [vmem:[#allocation2 + $0x8e8] sm:$0xff] %v1689
    %1698 = vst [vmem:[#allocation2 + $0x8f0] sm:$0xf] %v1690
    %v1699 = vld [vmem:[#allocation3 + $0x4] sm:$0xff]
    %v1700 = vld [vmem:[#allocation3 + $0xc] sm:$0xff]
    %v1701 = vld [vmem:[#allocation3 + $0x18] sm:$0xff]
    %v1702 = vld [vmem:[#allocation3 + $0x20] sm:$0xff]
    %1707 = vrot.lane.b32.xlu0 %v1699, 118
    %v1708 = vpop.permute.xlu0 %1707
    %1709 = vrot.lane.b32.xlu0 %v1700, 118
    %v1710 = vpop.permute.xlu0 %1709
    %1711 = vrot.lane.b32.xlu0 %v1701, 118
    %v1712 = vpop.permute.xlu0 %1711
    %1713 = vrot.lane.b32.xlu0 %v1702, 118
    %v1714 = vpop.permute.xlu0 %1713
    %v1715 = vrot.slane %v1708, 4
    %v1716 = vrot.slane %v1710, 4
    %v1717 = vrot.slane %v1712, 4
    %v1718 = vrot.slane %v1714, 4
    %v1719 = vsel %vm76, %v1715, %v1716
    %vm1720 = vcmask 965632
    %v1721 = vsel %vm1720, %v1708, %v1719
    %v1722 = vsel %vm1720, %v1710, %v1716
    %v1723 = vsel %vm76, %v1717, %v1718
    %v1724 = vsel %vm1720, %v1712, %v1723
    %v1725 = vsel %vm1720, %v1714, %v1718
    %1730 = vst [vmem:[#allocation2 + $0x900] sm:$0xff] %v1721
    %1731 = vst [vmem:[#allocation2 + $0x908] sm:$0xf] %v1722
    %1732 = vst [vmem:[#allocation2 + $0x918] sm:$0xff] %v1724
    %1733 = vst [vmem:[#allocation2 + $0x920] sm:$0xf] %v1725
    %s1734 = scalar_lea.vmem [#allocation3], 40
    %v1735 = vld [vmem:[%s1734] sm:$0xff]
    %v1736 = vld [vmem:[%s1734 + $0x8] sm:$0xf]
    %v1737 = vld [vmem:[%s1734 + $0x14] sm:$0xff]
    %v1738 = vld [vmem:[%s1734 + $0x1c] sm:$0xf]
    %1739 = vst [vmem:[#allocation2 + $0xc] sm:$0xff] %v1735
    %1740 = vst [vmem:[#allocation2 + $0x14] sm:$0xf] %v1736
    %1741 = vst [vmem:[#allocation2 + $0x24] sm:$0xff] %v1737
    %1742 = vst [vmem:[#allocation2 + $0x2c] sm:$0xf] %v1738
    %v1743 = vld [vmem:[%s1734] sm:$0xff]
    %v1744 = vld [vmem:[%s1734 + $0x8] sm:$0xff]
    %v1745 = vld [vmem:[%s1734 + $0x14] sm:$0xff]
    %v1746 = vld [vmem:[%s1734 + $0x1c] sm:$0xff]
    %1751 = vrot.lane.b32.xlu0 %v1743, 127
    %v1752 = vpop.permute.xlu0 %1751
    %1753 = vrot.lane.b32.xlu0 %v1744, 127
    %v1754 = vpop.permute.xlu0 %1753
    %1755 = vrot.lane.b32.xlu0 %v1745, 127
    %v1756 = vpop.permute.xlu0 %1755
    %1757 = vrot.lane.b32.xlu0 %v1746, 127
    %v1758 = vpop.permute.xlu0 %1757
    %v1759 = vrot.slane %v1752, 4
    %v1760 = vrot.slane %v1754, 4
    %v1761 = vrot.slane %v1756, 4
    %v1762 = vrot.slane %v1758, 4
    %v1763 = vsel %vm76, %v1759, %v1760
    %v1764 = vsel %vm78, %v1752, %v1763
    %v1765 = vsel %vm78, %v1754, %v1760
    %v1766 = vsel %vm76, %v1761, %v1762
    %v1767 = vsel %vm78, %v1756, %v1766
    %v1768 = vsel %vm78, %v1758, %v1762
    %1773 = vst [vmem:[#allocation2 + $0x3c] sm:$0xff] %v1764
    %1774 = vst [vmem:[#allocation2 + $0x44] sm:$0xf] %v1765
    %1775 = vst [vmem:[#allocation2 + $0x54] sm:$0xff] %v1767
    %1776 = vst [vmem:[#allocation2 + $0x5c] sm:$0xf] %v1768
    %v1777 = vld [vmem:[%s1734] sm:$0xff]
    %v1778 = vld [vmem:[%s1734 + $0x8] sm:$0xff]
    %v1779 = vld [vmem:[%s1734 + $0x14] sm:$0xff]
    %v1780 = vld [vmem:[%s1734 + $0x1c] sm:$0xff]
    %1785 = vrot.lane.b32.xlu0 %v1777, 126
    %v1786 = vpop.permute.xlu0 %1785
    %1787 = vrot.lane.b32.xlu0 %v1778, 126
    %v1788 = vpop.permute.xlu0 %1787
    %1789 = vrot.lane.b32.xlu0 %v1779, 126
    %v1790 = vpop.permute.xlu0 %1789
    %1791 = vrot.lane.b32.xlu0 %v1780, 126
    %v1792 = vpop.permute.xlu0 %1791
    %v1793 = vrot.slane %v1786, 4
    %v1794 = vrot.slane %v1788, 4
    %v1795 = vrot.slane %v1790, 4
    %v1796 = vrot.slane %v1792, 4
    %v1797 = vsel %vm76, %v1793, %v1794
    %v1798 = vsel %vm113, %v1786, %v1797
    %v1799 = vsel %vm113, %v1788, %v1794
    %v1800 = vsel %vm76, %v1795, %v1796
    %v1801 = vsel %vm113, %v1790, %v1800
    %v1802 = vsel %vm113, %v1792, %v1796
    %1807 = vst [vmem:[#allocation2 + $0x6c] sm:$0xff] %v1798
    %1808 = vst [vmem:[#allocation2 + $0x74] sm:$0xf] %v1799
    %1809 = vst [vmem:[#allocation2 + $0x84] sm:$0xff] %v1801
    %1810 = vst [vmem:[#allocation2 + $0x8c] sm:$0xf] %v1802
    %v1811 = vld [vmem:[%s1734] sm:$0xff]
    %v1812 = vld [vmem:[%s1734 + $0x8] sm:$0xff]
    %v1813 = vld [vmem:[%s1734 + $0x14] sm:$0xff]
    %v1814 = vld [vmem:[%s1734 + $0x1c] sm:$0xff]
    %1819 = vrot.lane.b32.xlu0 %v1811, 125
    %v1820 = vpop.permute.xlu0 %1819
    %1821 = vrot.lane.b32.xlu0 %v1812, 125
    %v1822 = vpop.permute.xlu0 %1821
    %1823 = vrot.lane.b32.xlu0 %v1813, 125
    %v1824 = vpop.permute.xlu0 %1823
    %1825 = vrot.lane.b32.xlu0 %v1814, 125
    %v1826 = vpop.permute.xlu0 %1825
    %v1827 = vrot.slane %v1820, 4
    %v1828 = vrot.slane %v1822, 4
    %v1829 = vrot.slane %v1824, 4
    %v1830 = vrot.slane %v1826, 4
    %v1831 = vsel %vm76, %v1827, %v1828
    %v1832 = vsel %vm148, %v1820, %v1831
    %v1833 = vsel %vm148, %v1822, %v1828
    %v1834 = vsel %vm76, %v1829, %v1830
    %v1835 = vsel %vm148, %v1824, %v1834
    %v1836 = vsel %vm148, %v1826, %v1830
    %1841 = vst [vmem:[#allocation2 + $0x9c] sm:$0xff] %v1832
    %1842 = vst [vmem:[#allocation2 + $0xa4] sm:$0xf] %v1833
    %1843 = vst [vmem:[#allocation2 + $0xb4] sm:$0xff] %v1835
    %1844 = vst [vmem:[#allocation2 + $0xbc] sm:$0xf] %v1836
    %v1845 = vld [vmem:[%s1734] sm:$0xff]
    %v1846 = vld [vmem:[%s1734 + $0x8] sm:$0xff]
    %v1847 = vld [vmem:[%s1734 + $0x14] sm:$0xff]
    %v1848 = vld [vmem:[%s1734 + $0x1c] sm:$0xff]
    %1853 = vrot.lane.b32.xlu0 %v1845, 124
    %v1854 = vpop.permute.xlu0 %1853
    %1855 = vrot.lane.b32.xlu0 %v1846, 124
    %v1856 = vpop.permute.xlu0 %1855
    %1857 = vrot.lane.b32.xlu0 %v1847, 124
    %v1858 = vpop.permute.xlu0 %1857
    %1859 = vrot.lane.b32.xlu0 %v1848, 124
    %v1860 = vpop.permute.xlu0 %1859
    %v1861 = vrot.slane %v1854, 4
    %v1862 = vrot.slane %v1856, 4
    %v1863 = vrot.slane %v1858, 4
    %v1864 = vrot.slane %v1860, 4
    %v1865 = vsel %vm76, %v1861, %v1862
    %v1866 = vsel %vm183, %v1854, %v1865
    %v1867 = vsel %vm183, %v1856, %v1862
    %v1868 = vsel %vm76, %v1863, %v1864
    %v1869 = vsel %vm183, %v1858, %v1868
    %v1870 = vsel %vm183, %v1860, %v1864
    %1875 = vst [vmem:[#allocation2 + $0xcc] sm:$0xff] %v1866
    %1876 = vst [vmem:[#allocation2 + $0xd4] sm:$0xf] %v1867
    %1877 = vst [vmem:[#allocation2 + $0xe4] sm:$0xff] %v1869
    %1878 = vst [vmem:[#allocation2 + $0xec] sm:$0xf] %v1870
    %v1879 = vld [vmem:[%s1734] sm:$0xff]
    %v1880 = vld [vmem:[%s1734 + $0x8] sm:$0xff]
    %v1881 = vld [vmem:[%s1734 + $0x14] sm:$0xff]
    %v1882 = vld [vmem:[%s1734 + $0x1c] sm:$0xff]
    %1887 = vrot.lane.b32.xlu0 %v1879, 123
    %v1888 = vpop.permute.xlu0 %1887
    %1889 = vrot.lane.b32.xlu0 %v1880, 123
    %v1890 = vpop.permute.xlu0 %1889
    %1891 = vrot.lane.b32.xlu0 %v1881, 123
    %v1892 = vpop.permute.xlu0 %1891
    %1893 = vrot.lane.b32.xlu0 %v1882, 123
    %v1894 = vpop.permute.xlu0 %1893
    %v1895 = vrot.slane %v1888, 4
    %v1896 = vrot.slane %v1890, 4
    %v1897 = vrot.slane %v1892, 4
    %v1898 = vrot.slane %v1894, 4
    %v1899 = vsel %vm76, %v1895, %v1896
    %v1900 = vsel %vm218, %v1888, %v1899
    %v1901 = vsel %vm218, %v1890, %v1896
    %v1902 = vsel %vm76, %v1897, %v1898
    %v1903 = vsel %vm218, %v1892, %v1902
    %v1904 = vsel %vm218, %v1894, %v1898
    %1909 = vst [vmem:[#allocation2 + $0xfc] sm:$0xff] %v1900
    %1910 = vst [vmem:[#allocation2 + $0x104] sm:$0xf] %v1901
    %1911 = vst [vmem:[#allocation2 + $0x114] sm:$0xff] %v1903
    %1912 = vst [vmem:[#allocation2 + $0x11c] sm:$0xf] %v1904
    %v1913 = vld [vmem:[%s1734] sm:$0xff]
    %v1914 = vld [vmem:[%s1734 + $0x8] sm:$0xff]
    %v1915 = vld [vmem:[%s1734 + $0x14] sm:$0xff]
    %v1916 = vld [vmem:[%s1734 + $0x1c] sm:$0xff]
    %1921 = vrot.lane.b32.xlu0 %v1913, 122
    %v1922 = vpop.permute.xlu0 %1921
    %1923 = vrot.lane.b32.xlu0 %v1914, 122
    %v1924 = vpop.permute.xlu0 %1923
    %1925 = vrot.lane.b32.xlu0 %v1915, 122
    %v1926 = vpop.permute.xlu0 %1925
    %1927 = vrot.lane.b32.xlu0 %v1916, 122
    %v1928 = vpop.permute.xlu0 %1927
    %v1929 = vrot.slane %v1922, 4
    %v1930 = vrot.slane %v1924, 4
    %v1931 = vrot.slane %v1926, 4
    %v1932 = vrot.slane %v1928, 4
    %v1933 = vsel %vm76, %v1929, %v1930
    %v1934 = vsel %vm253, %v1922, %v1933
    %v1935 = vsel %vm253, %v1924, %v1930
    %v1936 = vsel %vm76, %v1931, %v1932
    %v1937 = vsel %vm253, %v1926, %v1936
    %v1938 = vsel %vm253, %v1928, %v1932
    %1943 = vst [vmem:[#allocation2 + $0x12c] sm:$0xff] %v1934
    %1944 = vst [vmem:[#allocation2 + $0x134] sm:$0xf] %v1935
    %1945 = vst [vmem:[#allocation2 + $0x144] sm:$0xff] %v1937
    %1946 = vst [vmem:[#allocation2 + $0x14c] sm:$0xf] %v1938
    %v1947 = vld [vmem:[%s1734] sm:$0xff]
    %v1948 = vld [vmem:[%s1734 + $0x8] sm:$0xff]
    %v1949 = vld [vmem:[%s1734 + $0x14] sm:$0xff]
    %v1950 = vld [vmem:[%s1734 + $0x1c] sm:$0xff]
    %1955 = vrot.lane.b32.xlu0 %v1947, 106
    %v1956 = vpop.permute.xlu0 %1955
    %1957 = vrot.lane.b32.xlu0 %v1948, 106
    %v1958 = vpop.permute.xlu0 %1957
    %1959 = vrot.lane.b32.xlu0 %v1949, 106
    %v1960 = vpop.permute.xlu0 %1959
    %1961 = vrot.lane.b32.xlu0 %v1950, 106
    %v1962 = vpop.permute.xlu0 %1961
    %v1963 = vrot.slane %v1956, 4
    %v1964 = vrot.slane %v1958, 4
    %v1965 = vrot.slane %v1960, 4
    %v1966 = vrot.slane %v1962, 4
    %v1967 = vsel %vm76, %v1963, %v1964
    %v1968 = vsel %vm288, %v1956, %v1967
    %v1969 = vsel %vm288, %v1958, %v1964
    %v1970 = vsel %vm76, %v1965, %v1966
    %v1971 = vsel %vm288, %v1960, %v1970
    %v1972 = vsel %vm288, %v1962, %v1966
    %1977 = vst [vmem:[#allocation2 + $0x15c] sm:$0xff] %v1968
    %1978 = vst [vmem:[#allocation2 + $0x164] sm:$0xf] %v1969
    %1979 = vst [vmem:[#allocation2 + $0x174] sm:$0xff] %v1971
    %1980 = vst [vmem:[#allocation2 + $0x17c] sm:$0xf] %v1972
    %v1981 = vld [vmem:[%s1734] sm:$0xff]
    %v1982 = vld [vmem:[%s1734 + $0x8] sm:$0xff]
    %v1983 = vld [vmem:[%s1734 + $0x14] sm:$0xff]
    %v1984 = vld [vmem:[%s1734 + $0x1c] sm:$0xff]
    %1989 = vrot.lane.b32.xlu0 %v1981, 105
    %v1990 = vpop.permute.xlu0 %1989
    %1991 = vrot.lane.b32.xlu0 %v1982, 105
    %v1992 = vpop.permute.xlu0 %1991
    %1993 = vrot.lane.b32.xlu0 %v1983, 105
    %v1994 = vpop.permute.xlu0 %1993
    %1995 = vrot.lane.b32.xlu0 %v1984, 105
    %v1996 = vpop.permute.xlu0 %1995
    %v1997 = vrot.slane %v1990, 4
    %v1998 = vrot.slane %v1992, 4
    %v1999 = vrot.slane %v1994, 4
    %v2000 = vrot.slane %v1996, 4
    %v2001 = vsel %vm76, %v1997, %v1998
    %v2002 = vsel %vm323, %v1990, %v2001
    %v2003 = vsel %vm323, %v1992, %v1998
    %v2004 = vsel %vm76, %v1999, %v2000
    %v2005 = vsel %vm323, %v1994, %v2004
    %v2006 = vsel %vm323, %v1996, %v2000
    %2011 = vst [vmem:[#allocation2 + $0x18c] sm:$0xff] %v2002
    %2012 = vst [vmem:[#allocation2 + $0x194] sm:$0xf] %v2003
    %2013 = vst [vmem:[#allocation2 + $0x1a4] sm:$0xff] %v2005
    %2014 = vst [vmem:[#allocation2 + $0x1ac] sm:$0xf] %v2006
    %v2015 = vld [vmem:[%s1734] sm:$0xff]
    %v2016 = vld [vmem:[%s1734 + $0x8] sm:$0xff]
    %v2017 = vld [vmem:[%s1734 + $0x14] sm:$0xff]
    %v2018 = vld [vmem:[%s1734 + $0x1c] sm:$0xff]
    %2023 = vrot.lane.b32.xlu0 %v2015, 104
    %v2024 = vpop.permute.xlu0 %2023
    %2025 = vrot.lane.b32.xlu0 %v2016, 104
    %v2026 = vpop.permute.xlu0 %2025
    %2027 = vrot.lane.b32.xlu0 %v2017, 104
    %v2028 = vpop.permute.xlu0 %2027
    %2029 = vrot.lane.b32.xlu0 %v2018, 104
    %v2030 = vpop.permute.xlu0 %2029
    %v2031 = vrot.slane %v2024, 4
    %v2032 = vrot.slane %v2026, 4
    %v2033 = vrot.slane %v2028, 4
    %v2034 = vrot.slane %v2030, 4
    %v2035 = vsel %vm76, %v2031, %v2032
    %v2036 = vsel %vm358, %v2024, %v2035
    %v2037 = vsel %vm358, %v2026, %v2032
    %v2038 = vsel %vm76, %v2033, %v2034
    %v2039 = vsel %vm358, %v2028, %v2038
    %v2040 = vsel %vm358, %v2030, %v2034
    %2045 = vst [vmem:[#allocation2 + $0x1bc] sm:$0xff] %v2036
    %2046 = vst [vmem:[#allocation2 + $0x1c4] sm:$0xf] %v2037
    %2047 = vst [vmem:[#allocation2 + $0x1d4] sm:$0xff] %v2039
    %2048 = vst [vmem:[#allocation2 + $0x1dc] sm:$0xf] %v2040
    %v2049 = vld [vmem:[%s1734] sm:$0xff]
    %v2050 = vld [vmem:[%s1734 + $0x8] sm:$0xff]
    %v2051 = vld [vmem:[%s1734 + $0x14] sm:$0xff]
    %v2052 = vld [vmem:[%s1734 + $0x1c] sm:$0xff]
    %2057 = vrot.lane.b32.xlu0 %v2049, 103
    %v2058 = vpop.permute.xlu0 %2057
    %2059 = vrot.lane.b32.xlu0 %v2050, 103
    %v2060 = vpop.permute.xlu0 %2059
    %2061 = vrot.lane.b32.xlu0 %v2051, 103
    %v2062 = vpop.permute.xlu0 %2061
    %2063 = vrot.lane.b32.xlu0 %v2052, 103
    %v2064 = vpop.permute.xlu0 %2063
    %v2065 = vrot.slane %v2058, 4
    %v2066 = vrot.slane %v2060, 4
    %v2067 = vrot.slane %v2062, 4
    %v2068 = vrot.slane %v2064, 4
    %v2069 = vsel %vm76, %v2065, %v2066
    %v2070 = vsel %vm393, %v2058, %v2069
    %v2071 = vsel %vm393, %v2060, %v2066
    %v2072 = vsel %vm76, %v2067, %v2068
    %v2073 = vsel %vm393, %v2062, %v2072
    %v2074 = vsel %vm393, %v2064, %v2068
    %2079 = vst [vmem:[#allocation2 + $0x1ec] sm:$0xff] %v2070
    %2080 = vst [vmem:[#allocation2 + $0x1f4] sm:$0xf] %v2071
    %2081 = vst [vmem:[#allocation2 + $0x204] sm:$0xff] %v2073
    %2082 = vst [vmem:[#allocation2 + $0x20c] sm:$0xf] %v2074
    %v2083 = vld [vmem:[%s1734] sm:$0xff]
    %v2084 = vld [vmem:[%s1734 + $0x8] sm:$0xff]
    %v2085 = vld [vmem:[%s1734 + $0x14] sm:$0xff]
    %v2086 = vld [vmem:[%s1734 + $0x1c] sm:$0xff]
    %2091 = vrot.lane.b32.xlu0 %v2083, 102
    %v2092 = vpop.permute.xlu0 %2091
    %2093 = vrot.lane.b32.xlu0 %v2084, 102
    %v2094 = vpop.permute.xlu0 %2093
    %2095 = vrot.lane.b32.xlu0 %v2085, 102
    %v2096 = vpop.permute.xlu0 %2095
    %2097 = vrot.lane.b32.xlu0 %v2086, 102
    %v2098 = vpop.permute.xlu0 %2097
    %v2099 = vrot.slane %v2092, 4
    %v2100 = vrot.slane %v2094, 4
    %v2101 = vrot.slane %v2096, 4
    %v2102 = vrot.slane %v2098, 4
    %v2103 = vsel %vm76, %v2099, %v2100
    %v2104 = vsel %vm428, %v2092, %v2103
    %v2105 = vsel %vm428, %v2094, %v2100
    %v2106 = vsel %vm76, %v2101, %v2102
    %v2107 = vsel %vm428, %v2096, %v2106
    %v2108 = vsel %vm428, %v2098, %v2102
    %2113 = vst [vmem:[#allocation2 + $0x21c] sm:$0xff] %v2104
    %2114 = vst [vmem:[#allocation2 + $0x224] sm:$0xf] %v2105
    %2115 = vst [vmem:[#allocation2 + $0x234] sm:$0xff] %v2107
    %2116 = vst [vmem:[#allocation2 + $0x23c] sm:$0xf] %v2108
    %v2117 = vld [vmem:[%s1734] sm:$0xff]
    %v2118 = vld [vmem:[%s1734 + $0x8] sm:$0xff]
    %v2119 = vld [vmem:[%s1734 + $0x14] sm:$0xff]
    %v2120 = vld [vmem:[%s1734 + $0x1c] sm:$0xff]
    %2125 = vrot.lane.b32.xlu0 %v2117, 101
    %v2126 = vpop.permute.xlu0 %2125
    %2127 = vrot.lane.b32.xlu0 %v2118, 101
    %v2128 = vpop.permute.xlu0 %2127
    %2129 = vrot.lane.b32.xlu0 %v2119, 101
    %v2130 = vpop.permute.xlu0 %2129
    %2131 = vrot.lane.b32.xlu0 %v2120, 101
    %v2132 = vpop.permute.xlu0 %2131
    %v2133 = vrot.slane %v2126, 4
    %v2134 = vrot.slane %v2128, 4
    %v2135 = vrot.slane %v2130, 4
    %v2136 = vrot.slane %v2132, 4
    %v2137 = vsel %vm76, %v2133, %v2134
    %v2138 = vsel %vm463, %v2126, %v2137
    %v2139 = vsel %vm463, %v2128, %v2134
    %v2140 = vsel %vm76, %v2135, %v2136
    %v2141 = vsel %vm463, %v2130, %v2140
    %v2142 = vsel %vm463, %v2132, %v2136
    %2147 = vst [vmem:[#allocation2 + $0x24c] sm:$0xff] %v2138
    %2148 = vst [vmem:[#allocation2 + $0x254] sm:$0xf] %v2139
    %2149 = vst [vmem:[#allocation2 + $0x264] sm:$0xff] %v2141
    %2150 = vst [vmem:[#allocation2 + $0x26c] sm:$0xf] %v2142
    %v2151 = vld [vmem:[%s1734] sm:$0xff]
    %v2152 = vld [vmem:[%s1734 + $0x8] sm:$0xff]
    %v2153 = vld [vmem:[%s1734 + $0x14] sm:$0xff]
    %v2154 = vld [vmem:[%s1734 + $0x1c] sm:$0xff]
    %2159 = vrot.lane.b32.xlu0 %v2151, 100
    %v2160 = vpop.permute.xlu0 %2159
    %2161 = vrot.lane.b32.xlu0 %v2152, 100
    %v2162 = vpop.permute.xlu0 %2161
    %2163 = vrot.lane.b32.xlu0 %v2153, 100
    %v2164 = vpop.permute.xlu0 %2163
    %2165 = vrot.lane.b32.xlu0 %v2154, 100
    %v2166 = vpop.permute.xlu0 %2165
    %v2167 = vrot.slane %v2160, 4
    %v2168 = vrot.slane %v2162, 4
    %v2169 = vrot.slane %v2164, 4
    %v2170 = vrot.slane %v2166, 4
    %v2171 = vsel %vm76, %v2167, %v2168
    %v2172 = vsel %vm498, %v2160, %v2171
    %v2173 = vsel %vm498, %v2162, %v2168
    %v2174 = vsel %vm76, %v2169, %v2170
    %v2175 = vsel %vm498, %v2164, %v2174
    %v2176 = vsel %vm498, %v2166, %v2170
    %2181 = vst [vmem:[#allocation2 + $0x27c] sm:$0xff] %v2172
    %2182 = vst [vmem:[#allocation2 + $0x284] sm:$0xf] %v2173
    %2183 = vst [vmem:[#allocation2 + $0x294] sm:$0xff] %v2175
    %2184 = vst [vmem:[#allocation2 + $0x29c] sm:$0xf] %v2176
    %v2185 = vld [vmem:[%s1734] sm:$0xff]
    %v2186 = vld [vmem:[%s1734 + $0x8] sm:$0xff]
    %v2187 = vld [vmem:[%s1734 + $0x14] sm:$0xff]
    %v2188 = vld [vmem:[%s1734 + $0x1c] sm:$0xff]
    %2193 = vrot.lane.b32.xlu0 %v2185, 84
    %v2194 = vpop.permute.xlu0 %2193
    %2195 = vrot.lane.b32.xlu0 %v2186, 84
    %v2196 = vpop.permute.xlu0 %2195
    %2197 = vrot.lane.b32.xlu0 %v2187, 84
    %v2198 = vpop.permute.xlu0 %2197
    %2199 = vrot.lane.b32.xlu0 %v2188, 84
    %v2200 = vpop.permute.xlu0 %2199
    %v2201 = vrot.slane %v2194, 4
    %v2202 = vrot.slane %v2196, 4
    %v2203 = vrot.slane %v2198, 4
    %v2204 = vrot.slane %v2200, 4
    %v2205 = vsel %vm76, %v2201, %v2202
    %v2206 = vsel %vm533, %v2194, %v2205
    %v2207 = vsel %vm533, %v2196, %v2202
    %v2208 = vsel %vm76, %v2203, %v2204
    %v2209 = vsel %vm533, %v2198, %v2208
    %v2210 = vsel %vm533, %v2200, %v2204
    %2215 = vst [vmem:[#allocation2 + $0x2ac] sm:$0xff] %v2206
    %2216 = vst [vmem:[#allocation2 + $0x2b4] sm:$0xf] %v2207
    %2217 = vst [vmem:[#allocation2 + $0x2c4] sm:$0xff] %v2209
    %2218 = vst [vmem:[#allocation2 + $0x2cc] sm:$0xf] %v2210
    %v2219 = vld [vmem:[%s1734] sm:$0xff]
    %v2220 = vld [vmem:[%s1734 + $0x8] sm:$0xff]
    %v2221 = vld [vmem:[%s1734 + $0x14] sm:$0xff]
    %v2222 = vld [vmem:[%s1734 + $0x1c] sm:$0xff]
    %2227 = vrot.lane.b32.xlu0 %v2219, 83
    %v2228 = vpop.permute.xlu0 %2227
    %2229 = vrot.lane.b32.xlu0 %v2220, 83
    %v2230 = vpop.permute.xlu0 %2229
    %2231 = vrot.lane.b32.xlu0 %v2221, 83
    %v2232 = vpop.permute.xlu0 %2231
    %2233 = vrot.lane.b32.xlu0 %v2222, 83
    %v2234 = vpop.permute.xlu0 %2233
    %v2235 = vrot.slane %v2228, 4
    %v2236 = vrot.slane %v2230, 4
    %v2237 = vrot.slane %v2232, 4
    %v2238 = vrot.slane %v2234, 4
    %v2239 = vsel %vm76, %v2235, %v2236
    %v2240 = vsel %vm568, %v2228, %v2239
    %v2241 = vsel %vm568, %v2230, %v2236
    %v2242 = vsel %vm76, %v2237, %v2238
    %v2243 = vsel %vm568, %v2232, %v2242
    %v2244 = vsel %vm568, %v2234, %v2238
    %2249 = vst [vmem:[#allocation2 + $0x2dc] sm:$0xff] %v2240
    %2250 = vst [vmem:[#allocation2 + $0x2e4] sm:$0xf] %v2241
    %2251 = vst [vmem:[#allocation2 + $0x2f4] sm:$0xff] %v2243
    %2252 = vst [vmem:[#allocation2 + $0x2fc] sm:$0xf] %v2244
    %v2253 = vld [vmem:[%s1734] sm:$0xff]
    %v2254 = vld [vmem:[%s1734 + $0x8] sm:$0xff]
    %v2255 = vld [vmem:[%s1734 + $0x14] sm:$0xff]
    %v2256 = vld [vmem:[%s1734 + $0x1c] sm:$0xff]
    %2261 = vrot.lane.b32.xlu0 %v2253, 82
    %v2262 = vpop.permute.xlu0 %2261
    %2263 = vrot.lane.b32.xlu0 %v2254, 82
    %v2264 = vpop.permute.xlu0 %2263
    %2265 = vrot.lane.b32.xlu0 %v2255, 82
    %v2266 = vpop.permute.xlu0 %2265
    %2267 = vrot.lane.b32.xlu0 %v2256, 82
    %v2268 = vpop.permute.xlu0 %2267
    %v2269 = vrot.slane %v2262, 4
    %v2270 = vrot.slane %v2264, 4
    %v2271 = vrot.slane %v2266, 4
    %v2272 = vrot.slane %v2268, 4
    %v2273 = vsel %vm76, %v2269, %v2270
    %v2274 = vsel %vm603, %v2262, %v2273
    %v2275 = vsel %vm603, %v2264, %v2270
    %v2276 = vsel %vm76, %v2271, %v2272
    %v2277 = vsel %vm603, %v2266, %v2276
    %v2278 = vsel %vm603, %v2268, %v2272
    %2283 = vst [vmem:[#allocation2 + $0x30c] sm:$0xff] %v2274
    %2284 = vst [vmem:[#allocation2 + $0x314] sm:$0xf] %v2275
    %2285 = vst [vmem:[#allocation2 + $0x324] sm:$0xff] %v2277
    %2286 = vst [vmem:[#allocation2 + $0x32c] sm:$0xf] %v2278
    %v2287 = vld [vmem:[%s1734] sm:$0xff]
    %v2288 = vld [vmem:[%s1734 + $0x8] sm:$0xff]
    %v2289 = vld [vmem:[%s1734 + $0x14] sm:$0xff]
    %v2290 = vld [vmem:[%s1734 + $0x1c] sm:$0xff]
    %2295 = vrot.lane.b32.xlu0 %v2287, 81
    %v2296 = vpop.permute.xlu0 %2295
    %2297 = vrot.lane.b32.xlu0 %v2288, 81
    %v2298 = vpop.permute.xlu0 %2297
    %2299 = vrot.lane.b32.xlu0 %v2289, 81
    %v2300 = vpop.permute.xlu0 %2299
    %2301 = vrot.lane.b32.xlu0 %v2290, 81
    %v2302 = vpop.permute.xlu0 %2301
    %v2303 = vrot.slane %v2296, 4
    %v2304 = vrot.slane %v2298, 4
    %v2305 = vrot.slane %v2300, 4
    %v2306 = vrot.slane %v2302, 4
    %v2307 = vsel %vm76, %v2303, %v2304
    %v2308 = vsel %vm638, %v2296, %v2307
    %v2309 = vsel %vm638, %v2298, %v2304
    %v2310 = vsel %vm76, %v2305, %v2306
    %v2311 = vsel %vm638, %v2300, %v2310
    %v2312 = vsel %vm638, %v2302, %v2306
    %2317 = vst [vmem:[#allocation2 + $0x33c] sm:$0xff] %v2308
    %2318 = vst [vmem:[#allocation2 + $0x344] sm:$0xf] %v2309
    %2319 = vst [vmem:[#allocation2 + $0x354] sm:$0xff] %v2311
    %2320 = vst [vmem:[#allocation2 + $0x35c] sm:$0xf] %v2312
    %v2321 = vld [vmem:[%s1734] sm:$0xff]
    %v2322 = vld [vmem:[%s1734 + $0x8] sm:$0xff]
    %v2323 = vld [vmem:[%s1734 + $0x14] sm:$0xff]
    %v2324 = vld [vmem:[%s1734 + $0x1c] sm:$0xff]
    %2329 = vrot.lane.b32.xlu0 %v2321, 80
    %v2330 = vpop.permute.xlu0 %2329
    %2331 = vrot.lane.b32.xlu0 %v2322, 80
    %v2332 = vpop.permute.xlu0 %2331
    %2333 = vrot.lane.b32.xlu0 %v2323, 80
    %v2334 = vpop.permute.xlu0 %2333
    %2335 = vrot.lane.b32.xlu0 %v2324, 80
    %v2336 = vpop.permute.xlu0 %2335
    %v2337 = vrot.slane %v2330, 4
    %v2338 = vrot.slane %v2332, 4
    %v2339 = vrot.slane %v2334, 4
    %v2340 = vrot.slane %v2336, 4
    %v2341 = vsel %vm76, %v2337, %v2338
    %v2342 = vsel %vm673, %v2330, %v2341
    %v2343 = vsel %vm673, %v2332, %v2338
    %v2344 = vsel %vm76, %v2339, %v2340
    %v2345 = vsel %vm673, %v2334, %v2344
    %v2346 = vsel %vm673, %v2336, %v2340
    %2351 = vst [vmem:[#allocation2 + $0x36c] sm:$0xff] %v2342
    %2352 = vst [vmem:[#allocation2 + $0x374] sm:$0xf] %v2343
    %2353 = vst [vmem:[#allocation2 + $0x384] sm:$0xff] %v2345
    %2354 = vst [vmem:[#allocation2 + $0x38c] sm:$0xf] %v2346
    %v2355 = vld [vmem:[%s1734] sm:$0xff]
    %v2356 = vld [vmem:[%s1734 + $0x8] sm:$0xff]
    %v2357 = vld [vmem:[%s1734 + $0x14] sm:$0xff]
    %v2358 = vld [vmem:[%s1734 + $0x1c] sm:$0xff]
    %2363 = vrot.lane.b32.xlu0 %v2355, 79
    %v2364 = vpop.permute.xlu0 %2363
    %2365 = vrot.lane.b32.xlu0 %v2356, 79
    %v2366 = vpop.permute.xlu0 %2365
    %2367 = vrot.lane.b32.xlu0 %v2357, 79
    %v2368 = vpop.permute.xlu0 %2367
    %2369 = vrot.lane.b32.xlu0 %v2358, 79
    %v2370 = vpop.permute.xlu0 %2369
    %v2371 = vrot.slane %v2364, 4
    %v2372 = vrot.slane %v2366, 4
    %v2373 = vrot.slane %v2368, 4
    %v2374 = vrot.slane %v2370, 4
    %v2375 = vsel %vm76, %v2371, %v2372
    %v2376 = vsel %vm708, %v2364, %v2375
    %v2377 = vsel %vm708, %v2366, %v2372
    %v2378 = vsel %vm76, %v2373, %v2374
    %v2379 = vsel %vm708, %v2368, %v2378
    %v2380 = vsel %vm708, %v2370, %v2374
    %2385 = vst [vmem:[#allocation2 + $0x39c] sm:$0xff] %v2376
    %2386 = vst [vmem:[#allocation2 + $0x3a4] sm:$0xf] %v2377
    %2387 = vst [vmem:[#allocation2 + $0x3b4] sm:$0xff] %v2379
    %2388 = vst [vmem:[#allocation2 + $0x3bc] sm:$0xf] %v2380
    %v2389 = vld [vmem:[%s1734] sm:$0xff]
    %v2390 = vld [vmem:[%s1734 + $0x8] sm:$0xff]
    %v2391 = vld [vmem:[%s1734 + $0x14] sm:$0xff]
    %v2392 = vld [vmem:[%s1734 + $0x1c] sm:$0xff]
    %2397 = vrot.lane.b32.xlu0 %v2389, 78
    %v2398 = vpop.permute.xlu0 %2397
    %2399 = vrot.lane.b32.xlu0 %v2390, 78
    %v2400 = vpop.permute.xlu0 %2399
    %2401 = vrot.lane.b32.xlu0 %v2391, 78
    %v2402 = vpop.permute.xlu0 %2401
    %2403 = vrot.lane.b32.xlu0 %v2392, 78
    %v2404 = vpop.permute.xlu0 %2403
    %v2405 = vrot.slane %v2398, 4
    %v2406 = vrot.slane %v2400, 4
    %v2407 = vrot.slane %v2402, 4
    %v2408 = vrot.slane %v2404, 4
    %v2409 = vsel %vm76, %v2405, %v2406
    %v2410 = vsel %vm743, %v2398, %v2409
    %v2411 = vsel %vm743, %v2400, %v2406
    %v2412 = vsel %vm76, %v2407, %v2408
    %v2413 = vsel %vm743, %v2402, %v2412
    %v2414 = vsel %vm743, %v2404, %v2408
    %2419 = vst [vmem:[#allocation2 + $0x3cc] sm:$0xff] %v2410
    %2420 = vst [vmem:[#allocation2 + $0x3d4] sm:$0xf] %v2411
    %2421 = vst [vmem:[#allocation2 + $0x3e4] sm:$0xff] %v2413
    %2422 = vst [vmem:[#allocation2 + $0x3ec] sm:$0xf] %v2414
    %v2423 = vld [vmem:[%s1734] sm:$0xff]
    %v2424 = vld [vmem:[%s1734 + $0x8] sm:$0xff]
    %v2425 = vld [vmem:[%s1734 + $0x14] sm:$0xff]
    %v2426 = vld [vmem:[%s1734 + $0x1c] sm:$0xff]
    %2431 = vrot.lane.b32.xlu0 %v2423, 62
    %v2432 = vpop.permute.xlu0 %2431
    %2433 = vrot.lane.b32.xlu0 %v2424, 62
    %v2434 = vpop.permute.xlu0 %2433
    %2435 = vrot.lane.b32.xlu0 %v2425, 62
    %v2436 = vpop.permute.xlu0 %2435
    %2437 = vrot.lane.b32.xlu0 %v2426, 62
    %v2438 = vpop.permute.xlu0 %2437
    %v2439 = vrot.slane %v2432, 4
    %v2440 = vrot.slane %v2434, 4
    %v2441 = vrot.slane %v2436, 4
    %v2442 = vrot.slane %v2438, 4
    %v2443 = vsel %vm76, %v2439, %v2440
    %v2444 = vsel %vm778, %v2432, %v2443
    %v2445 = vsel %vm778, %v2434, %v2440
    %v2446 = vsel %vm76, %v2441, %v2442
    %v2447 = vsel %vm778, %v2436, %v2446
    %v2448 = vsel %vm778, %v2438, %v2442
    %2453 = vst [vmem:[#allocation2 + $0x3fc] sm:$0xff] %v2444
    %2454 = vst [vmem:[#allocation2 + $0x404] sm:$0xf] %v2445
    %2455 = vst [vmem:[#allocation2 + $0x414] sm:$0xff] %v2447
    %2456 = vst [vmem:[#allocation2 + $0x41c] sm:$0xf] %v2448
    %v2457 = vld [vmem:[%s1734] sm:$0xff]
    %v2458 = vld [vmem:[%s1734 + $0x8] sm:$0xff]
    %v2459 = vld [vmem:[%s1734 + $0x14] sm:$0xff]
    %v2460 = vld [vmem:[%s1734 + $0x1c] sm:$0xff]
    %2465 = vrot.lane.b32.xlu0 %v2457, 61
    %v2466 = vpop.permute.xlu0 %2465
    %2467 = vrot.lane.b32.xlu0 %v2458, 61
    %v2468 = vpop.permute.xlu0 %2467
    %2469 = vrot.lane.b32.xlu0 %v2459, 61
    %v2470 = vpop.permute.xlu0 %2469
    %2471 = vrot.lane.b32.xlu0 %v2460, 61
    %v2472 = vpop.permute.xlu0 %2471
    %v2473 = vrot.slane %v2466, 4
    %v2474 = vrot.slane %v2468, 4
    %v2475 = vrot.slane %v2470, 4
    %v2476 = vrot.slane %v2472, 4
    %v2477 = vsel %vm76, %v2473, %v2474
    %v2478 = vsel %vm813, %v2466, %v2477
    %v2479 = vsel %vm813, %v2468, %v2474
    %v2480 = vsel %vm76, %v2475, %v2476
    %v2481 = vsel %vm813, %v2470, %v2480
    %v2482 = vsel %vm813, %v2472, %v2476
    %2487 = vst [vmem:[#allocation2 + $0x42c] sm:$0xff] %v2478
    %2488 = vst [vmem:[#allocation2 + $0x434] sm:$0xf] %v2479
    %2489 = vst [vmem:[#allocation2 + $0x444] sm:$0xff] %v2481
    %2490 = vst [vmem:[#allocation2 + $0x44c] sm:$0xf] %v2482
    %v2491 = vld [vmem:[%s1734] sm:$0xff]
    %v2492 = vld [vmem:[%s1734 + $0x8] sm:$0xff]
    %v2493 = vld [vmem:[%s1734 + $0x14] sm:$0xff]
    %v2494 = vld [vmem:[%s1734 + $0x1c] sm:$0xff]
    %2499 = vrot.lane.b32.xlu0 %v2491, 60
    %v2500 = vpop.permute.xlu0 %2499
    %2501 = vrot.lane.b32.xlu0 %v2492, 60
    %v2502 = vpop.permute.xlu0 %2501
    %2503 = vrot.lane.b32.xlu0 %v2493, 60
    %v2504 = vpop.permute.xlu0 %2503
    %2505 = vrot.lane.b32.xlu0 %v2494, 60
    %v2506 = vpop.permute.xlu0 %2505
    %v2507 = vrot.slane %v2500, 4
    %v2508 = vrot.slane %v2502, 4
    %v2509 = vrot.slane %v2504, 4
    %v2510 = vrot.slane %v2506, 4
    %v2511 = vsel %vm76, %v2507, %v2508
    %v2512 = vsel %vm848, %v2500, %v2511
    %v2513 = vsel %vm848, %v2502, %v2508
    %v2514 = vsel %vm76, %v2509, %v2510
    %v2515 = vsel %vm848, %v2504, %v2514
    %v2516 = vsel %vm848, %v2506, %v2510
    %2521 = vst [vmem:[#allocation2 + $0x45c] sm:$0xff] %v2512
    %2522 = vst [vmem:[#allocation2 + $0x464] sm:$0xf] %v2513
    %2523 = vst [vmem:[#allocation2 + $0x474] sm:$0xff] %v2515
    %2524 = vst [vmem:[#allocation2 + $0x47c] sm:$0xf] %v2516
    %v2525 = vld [vmem:[%s1734] sm:$0xff]
    %v2526 = vld [vmem:[%s1734 + $0x8] sm:$0xff]
    %v2527 = vld [vmem:[%s1734 + $0x14] sm:$0xff]
    %v2528 = vld [vmem:[%s1734 + $0x1c] sm:$0xff]
    %2533 = vrot.lane.b32.xlu0 %v2525, 59
    %v2534 = vpop.permute.xlu0 %2533
    %2535 = vrot.lane.b32.xlu0 %v2526, 59
    %v2536 = vpop.permute.xlu0 %2535
    %2537 = vrot.lane.b32.xlu0 %v2527, 59
    %v2538 = vpop.permute.xlu0 %2537
    %2539 = vrot.lane.b32.xlu0 %v2528, 59
    %v2540 = vpop.permute.xlu0 %2539
    %v2541 = vrot.slane %v2534, 4
    %v2542 = vrot.slane %v2536, 4
    %v2543 = vrot.slane %v2538, 4
    %v2544 = vrot.slane %v2540, 4
    %v2545 = vsel %vm76, %v2541, %v2542
    %v2546 = vsel %vm883, %v2534, %v2545
    %v2547 = vsel %vm883, %v2536, %v2542
    %v2548 = vsel %vm76, %v2543, %v2544
    %v2549 = vsel %vm883, %v2538, %v2548
    %v2550 = vsel %vm883, %v2540, %v2544
    %2555 = vst [vmem:[#allocation2 + $0x48c] sm:$0xff] %v2546
    %2556 = vst [vmem:[#allocation2 + $0x494] sm:$0xf] %v2547
    %2557 = vst [vmem:[#allocation2 + $0x4a4] sm:$0xff] %v2549
    %2558 = vst [vmem:[#allocation2 + $0x4ac] sm:$0xf] %v2550
    %v2559 = vld [vmem:[%s1734] sm:$0xff]
    %v2560 = vld [vmem:[%s1734 + $0x8] sm:$0xff]
    %v2561 = vld [vmem:[%s1734 + $0x14] sm:$0xff]
    %v2562 = vld [vmem:[%s1734 + $0x1c] sm:$0xff]
    %2567 = vrot.lane.b32.xlu0 %v2559, 58
    %v2568 = vpop.permute.xlu0 %2567
    %2569 = vrot.lane.b32.xlu0 %v2560, 58
    %v2570 = vpop.permute.xlu0 %2569
    %2571 = vrot.lane.b32.xlu0 %v2561, 58
    %v2572 = vpop.permute.xlu0 %2571
    %2573 = vrot.lane.b32.xlu0 %v2562, 58
    %v2574 = vpop.permute.xlu0 %2573
    %v2575 = vrot.slane %v2568, 4
    %v2576 = vrot.slane %v2570, 4
    %v2577 = vrot.slane %v2572, 4
    %v2578 = vrot.slane %v2574, 4
    %v2579 = vsel %vm76, %v2575, %v2576
    %v2580 = vsel %vm918, %v2568, %v2579
    %v2581 = vsel %vm918, %v2570, %v2576
    %v2582 = vsel %vm76, %v2577, %v2578
    %v2583 = vsel %vm918, %v2572, %v2582
    %v2584 = vsel %vm918, %v2574, %v2578
    %2589 = vst [vmem:[#allocation2 + $0x4bc] sm:$0xff] %v2580
    %2590 = vst [vmem:[#allocation2 + $0x4c4] sm:$0xf] %v2581
    %2591 = vst [vmem:[#allocation2 + $0x4d4] sm:$0xff] %v2583
    %2592 = vst [vmem:[#allocation2 + $0x4dc] sm:$0xf] %v2584
    %v2593 = vld [vmem:[%s1734] sm:$0xff]
    %v2594 = vld [vmem:[%s1734 + $0x8] sm:$0xff]
    %v2595 = vld [vmem:[%s1734 + $0x14] sm:$0xff]
    %v2596 = vld [vmem:[%s1734 + $0x1c] sm:$0xff]
    %2601 = vrot.lane.b32.xlu0 %v2593, 57
    %v2602 = vpop.permute.xlu0 %2601
    %2603 = vrot.lane.b32.xlu0 %v2594, 57
    %v2604 = vpop.permute.xlu0 %2603
    %2605 = vrot.lane.b32.xlu0 %v2595, 57
    %v2606 = vpop.permute.xlu0 %2605
    %2607 = vrot.lane.b32.xlu0 %v2596, 57
    %v2608 = vpop.permute.xlu0 %2607
    %v2609 = vrot.slane %v2602, 4
    %v2610 = vrot.slane %v2604, 4
    %v2611 = vrot.slane %v2606, 4
    %v2612 = vrot.slane %v2608, 4
    %v2613 = vsel %vm76, %v2609, %v2610
    %v2614 = vsel %vm953, %v2602, %v2613
    %v2615 = vsel %vm953, %v2604, %v2610
    %v2616 = vsel %vm76, %v2611, %v2612
    %v2617 = vsel %vm953, %v2606, %v2616
    %v2618 = vsel %vm953, %v2608, %v2612
    %2623 = vst [vmem:[#allocation2 + $0x4ec] sm:$0xff] %v2614
    %2624 = vst [vmem:[#allocation2 + $0x4f4] sm:$0xf] %v2615
    %2625 = vst [vmem:[#allocation2 + $0x504] sm:$0xff] %v2617
    %2626 = vst [vmem:[#allocation2 + $0x50c] sm:$0xf] %v2618
    %v2627 = vld [vmem:[%s1734] sm:$0xff]
    %v2628 = vld [vmem:[%s1734 + $0x8] sm:$0xff]
    %v2629 = vld [vmem:[%s1734 + $0x14] sm:$0xff]
    %v2630 = vld [vmem:[%s1734 + $0x1c] sm:$0xff]
    %2635 = vrot.lane.b32.xlu0 %v2627, 56
    %v2636 = vpop.permute.xlu0 %2635
    %2637 = vrot.lane.b32.xlu0 %v2628, 56
    %v2638 = vpop.permute.xlu0 %2637
    %2639 = vrot.lane.b32.xlu0 %v2629, 56
    %v2640 = vpop.permute.xlu0 %2639
    %2641 = vrot.lane.b32.xlu0 %v2630, 56
    %v2642 = vpop.permute.xlu0 %2641
    %v2643 = vrot.slane %v2636, 4
    %v2644 = vrot.slane %v2638, 4
    %v2645 = vrot.slane %v2640, 4
    %v2646 = vrot.slane %v2642, 4
    %v2647 = vsel %vm76, %v2643, %v2644
    %v2648 = vsel %vm988, %v2636, %v2647
    %v2649 = vsel %vm988, %v2638, %v2644
    %v2650 = vsel %vm76, %v2645, %v2646
    %v2651 = vsel %vm988, %v2640, %v2650
    %v2652 = vsel %vm988, %v2642, %v2646
    %2657 = vst [vmem:[#allocation2 + $0x51c] sm:$0xff] %v2648
    %2658 = vst [vmem:[#allocation2 + $0x524] sm:$0xf] %v2649
    %2659 = vst [vmem:[#allocation2 + $0x534] sm:$0xff] %v2651
    %2660 = vst [vmem:[#allocation2 + $0x53c] sm:$0xf] %v2652
    %v2661 = vld [vmem:[%s1734] sm:$0xff]
    %v2662 = vld [vmem:[%s1734 + $0x8] sm:$0xff]
    %v2663 = vld [vmem:[%s1734 + $0x14] sm:$0xff]
    %v2664 = vld [vmem:[%s1734 + $0x1c] sm:$0xff]
    %2669 = vrot.lane.b32.xlu0 %v2661, 40
    %v2670 = vpop.permute.xlu0 %2669
    %2671 = vrot.lane.b32.xlu0 %v2662, 40
    %v2672 = vpop.permute.xlu0 %2671
    %2673 = vrot.lane.b32.xlu0 %v2663, 40
    %v2674 = vpop.permute.xlu0 %2673
    %2675 = vrot.lane.b32.xlu0 %v2664, 40
    %v2676 = vpop.permute.xlu0 %2675
    %v2677 = vrot.slane %v2670, 4
    %v2678 = vrot.slane %v2672, 4
    %v2679 = vrot.slane %v2674, 4
    %v2680 = vrot.slane %v2676, 4
    %v2681 = vsel %vm76, %v2677, %v2678
    %v2682 = vsel %vm1023, %v2670, %v2681
    %v2683 = vsel %vm1023, %v2672, %v2678
    %v2684 = vsel %vm76, %v2679, %v2680
    %v2685 = vsel %vm1023, %v2674, %v2684
    %v2686 = vsel %vm1023, %v2676, %v2680
    %2691 = vst [vmem:[#allocation2 + $0x54c] sm:$0xff] %v2682
    %2692 = vst [vmem:[#allocation2 + $0x554] sm:$0xf] %v2683
    %2693 = vst [vmem:[#allocation2 + $0x564] sm:$0xff] %v2685
    %2694 = vst [vmem:[#allocation2 + $0x56c] sm:$0xf] %v2686
    %v2695 = vld [vmem:[%s1734] sm:$0xff]
    %v2696 = vld [vmem:[%s1734 + $0x8] sm:$0xff]
    %v2697 = vld [vmem:[%s1734 + $0x14] sm:$0xff]
    %v2698 = vld [vmem:[%s1734 + $0x1c] sm:$0xff]
    %2703 = vrot.lane.b32.xlu0 %v2695, 39
    %v2704 = vpop.permute.xlu0 %2703
    %2705 = vrot.lane.b32.xlu0 %v2696, 39
    %v2706 = vpop.permute.xlu0 %2705
    %2707 = vrot.lane.b32.xlu0 %v2697, 39
    %v2708 = vpop.permute.xlu0 %2707
    %2709 = vrot.lane.b32.xlu0 %v2698, 39
    %v2710 = vpop.permute.xlu0 %2709
    %v2711 = vrot.slane %v2704, 4
    %v2712 = vrot.slane %v2706, 4
    %v2713 = vrot.slane %v2708, 4
    %v2714 = vrot.slane %v2710, 4
    %v2715 = vsel %vm76, %v2711, %v2712
    %v2716 = vsel %vm1058, %v2704, %v2715
    %v2717 = vsel %vm1058, %v2706, %v2712
    %v2718 = vsel %vm76, %v2713, %v2714
    %v2719 = vsel %vm1058, %v2708, %v2718
    %v2720 = vsel %vm1058, %v2710, %v2714
    %2725 = vst [vmem:[#allocation2 + $0x57c] sm:$0xff] %v2716
    %2726 = vst [vmem:[#allocation2 + $0x584] sm:$0xf] %v2717
    %2727 = vst [vmem:[#allocation2 + $0x594] sm:$0xff] %v2719
    %2728 = vst [vmem:[#allocation2 + $0x59c] sm:$0xf] %v2720
    %v2729 = vld [vmem:[%s1734] sm:$0xff]
    %v2730 = vld [vmem:[%s1734 + $0x8] sm:$0xff]
    %v2731 = vld [vmem:[%s1734 + $0x14] sm:$0xff]
    %v2732 = vld [vmem:[%s1734 + $0x1c] sm:$0xff]
    %2737 = vrot.lane.b32.xlu0 %v2729, 38
    %v2738 = vpop.permute.xlu0 %2737
    %2739 = vrot.lane.b32.xlu0 %v2730, 38
    %v2740 = vpop.permute.xlu0 %2739
    %2741 = vrot.lane.b32.xlu0 %v2731, 38
    %v2742 = vpop.permute.xlu0 %2741
    %2743 = vrot.lane.b32.xlu0 %v2732, 38
    %v2744 = vpop.permute.xlu0 %2743
    %v2745 = vrot.slane %v2738, 4
    %v2746 = vrot.slane %v2740, 4
    %v2747 = vrot.slane %v2742, 4
    %v2748 = vrot.slane %v2744, 4
    %v2749 = vsel %vm76, %v2745, %v2746
    %v2750 = vsel %vm1093, %v2738, %v2749
    %v2751 = vsel %vm1093, %v2740, %v2746
    %v2752 = vsel %vm76, %v2747, %v2748
    %v2753 = vsel %vm1093, %v2742, %v2752
    %v2754 = vsel %vm1093, %v2744, %v2748
    %2759 = vst [vmem:[#allocation2 + $0x5ac] sm:$0xff] %v2750
    %2760 = vst [vmem:[#allocation2 + $0x5b4] sm:$0xf] %v2751
    %2761 = vst [vmem:[#allocation2 + $0x5c4] sm:$0xff] %v2753
    %2762 = vst [vmem:[#allocation2 + $0x5cc] sm:$0xf] %v2754
    %v2763 = vld [vmem:[%s1734] sm:$0xff]
    %v2764 = vld [vmem:[%s1734 + $0x8] sm:$0xff]
    %v2765 = vld [vmem:[%s1734 + $0x14] sm:$0xff]
    %v2766 = vld [vmem:[%s1734 + $0x1c] sm:$0xff]
    %2771 = vrot.lane.b32.xlu0 %v2763, 37
    %v2772 = vpop.permute.xlu0 %2771
    %2773 = vrot.lane.b32.xlu0 %v2764, 37
    %v2774 = vpop.permute.xlu0 %2773
    %2775 = vrot.lane.b32.xlu0 %v2765, 37
    %v2776 = vpop.permute.xlu0 %2775
    %2777 = vrot.lane.b32.xlu0 %v2766, 37
    %v2778 = vpop.permute.xlu0 %2777
    %v2779 = vrot.slane %v2772, 4
    %v2780 = vrot.slane %v2774, 4
    %v2781 = vrot.slane %v2776, 4
    %v2782 = vrot.slane %v2778, 4
    %v2783 = vsel %vm76, %v2779, %v2780
    %v2784 = vsel %vm1128, %v2772, %v2783
    %v2785 = vsel %vm1128, %v2774, %v2780
    %v2786 = vsel %vm76, %v2781, %v2782
    %v2787 = vsel %vm1128, %v2776, %v2786
    %v2788 = vsel %vm1128, %v2778, %v2782
    %2793 = vst [vmem:[#allocation2 + $0x5dc] sm:$0xff] %v2784
    %2794 = vst [vmem:[#allocation2 + $0x5e4] sm:$0xf] %v2785
    %2795 = vst [vmem:[#allocation2 + $0x5f4] sm:$0xff] %v2787
    %2796 = vst [vmem:[#allocation2 + $0x5fc] sm:$0xf] %v2788
    %v2797 = vld [vmem:[%s1734] sm:$0xff]
    %v2798 = vld [vmem:[%s1734 + $0x8] sm:$0xff]
    %v2799 = vld [vmem:[%s1734 + $0x14] sm:$0xff]
    %v2800 = vld [vmem:[%s1734 + $0x1c] sm:$0xff]
    %2805 = vrot.lane.b32.xlu0 %v2797, 36
    %v2806 = vpop.permute.xlu0 %2805
    %2807 = vrot.lane.b32.xlu0 %v2798, 36
    %v2808 = vpop.permute.xlu0 %2807
    %2809 = vrot.lane.b32.xlu0 %v2799, 36
    %v2810 = vpop.permute.xlu0 %2809
    %2811 = vrot.lane.b32.xlu0 %v2800, 36
    %v2812 = vpop.permute.xlu0 %2811
    %v2813 = vrot.slane %v2806, 4
    %v2814 = vrot.slane %v2808, 4
    %v2815 = vrot.slane %v2810, 4
    %v2816 = vrot.slane %v2812, 4
    %v2817 = vsel %vm76, %v2813, %v2814
    %v2818 = vsel %vm1163, %v2806, %v2817
    %v2819 = vsel %vm1163, %v2808, %v2814
    %v2820 = vsel %vm76, %v2815, %v2816
    %v2821 = vsel %vm1163, %v2810, %v2820
    %v2822 = vsel %vm1163, %v2812, %v2816
    %2827 = vst [vmem:[#allocation2 + $0x60c] sm:$0xff] %v2818
    %2828 = vst [vmem:[#allocation2 + $0x614] sm:$0xf] %v2819
    %2829 = vst [vmem:[#allocation2 + $0x624] sm:$0xff] %v2821
    %2830 = vst [vmem:[#allocation2 + $0x62c] sm:$0xf] %v2822
    %v2831 = vld [vmem:[%s1734] sm:$0xff]
    %v2832 = vld [vmem:[%s1734 + $0x8] sm:$0xff]
    %v2833 = vld [vmem:[%s1734 + $0x14] sm:$0xff]
    %v2834 = vld [vmem:[%s1734 + $0x1c] sm:$0xff]
    %2839 = vrot.lane.b32.xlu0 %v2831, 35
    %v2840 = vpop.permute.xlu0 %2839
    %2841 = vrot.lane.b32.xlu0 %v2832, 35
    %v2842 = vpop.permute.xlu0 %2841
    %2843 = vrot.lane.b32.xlu0 %v2833, 35
    %v2844 = vpop.permute.xlu0 %2843
    %2845 = vrot.lane.b32.xlu0 %v2834, 35
    %v2846 = vpop.permute.xlu0 %2845
    %v2847 = vrot.slane %v2840, 4
    %v2848 = vrot.slane %v2842, 4
    %v2849 = vrot.slane %v2844, 4
    %v2850 = vrot.slane %v2846, 4
    %v2851 = vsel %vm76, %v2847, %v2848
    %v2852 = vsel %vm1198, %v2840, %v2851
    %v2853 = vsel %vm1198, %v2842, %v2848
    %v2854 = vsel %vm76, %v2849, %v2850
    %v2855 = vsel %vm1198, %v2844, %v2854
    %v2856 = vsel %vm1198, %v2846, %v2850
    %2861 = vst [vmem:[#allocation2 + $0x63c] sm:$0xff] %v2852
    %2862 = vst [vmem:[#allocation2 + $0x644] sm:$0xf] %v2853
    %2863 = vst [vmem:[#allocation2 + $0x654] sm:$0xff] %v2855
    %2864 = vst [vmem:[#allocation2 + $0x65c] sm:$0xf] %v2856
    %v2865 = vld [vmem:[%s1734] sm:$0xff]
    %v2866 = vld [vmem:[%s1734 + $0x8] sm:$0xff]
    %v2867 = vld [vmem:[%s1734 + $0x14] sm:$0xff]
    %v2868 = vld [vmem:[%s1734 + $0x1c] sm:$0xff]
    %2873 = vrot.lane.b32.xlu0 %v2865, 34
    %v2874 = vpop.permute.xlu0 %2873
    %2875 = vrot.lane.b32.xlu0 %v2866, 34
    %v2876 = vpop.permute.xlu0 %2875
    %2877 = vrot.lane.b32.xlu0 %v2867, 34
    %v2878 = vpop.permute.xlu0 %2877
    %2879 = vrot.lane.b32.xlu0 %v2868, 34
    %v2880 = vpop.permute.xlu0 %2879
    %v2881 = vrot.slane %v2874, 4
    %v2882 = vrot.slane %v2876, 4
    %v2883 = vrot.slane %v2878, 4
    %v2884 = vrot.slane %v2880, 4
    %v2885 = vsel %vm76, %v2881, %v2882
    %v2886 = vsel %vm1233, %v2874, %v2885
    %v2887 = vsel %vm1233, %v2876, %v2882
    %v2888 = vsel %vm76, %v2883, %v2884
    %v2889 = vsel %vm1233, %v2878, %v2888
    %v2890 = vsel %vm1233, %v2880, %v2884
    %2895 = vst [vmem:[#allocation2 + $0x66c] sm:$0xff] %v2886
    %2896 = vst [vmem:[#allocation2 + $0x674] sm:$0xf] %v2887
    %2897 = vst [vmem:[#allocation2 + $0x684] sm:$0xff] %v2889
    %2898 = vst [vmem:[#allocation2 + $0x68c] sm:$0xf] %v2890
    %v2899 = vld [vmem:[%s1734] sm:$0xff]
    %v2900 = vld [vmem:[%s1734 + $0x8] sm:$0xff]
    %v2901 = vld [vmem:[%s1734 + $0x14] sm:$0xff]
    %v2902 = vld [vmem:[%s1734 + $0x1c] sm:$0xff]
    %2907 = vrot.lane.b32.xlu0 %v2899, 18
    %v2908 = vpop.permute.xlu0 %2907
    %2909 = vrot.lane.b32.xlu0 %v2900, 18
    %v2910 = vpop.permute.xlu0 %2909
    %2911 = vrot.lane.b32.xlu0 %v2901, 18
    %v2912 = vpop.permute.xlu0 %2911
    %2913 = vrot.lane.b32.xlu0 %v2902, 18
    %v2914 = vpop.permute.xlu0 %2913
    %v2915 = vrot.slane %v2908, 4
    %v2916 = vrot.slane %v2910, 4
    %v2917 = vrot.slane %v2912, 4
    %v2918 = vrot.slane %v2914, 4
    %v2919 = vsel %vm76, %v2915, %v2916
    %v2920 = vsel %vm1268, %v2908, %v2919
    %v2921 = vsel %vm1268, %v2910, %v2916
    %v2922 = vsel %vm76, %v2917, %v2918
    %v2923 = vsel %vm1268, %v2912, %v2922
    %v2924 = vsel %vm1268, %v2914, %v2918
    %2929 = vst [vmem:[#allocation2 + $0x69c] sm:$0xff] %v2920
    %2930 = vst [vmem:[#allocation2 + $0x6a4] sm:$0xf] %v2921
    %2931 = vst [vmem:[#allocation2 + $0x6b4] sm:$0xff] %v2923
    %2932 = vst [vmem:[#allocation2 + $0x6bc] sm:$0xf] %v2924
    %v2933 = vld [vmem:[%s1734] sm:$0xff]
    %v2934 = vld [vmem:[%s1734 + $0x8] sm:$0xff]
    %v2935 = vld [vmem:[%s1734 + $0x14] sm:$0xff]
    %v2936 = vld [vmem:[%s1734 + $0x1c] sm:$0xff]
    %2941 = vrot.lane.b32.xlu0 %v2933, 17
    %v2942 = vpop.permute.xlu0 %2941
    %2943 = vrot.lane.b32.xlu0 %v2934, 17
    %v2944 = vpop.permute.xlu0 %2943
    %2945 = vrot.lane.b32.xlu0 %v2935, 17
    %v2946 = vpop.permute.xlu0 %2945
    %2947 = vrot.lane.b32.xlu0 %v2936, 17
    %v2948 = vpop.permute.xlu0 %2947
    %v2949 = vrot.slane %v2942, 4
    %v2950 = vrot.slane %v2944, 4
    %v2951 = vrot.slane %v2946, 4
    %v2952 = vrot.slane %v2948, 4
    %v2953 = vsel %vm76, %v2949, %v2950
    %v2954 = vsel %vm1303, %v2942, %v2953
    %v2955 = vsel %vm1303, %v2944, %v2950
    %v2956 = vsel %vm76, %v2951, %v2952
    %v2957 = vsel %vm1303, %v2946, %v2956
    %v2958 = vsel %vm1303, %v2948, %v2952
    %2963 = vst [vmem:[#allocation2 + $0x6cc] sm:$0xff] %v2954
    %2964 = vst [vmem:[#allocation2 + $0x6d4] sm:$0xf] %v2955
    %2965 = vst [vmem:[#allocation2 + $0x6e4] sm:$0xff] %v2957
    %2966 = vst [vmem:[#allocation2 + $0x6ec] sm:$0xf] %v2958
    %v2967 = vld [vmem:[%s1734] sm:$0xff]
    %v2968 = vld [vmem:[%s1734 + $0x8] sm:$0xff]
    %v2969 = vld [vmem:[%s1734 + $0x14] sm:$0xff]
    %v2970 = vld [vmem:[%s1734 + $0x1c] sm:$0xff]
    %2975 = vrot.lane.b32.xlu0 %v2967, 16
    %v2976 = vpop.permute.xlu0 %2975
    %2977 = vrot.lane.b32.xlu0 %v2968, 16
    %v2978 = vpop.permute.xlu0 %2977
    %2979 = vrot.lane.b32.xlu0 %v2969, 16
    %v2980 = vpop.permute.xlu0 %2979
    %2981 = vrot.lane.b32.xlu0 %v2970, 16
    %v2982 = vpop.permute.xlu0 %2981
    %v2983 = vrot.slane %v2976, 4
    %v2984 = vrot.slane %v2978, 4
    %v2985 = vrot.slane %v2980, 4
    %v2986 = vrot.slane %v2982, 4
    %v2987 = vsel %vm76, %v2983, %v2984
    %v2988 = vsel %vm1338, %v2976, %v2987
    %v2989 = vsel %vm1338, %v2978, %v2984
    %v2990 = vsel %vm76, %v2985, %v2986
    %v2991 = vsel %vm1338, %v2980, %v2990
    %v2992 = vsel %vm1338, %v2982, %v2986
    %2997 = vst [vmem:[#allocation2 + $0x6fc] sm:$0xff] %v2988
    %2998 = vst [vmem:[#allocation2 + $0x704] sm:$0xf] %v2989
    %2999 = vst [vmem:[#allocation2 + $0x714] sm:$0xff] %v2991
    %3000 = vst [vmem:[#allocation2 + $0x71c] sm:$0xf] %v2992
    %v3001 = vld [vmem:[%s1734] sm:$0xff]
    %v3002 = vld [vmem:[%s1734 + $0x8] sm:$0xff]
    %v3003 = vld [vmem:[%s1734 + $0x14] sm:$0xff]
    %v3004 = vld [vmem:[%s1734 + $0x1c] sm:$0xff]
    %3009 = vrot.lane.b32.xlu0 %v3001, 15
    %v3010 = vpop.permute.xlu0 %3009
    %3011 = vrot.lane.b32.xlu0 %v3002, 15
    %v3012 = vpop.permute.xlu0 %3011
    %3013 = vrot.lane.b32.xlu0 %v3003, 15
    %v3014 = vpop.permute.xlu0 %3013
    %3015 = vrot.lane.b32.xlu0 %v3004, 15
    %v3016 = vpop.permute.xlu0 %3015
    %v3017 = vrot.slane %v3010, 4
    %v3018 = vrot.slane %v3012, 4
    %v3019 = vrot.slane %v3014, 4
    %v3020 = vrot.slane %v3016, 4
    %v3021 = vsel %vm76, %v3017, %v3018
    %v3022 = vsel %vm1373, %v3010, %v3021
    %v3023 = vsel %vm1373, %v3012, %v3018
    %v3024 = vsel %vm76, %v3019, %v3020
    %v3025 = vsel %vm1373, %v3014, %v3024
    %v3026 = vsel %vm1373, %v3016, %v3020
    %3031 = vst [vmem:[#allocation2 + $0x72c] sm:$0xff] %v3022
    %3032 = vst [vmem:[#allocation2 + $0x734] sm:$0xf] %v3023
    %3033 = vst [vmem:[#allocation2 + $0x744] sm:$0xff] %v3025
    %3034 = vst [vmem:[#allocation2 + $0x74c] sm:$0xf] %v3026
    %v3035 = vld [vmem:[%s1734] sm:$0xff]
    %v3036 = vld [vmem:[%s1734 + $0x8] sm:$0xff]
    %v3037 = vld [vmem:[%s1734 + $0x14] sm:$0xff]
    %v3038 = vld [vmem:[%s1734 + $0x1c] sm:$0xff]
    %3043 = vrot.lane.b32.xlu0 %v3035, 14
    %v3044 = vpop.permute.xlu0 %3043
    %3045 = vrot.lane.b32.xlu0 %v3036, 14
    %v3046 = vpop.permute.xlu0 %3045
    %3047 = vrot.lane.b32.xlu0 %v3037, 14
    %v3048 = vpop.permute.xlu0 %3047
    %3049 = vrot.lane.b32.xlu0 %v3038, 14
    %v3050 = vpop.permute.xlu0 %3049
    %v3051 = vrot.slane %v3044, 4
    %v3052 = vrot.slane %v3046, 4
    %v3053 = vrot.slane %v3048, 4
    %v3054 = vrot.slane %v3050, 4
    %v3055 = vsel %vm76, %v3051, %v3052
    %v3056 = vsel %vm1408, %v3044, %v3055
    %v3057 = vsel %vm1408, %v3046, %v3052
    %v3058 = vsel %vm76, %v3053, %v3054
    %v3059 = vsel %vm1408, %v3048, %v3058
    %v3060 = vsel %vm1408, %v3050, %v3054
    %3065 = vst [vmem:[#allocation2 + $0x75c] sm:$0xff] %v3056
    %3066 = vst [vmem:[#allocation2 + $0x764] sm:$0xf] %v3057
    %3067 = vst [vmem:[#allocation2 + $0x774] sm:$0xff] %v3059
    %3068 = vst [vmem:[#allocation2 + $0x77c] sm:$0xf] %v3060
    %v3069 = vld [vmem:[%s1734] sm:$0xff]
    %v3070 = vld [vmem:[%s1734 + $0x8] sm:$0xff]
    %v3071 = vld [vmem:[%s1734 + $0x14] sm:$0xff]
    %v3072 = vld [vmem:[%s1734 + $0x1c] sm:$0xff]
    %3077 = vrot.lane.b32.xlu0 %v3069, 13
    %v3078 = vpop.permute.xlu0 %3077
    %3079 = vrot.lane.b32.xlu0 %v3070, 13
    %v3080 = vpop.permute.xlu0 %3079
    %3081 = vrot.lane.b32.xlu0 %v3071, 13
    %v3082 = vpop.permute.xlu0 %3081
    %3083 = vrot.lane.b32.xlu0 %v3072, 13
    %v3084 = vpop.permute.xlu0 %3083
    %v3085 = vrot.slane %v3078, 4
    %v3086 = vrot.slane %v3080, 4
    %v3087 = vrot.slane %v3082, 4
    %v3088 = vrot.slane %v3084, 4
    %v3089 = vsel %vm76, %v3085, %v3086
    %v3090 = vsel %vm1443, %v3078, %v3089
    %v3091 = vsel %vm1443, %v3080, %v3086
    %v3092 = vsel %vm76, %v3087, %v3088
    %v3093 = vsel %vm1443, %v3082, %v3092
    %v3094 = vsel %vm1443, %v3084, %v3088
    %3099 = vst [vmem:[#allocation2 + $0x78c] sm:$0xff] %v3090
    %3100 = vst [vmem:[#allocation2 + $0x794] sm:$0xf] %v3091
    %3101 = vst [vmem:[#allocation2 + $0x7a4] sm:$0xff] %v3093
    %3102 = vst [vmem:[#allocation2 + $0x7ac] sm:$0xf] %v3094
    %v3103 = vld [vmem:[%s1734] sm:$0xff]
    %v3104 = vld [vmem:[%s1734 + $0x8] sm:$0xff]
    %v3105 = vld [vmem:[%s1734 + $0x14] sm:$0xff]
    %v3106 = vld [vmem:[%s1734 + $0x1c] sm:$0xff]
    %3111 = vrot.lane.b32.xlu0 %v3103, 12
    %v3112 = vpop.permute.xlu0 %3111
    %3113 = vrot.lane.b32.xlu0 %v3104, 12
    %v3114 = vpop.permute.xlu0 %3113
    %3115 = vrot.lane.b32.xlu0 %v3105, 12
    %v3116 = vpop.permute.xlu0 %3115
    %3117 = vrot.lane.b32.xlu0 %v3106, 12
    %v3118 = vpop.permute.xlu0 %3117
    %v3119 = vrot.slane %v3112, 4
    %v3120 = vrot.slane %v3114, 4
    %v3121 = vrot.slane %v3116, 4
    %v3122 = vrot.slane %v3118, 4
    %v3123 = vsel %vm76, %v3119, %v3120
    %v3124 = vsel %vm1478, %v3112, %v3123
    %v3125 = vsel %vm1478, %v3114, %v3120
    %v3126 = vsel %vm76, %v3121, %v3122
    %v3127 = vsel %vm1478, %v3116, %v3126
    %v3128 = vsel %vm1478, %v3118, %v3122
    %3133 = vst [vmem:[#allocation2 + $0x7bc] sm:$0xff] %v3124
    %3134 = vst [vmem:[#allocation2 + $0x7c4] sm:$0xf] %v3125
    %3135 = vst [vmem:[#allocation2 + $0x7d4] sm:$0xff] %v3127
    %3136 = vst [vmem:[#allocation2 + $0x7dc] sm:$0xf] %v3128
    %v3137 = vld [vmem:[%s1734 + $0x4] sm:$0xff]
    %v3138 = vld [vmem:[%s1734 + $0xc] sm:$0xff]
    %v3139 = vld [vmem:[%s1734 + $0x18] sm:$0xff]
    %v3140 = vld [vmem:[%s1734 + $0x20] sm:$0xff]
    %3145 = vrot.lane.b32.xlu0 %v3137, 124
    %v3146 = vpop.permute.xlu0 %3145
    %3147 = vrot.lane.b32.xlu0 %v3138, 124
    %v3148 = vpop.permute.xlu0 %3147
    %3149 = vrot.lane.b32.xlu0 %v3139, 124
    %v3150 = vpop.permute.xlu0 %3149
    %3151 = vrot.lane.b32.xlu0 %v3140, 124
    %v3152 = vpop.permute.xlu0 %3151
    %v3153 = vrot.slane %v3146, 4
    %v3154 = vrot.slane %v3148, 4
    %v3155 = vrot.slane %v3150, 4
    %v3156 = vrot.slane %v3152, 4
    %v3157 = vsel %vm76, %v3153, %v3154
    %v3158 = vsel %vm183, %v3146, %v3157
    %v3159 = vsel %vm183, %v3148, %v3154
    %v3160 = vsel %vm76, %v3155, %v3156
    %v3161 = vsel %vm183, %v3150, %v3160
    %v3162 = vsel %vm183, %v3152, %v3156
    %3167 = vst [vmem:[#allocation2 + $0x7ec] sm:$0xff] %v3158
    %3168 = vst [vmem:[#allocation2 + $0x7f4] sm:$0xf] %v3159
    %3169 = vst [vmem:[#allocation2 + $0x804] sm:$0xff] %v3161
    %3170 = vst [vmem:[#allocation2 + $0x80c] sm:$0xf] %v3162
    %v3171 = vld [vmem:[%s1734 + $0x4] sm:$0xff]
    %v3172 = vld [vmem:[%s1734 + $0xc] sm:$0xff]
    %v3173 = vld [vmem:[%s1734 + $0x18] sm:$0xff]
    %v3174 = vld [vmem:[%s1734 + $0x20] sm:$0xff]
    %3179 = vrot.lane.b32.xlu0 %v3171, 123
    %v3180 = vpop.permute.xlu0 %3179
    %3181 = vrot.lane.b32.xlu0 %v3172, 123
    %v3182 = vpop.permute.xlu0 %3181
    %3183 = vrot.lane.b32.xlu0 %v3173, 123
    %v3184 = vpop.permute.xlu0 %3183
    %3185 = vrot.lane.b32.xlu0 %v3174, 123
    %v3186 = vpop.permute.xlu0 %3185
    %v3187 = vrot.slane %v3180, 4
    %v3188 = vrot.slane %v3182, 4
    %v3189 = vrot.slane %v3184, 4
    %v3190 = vrot.slane %v3186, 4
    %v3191 = vsel %vm76, %v3187, %v3188
    %v3192 = vsel %vm218, %v3180, %v3191
    %v3193 = vsel %vm218, %v3182, %v3188
    %v3194 = vsel %vm76, %v3189, %v3190
    %v3195 = vsel %vm218, %v3184, %v3194
    %v3196 = vsel %vm218, %v3186, %v3190
    %3201 = vst [vmem:[#allocation2 + $0x81c] sm:$0xff] %v3192
    %3202 = vst [vmem:[#allocation2 + $0x824] sm:$0xf] %v3193
    %3203 = vst [vmem:[#allocation2 + $0x834] sm:$0xff] %v3195
    %3204 = vst [vmem:[#allocation2 + $0x83c] sm:$0xf] %v3196
    %v3205 = vld [vmem:[%s1734 + $0x4] sm:$0xff]
    %v3206 = vld [vmem:[%s1734 + $0xc] sm:$0xff]
    %v3207 = vld [vmem:[%s1734 + $0x18] sm:$0xff]
    %v3208 = vld [vmem:[%s1734 + $0x20] sm:$0xff]
    %3213 = vrot.lane.b32.xlu0 %v3205, 122
    %v3214 = vpop.permute.xlu0 %3213
    %3215 = vrot.lane.b32.xlu0 %v3206, 122
    %v3216 = vpop.permute.xlu0 %3215
    %3217 = vrot.lane.b32.xlu0 %v3207, 122
    %v3218 = vpop.permute.xlu0 %3217
    %3219 = vrot.lane.b32.xlu0 %v3208, 122
    %v3220 = vpop.permute.xlu0 %3219
    %v3221 = vrot.slane %v3214, 4
    %v3222 = vrot.slane %v3216, 4
    %v3223 = vrot.slane %v3218, 4
    %v3224 = vrot.slane %v3220, 4
    %v3225 = vsel %vm76, %v3221, %v3222
    %v3226 = vsel %vm253, %v3214, %v3225
    %v3227 = vsel %vm253, %v3216, %v3222
    %v3228 = vsel %vm76, %v3223, %v3224
    %v3229 = vsel %vm253, %v3218, %v3228
    %v3230 = vsel %vm253, %v3220, %v3224
    %3235 = vst [vmem:[#allocation2 + $0x84c] sm:$0xff] %v3226
    %3236 = vst [vmem:[#allocation2 + $0x854] sm:$0xf] %v3227
    %3237 = vst [vmem:[#allocation2 + $0x864] sm:$0xff] %v3229
    %3238 = vst [vmem:[#allocation2 + $0x86c] sm:$0xf] %v3230
    %v3239 = vld [vmem:[%s1734 + $0x4] sm:$0xff]
    %v3240 = vld [vmem:[%s1734 + $0xc] sm:$0xff]
    %v3241 = vld [vmem:[%s1734 + $0x18] sm:$0xff]
    %v3242 = vld [vmem:[%s1734 + $0x20] sm:$0xff]
    %3247 = vrot.lane.b32.xlu0 %v3239, 121
    %v3248 = vpop.permute.xlu0 %3247
    %3249 = vrot.lane.b32.xlu0 %v3240, 121
    %v3250 = vpop.permute.xlu0 %3249
    %3251 = vrot.lane.b32.xlu0 %v3241, 121
    %v3252 = vpop.permute.xlu0 %3251
    %3253 = vrot.lane.b32.xlu0 %v3242, 121
    %v3254 = vpop.permute.xlu0 %3253
    %v3255 = vrot.slane %v3248, 4
    %v3256 = vrot.slane %v3250, 4
    %v3257 = vrot.slane %v3252, 4
    %v3258 = vrot.slane %v3254, 4
    %v3259 = vsel %vm76, %v3255, %v3256
    %v3260 = vsel %vm1615, %v3248, %v3259
    %v3261 = vsel %vm1615, %v3250, %v3256
    %v3262 = vsel %vm76, %v3257, %v3258
    %v3263 = vsel %vm1615, %v3252, %v3262
    %v3264 = vsel %vm1615, %v3254, %v3258
    %3269 = vst [vmem:[#allocation2 + $0x87c] sm:$0xff] %v3260
    %3270 = vst [vmem:[#allocation2 + $0x884] sm:$0xf] %v3261
    %3271 = vst [vmem:[#allocation2 + $0x894] sm:$0xff] %v3263
    %3272 = vst [vmem:[#allocation2 + $0x89c] sm:$0xf] %v3264
    %v3273 = vld [vmem:[%s1734 + $0x4] sm:$0xff]
    %v3274 = vld [vmem:[%s1734 + $0xc] sm:$0xff]
    %v3275 = vld [vmem:[%s1734 + $0x18] sm:$0xff]
    %v3276 = vld [vmem:[%s1734 + $0x20] sm:$0xff]
    %3281 = vrot.lane.b32.xlu0 %v3273, 120
    %v3282 = vpop.permute.xlu0 %3281
    %3283 = vrot.lane.b32.xlu0 %v3274, 120
    %v3284 = vpop.permute.xlu0 %3283
    %3285 = vrot.lane.b32.xlu0 %v3275, 120
    %v3286 = vpop.permute.xlu0 %3285
    %3287 = vrot.lane.b32.xlu0 %v3276, 120
    %v3288 = vpop.permute.xlu0 %3287
    %v3289 = vrot.slane %v3282, 4
    %v3290 = vrot.slane %v3284, 4
    %v3291 = vrot.slane %v3286, 4
    %v3292 = vrot.slane %v3288, 4
    %v3293 = vsel %vm76, %v3289, %v3290
    %v3294 = vsel %vm1650, %v3282, %v3293
    %v3295 = vsel %vm1650, %v3284, %v3290
    %v3296 = vsel %vm76, %v3291, %v3292
    %v3297 = vsel %vm1650, %v3286, %v3296
    %v3298 = vsel %vm1650, %v3288, %v3292
    %3303 = vst [vmem:[#allocation2 + $0x8ac] sm:$0xff] %v3294
    %3304 = vst [vmem:[#allocation2 + $0x8b4] sm:$0xf] %v3295
    %3305 = vst [vmem:[#allocation2 + $0x8c4] sm:$0xff] %v3297
    %3306 = vst [vmem:[#allocation2 + $0x8cc] sm:$0xf] %v3298
    %v3307 = vld [vmem:[%s1734 + $0x4] sm:$0xff]
    %v3308 = vld [vmem:[%s1734 + $0xc] sm:$0xff]
    %v3309 = vld [vmem:[%s1734 + $0x18] sm:$0xff]
    %v3310 = vld [vmem:[%s1734 + $0x20] sm:$0xff]
    %3315 = vrot.lane.b32.xlu0 %v3307, 119
    %v3316 = vpop.permute.xlu0 %3315
    %3317 = vrot.lane.b32.xlu0 %v3308, 119
    %v3318 = vpop.permute.xlu0 %3317
    %3319 = vrot.lane.b32.xlu0 %v3309, 119
    %v3320 = vpop.permute.xlu0 %3319
    %3321 = vrot.lane.b32.xlu0 %v3310, 119
    %v3322 = vpop.permute.xlu0 %3321
    %v3323 = vrot.slane %v3316, 4
    %v3324 = vrot.slane %v3318, 4
    %v3325 = vrot.slane %v3320, 4
    %v3326 = vrot.slane %v3322, 4
    %v3327 = vsel %vm76, %v3323, %v3324
    %v3328 = vsel %vm1685, %v3316, %v3327
    %v3329 = vsel %vm1685, %v3318, %v3324
    %v3330 = vsel %vm76, %v3325, %v3326
    %v3331 = vsel %vm1685, %v3320, %v3330
    %v3332 = vsel %vm1685, %v3322, %v3326
    %3337 = vst [vmem:[#allocation2 + $0x8dc] sm:$0xff] %v3328
    %3338 = vst [vmem:[#allocation2 + $0x8e4] sm:$0xf] %v3329
    %3339 = vst [vmem:[#allocation2 + $0x8f4] sm:$0xff] %v3331
    %3340 = vst [vmem:[#allocation2 + $0x8fc] sm:$0xf] %v3332
    %v3341 = vld [vmem:[%s1734 + $0x4] sm:$0xff]
    %v3342 = vld [vmem:[%s1734 + $0xc] sm:$0xff]
    %v3343 = vld [vmem:[%s1734 + $0x18] sm:$0xff]
    %v3344 = vld [vmem:[%s1734 + $0x20] sm:$0xff]
    %3349 = vrot.lane.b32.xlu0 %v3341, 118
    %v3350 = vpop.permute.xlu0 %3349
    %3351 = vrot.lane.b32.xlu0 %v3342, 118
    %v3352 = vpop.permute.xlu0 %3351
    %3353 = vrot.lane.b32.xlu0 %v3343, 118
    %v3354 = vpop.permute.xlu0 %3353
    %3355 = vrot.lane.b32.xlu0 %v3344, 118
    %v3356 = vpop.permute.xlu0 %3355
    %v3357 = vrot.slane %v3350, 4
    %v3358 = vrot.slane %v3352, 4
    %v3359 = vrot.slane %v3354, 4
    %v3360 = vrot.slane %v3356, 4
    %v3361 = vsel %vm76, %v3357, %v3358
    %v3362 = vsel %vm1720, %v3350, %v3361
    %v3363 = vsel %vm1720, %v3352, %v3358
    %v3364 = vsel %vm76, %v3359, %v3360
    %v3365 = vsel %vm1720, %v3354, %v3364
    %v3366 = vsel %vm1720, %v3356, %v3360
    %3371 = vst [vmem:[#allocation2 + $0x90c] sm:$0xff] %v3362
    %3372 = vst [vmem:[#allocation2 + $0x914] sm:$0xf] %v3363
    %3373 = vst [vmem:[#allocation2 + $0x924] sm:$0xff] %v3365
    %3374 = vst [vmem:[#allocation2 + $0x92c] sm:$0xf] %v3366
    %v3375 = vld [vmem:[#allocation6] sm:$0xff]
    %v3376 = vld [vmem:[#allocation6 + $0x8] sm:$0xff]
    %v3377 = vld [vmem:[#allocation6 + $0x10] sm:$0xff]
    %v3378 = vld [vmem:[#allocation6 + $0x18] sm:$0xf]
    %v3379 = vld [vmem:[#allocation6 + $0x1c] sm:$0xff]
    %v3380 = vld [vmem:[#allocation6 + $0x24] sm:$0xff]
    %v3381 = vld [vmem:[#allocation6 + $0x2c] sm:$0xff]
    %v3382 = vld [vmem:[#allocation6 + $0x34] sm:$0xf]
    %v3383 = vld [vmem:[#allocation2] sm:$0xff]
    %v3384 = vld [vmem:[#allocation2 + $0x8] sm:$0xff]
    %v3385 = vld [vmem:[#allocation2 + $0x10] sm:$0xff]
    %v3386 = vld [vmem:[#allocation2 + $0x18] sm:$0xff]
    %v3387 = vld [vmem:[#allocation2 + $0x20] sm:$0xff]
    %v3388 = vld [vmem:[#allocation2 + $0x28] sm:$0xff]
    %v3389 = vld [vmem:[#allocation2 + $0x30] sm:$0xff]
    %v3390 = vld [vmem:[#allocation2 + $0x38] sm:$0xff]
    %v3391 = vld [vmem:[#allocation2 + $0x40] sm:$0xff]
    %v3392 = vld [vmem:[#allocation2 + $0x48] sm:$0xff]
    %v3393 = vld [vmem:[#allocation2 + $0x50] sm:$0xff]
    %v3394 = vld [vmem:[#allocation2 + $0x58] sm:$0xff]
    %v3395 = vld [vmem:[#allocation2 + $0x60] sm:$0xff]
    %v3396 = vld [vmem:[#allocation2 + $0x68] sm:$0xff]
    %v3397 = vld [vmem:[#allocation2 + $0x70] sm:$0xff]
    %v3398 = vld [vmem:[#allocation2 + $0x78] sm:$0xff]
    %v3399 = vld [vmem:[#allocation2 + $0x80] sm:$0xff]
    %v3400 = vld [vmem:[#allocation2 + $0x88] sm:$0xff]
    %v3401 = vld [vmem:[#allocation2 + $0x90] sm:$0xff]
    %v3402 = vld [vmem:[#allocation2 + $0x98] sm:$0xff]
    %v3403 = vld [vmem:[#allocation2 + $0xa0] sm:$0xff]
    %v3404 = vld [vmem:[#allocation2 + $0xa8] sm:$0xff]
    %v3405 = vld [vmem:[#allocation2 + $0xb0] sm:$0xff]
    %v3406 = vld [vmem:[#allocation2 + $0xb8] sm:$0xff]
    %v3407 = vld [vmem:[#allocation2 + $0xc0] sm:$0xff]
    %v3408 = vld [vmem:[#allocation2 + $0xc8] sm:$0xff]
    %v3409 = vld [vmem:[#allocation2 + $0xd0] sm:$0xff]
    %v3410 = vld [vmem:[#allocation2 + $0xd8] sm:$0xff]
    %v3411 = vld [vmem:[#allocation2 + $0xe0] sm:$0xff]
    %v3412 = vld [vmem:[#allocation2 + $0xe8] sm:$0xff]
    %v3413 = vld [vmem:[#allocation2 + $0xf0] sm:$0xff]
    %v3414 = vld [vmem:[#allocation2 + $0xf8] sm:$0xff]
    %v3415 = vld [vmem:[#allocation2 + $0x100] sm:$0xff]
    %v3416 = vld [vmem:[#allocation2 + $0x108] sm:$0xff]
    %v3417 = vld [vmem:[#allocation2 + $0x110] sm:$0xff]
    %v3418 = vld [vmem:[#allocation2 + $0x118] sm:$0xff]
    %v3419 = vld [vmem:[#allocation2 + $0x120] sm:$0xff]
    %v3420 = vld [vmem:[#allocation2 + $0x128] sm:$0xff]
    %v3421 = vld [vmem:[#allocation2 + $0x130] sm:$0xff]
    %v3422 = vld [vmem:[#allocation2 + $0x138] sm:$0xff]
    %v3423 = vld [vmem:[#allocation2 + $0x140] sm:$0xff]
    %v3424 = vld [vmem:[#allocation2 + $0x148] sm:$0xff]
    %v3425 = vld [vmem:[#allocation2 + $0x150] sm:$0xff]
    %v3426 = vld [vmem:[#allocation2 + $0x158] sm:$0xff]
    %v3427 = vld [vmem:[#allocation2 + $0x160] sm:$0xff]
    %v3428 = vld [vmem:[#allocation2 + $0x168] sm:$0xff]
    %v3429 = vld [vmem:[#allocation2 + $0x170] sm:$0xff]
    %v3430 = vld [vmem:[#allocation2 + $0x178] sm:$0xff]
    %v3431 = vld [vmem:[#allocation2 + $0x180] sm:$0xff]
    %v3432 = vld [vmem:[#allocation2 + $0x188] sm:$0xff]
    %v3433 = vld [vmem:[#allocation2 + $0x190] sm:$0xff]
    %v3434 = vld [vmem:[#allocation2 + $0x198] sm:$0xff]
    %v3435 = vld [vmem:[#allocation2 + $0x1a0] sm:$0xff]
    %v3436 = vld [vmem:[#allocation2 + $0x1a8] sm:$0xff]
    %v3437 = vld [vmem:[#allocation2 + $0x1b0] sm:$0xff]
    %v3438 = vld [vmem:[#allocation2 + $0x1b8] sm:$0xff]
    %v3439 = vld [vmem:[#allocation2 + $0x1c0] sm:$0xff]
    %v3440 = vld [vmem:[#allocation2 + $0x1c8] sm:$0xff]
    %v3441 = vld [vmem:[#allocation2 + $0x1d0] sm:$0xff]
    %v3442 = vld [vmem:[#allocation2 + $0x1d8] sm:$0xff]
    %v3443 = vld [vmem:[#allocation2 + $0x1e0] sm:$0xff]
    %v3444 = vld [vmem:[#allocation2 + $0x1e8] sm:$0xff]
    %v3445 = vld [vmem:[#allocation2 + $0x1f0] sm:$0xff]
    %v3446 = vld [vmem:[#allocation2 + $0x1f8] sm:$0xff]
    %v3447 = vld [vmem:[#allocation2 + $0x200] sm:$0xff]
    %v3448 = vld [vmem:[#allocation2 + $0x208] sm:$0xff]
    %v3449 = vld [vmem:[#allocation2 + $0x210] sm:$0xff]
    %v3450 = vld [vmem:[#allocation2 + $0x218] sm:$0xff]
    %v3451 = vld [vmem:[#allocation2 + $0x220] sm:$0xff]
    %v3452 = vld [vmem:[#allocation2 + $0x228] sm:$0xff]
    %v3453 = vld [vmem:[#allocation2 + $0x230] sm:$0xff]
    %v3454 = vld [vmem:[#allocation2 + $0x238] sm:$0xff]
    %v3455 = vld [vmem:[#allocation2 + $0x240] sm:$0xff]
    %v3456 = vld [vmem:[#allocation2 + $0x248] sm:$0xff]
    %v3457 = vld [vmem:[#allocation2 + $0x250] sm:$0xff]
    %v3458 = vld [vmem:[#allocation2 + $0x258] sm:$0xff]
    %v3459 = vld [vmem:[#allocation2 + $0x260] sm:$0xff]
    %v3460 = vld [vmem:[#allocation2 + $0x268] sm:$0xff]
    %v3461 = vld [vmem:[#allocation2 + $0x270] sm:$0xff]
    %v3462 = vld [vmem:[#allocation2 + $0x278] sm:$0xff]
    %v3463 = vld [vmem:[#allocation2 + $0x280] sm:$0xff]
    %v3464 = vld [vmem:[#allocation2 + $0x288] sm:$0xff]
    %v3465 = vld [vmem:[#allocation2 + $0x290] sm:$0xff]
    %v3466 = vld [vmem:[#allocation2 + $0x298] sm:$0xff]
    %v3467 = vld [vmem:[#allocation2 + $0x2a0] sm:$0xff]
    %v3468 = vld [vmem:[#allocation2 + $0x2a8] sm:$0xff]
    %v3469 = vld [vmem:[#allocation2 + $0x2b0] sm:$0xff]
    %v3470 = vld [vmem:[#allocation2 + $0x2b8] sm:$0xff]
    %v3471 = vld [vmem:[#allocation2 + $0x2c0] sm:$0xff]
    %v3472 = vld [vmem:[#allocation2 + $0x2c8] sm:$0xff]
    %v3473 = vld [vmem:[#allocation2 + $0x2d0] sm:$0xff]
    %v3474 = vld [vmem:[#allocation2 + $0x2d8] sm:$0xff]
    %v3475 = vld [vmem:[#allocation2 + $0x2e0] sm:$0xff]
    %v3476 = vld [vmem:[#allocation2 + $0x2e8] sm:$0xff]
    %v3477 = vld [vmem:[#allocation2 + $0x2f0] sm:$0xff]
    %v3478 = vld [vmem:[#allocation2 + $0x2f8] sm:$0xff]
    %v3479 = vld [vmem:[#allocation2 + $0x300] sm:$0xff]
    %v3480 = vld [vmem:[#allocation2 + $0x308] sm:$0xff]
    %v3481 = vld [vmem:[#allocation2 + $0x310] sm:$0xff]
    %v3482 = vld [vmem:[#allocation2 + $0x318] sm:$0xff]
    %v3483 = vld [vmem:[#allocation2 + $0x320] sm:$0xff]
    %v3484 = vld [vmem:[#allocation2 + $0x328] sm:$0xff]
    %v3485 = vld [vmem:[#allocation2 + $0x330] sm:$0xff]
    %v3486 = vld [vmem:[#allocation2 + $0x338] sm:$0xff]
    %v3487 = vld [vmem:[#allocation2 + $0x340] sm:$0xff]
    %v3488 = vld [vmem:[#allocation2 + $0x348] sm:$0xff]
    %v3489 = vld [vmem:[#allocation2 + $0x350] sm:$0xff]
    %v3490 = vld [vmem:[#allocation2 + $0x358] sm:$0xff]
    %v3491 = vld [vmem:[#allocation2 + $0x360] sm:$0xff]
    %v3492 = vld [vmem:[#allocation2 + $0x368] sm:$0xff]
    %v3493 = vld [vmem:[#allocation2 + $0x370] sm:$0xff]
    %v3494 = vld [vmem:[#allocation2 + $0x378] sm:$0xff]
    %v3495 = vld [vmem:[#allocation2 + $0x380] sm:$0xff]
    %v3496 = vld [vmem:[#allocation2 + $0x388] sm:$0xff]
    %v3497 = vld [vmem:[#allocation2 + $0x390] sm:$0xff]
    %v3498 = vld [vmem:[#allocation2 + $0x398] sm:$0xff]
    %v3499 = vld [vmem:[#allocation2 + $0x3a0] sm:$0xff]
    %v3500 = vld [vmem:[#allocation2 + $0x3a8] sm:$0xff]
    %v3501 = vld [vmem:[#allocation2 + $0x3b0] sm:$0xff]
    %v3502 = vld [vmem:[#allocation2 + $0x3b8] sm:$0xff]
    %v3503 = vld [vmem:[#allocation2 + $0x3c0] sm:$0xff]
    %v3504 = vld [vmem:[#allocation2 + $0x3c8] sm:$0xff]
    %v3505 = vld [vmem:[#allocation2 + $0x3d0] sm:$0xff]
    %v3506 = vld [vmem:[#allocation2 + $0x3d8] sm:$0xff]
    %v3507 = vld [vmem:[#allocation2 + $0x3e0] sm:$0xff]
    %v3508 = vld [vmem:[#allocation2 + $0x3e8] sm:$0xff]
    %v3509 = vld [vmem:[#allocation2 + $0x3f0] sm:$0xff]
    %v3510 = vld [vmem:[#allocation2 + $0x3f8] sm:$0xff]
    %v3511 = vld [vmem:[#allocation2 + $0x400] sm:$0xff]
    %v3512 = vld [vmem:[#allocation2 + $0x408] sm:$0xff]
    %v3513 = vld [vmem:[#allocation2 + $0x410] sm:$0xff]
    %v3514 = vld [vmem:[#allocation2 + $0x418] sm:$0xff]
    %v3515 = vld [vmem:[#allocation2 + $0x420] sm:$0xff]
    %v3516 = vld [vmem:[#allocation2 + $0x428] sm:$0xff]
    %v3517 = vld [vmem:[#allocation2 + $0x430] sm:$0xff]
    %v3518 = vld [vmem:[#allocation2 + $0x438] sm:$0xff]
    %v3519 = vld [vmem:[#allocation2 + $0x440] sm:$0xff]
    %v3520 = vld [vmem:[#allocation2 + $0x448] sm:$0xff]
    %v3521 = vld [vmem:[#allocation2 + $0x450] sm:$0xff]
    %v3522 = vld [vmem:[#allocation2 + $0x458] sm:$0xff]
    %v3523 = vld [vmem:[#allocation2 + $0x460] sm:$0xff]
    %v3524 = vld [vmem:[#allocation2 + $0x468] sm:$0xff]
    %v3525 = vld [vmem:[#allocation2 + $0x470] sm:$0xff]
    %v3526 = vld [vmem:[#allocation2 + $0x478] sm:$0xff]
    %v3527 = vld [vmem:[#allocation2 + $0x480] sm:$0xff]
    %v3528 = vld [vmem:[#allocation2 + $0x488] sm:$0xff]
    %v3529 = vld [vmem:[#allocation2 + $0x490] sm:$0xff]
    %v3530 = vld [vmem:[#allocation2 + $0x498] sm:$0xff]
    %v3531 = vld [vmem:[#allocation2 + $0x4a0] sm:$0xff]
    %v3532 = vld [vmem:[#allocation2 + $0x4a8] sm:$0xff]
    %v3533 = vld [vmem:[#allocation2 + $0x4b0] sm:$0xff]
    %v3534 = vld [vmem:[#allocation2 + $0x4b8] sm:$0xff]
    %v3535 = vld [vmem:[#allocation2 + $0x4c0] sm:$0xff]
    %v3536 = vld [vmem:[#allocation2 + $0x4c8] sm:$0xff]
    %v3537 = vld [vmem:[#allocation2 + $0x4d0] sm:$0xff]
    %v3538 = vld [vmem:[#allocation2 + $0x4d8] sm:$0xff]
    %v3539 = vld [vmem:[#allocation2 + $0x4e0] sm:$0xff]
    %v3540 = vld [vmem:[#allocation2 + $0x4e8] sm:$0xff]
    %v3541 = vld [vmem:[#allocation2 + $0x4f0] sm:$0xff]
    %v3542 = vld [vmem:[#allocation2 + $0x4f8] sm:$0xff]
    %v3543 = vld [vmem:[#allocation2 + $0x500] sm:$0xff]
    %v3544 = vld [vmem:[#allocation2 + $0x508] sm:$0xff]
    %v3545 = vld [vmem:[#allocation2 + $0x510] sm:$0xff]
    %v3546 = vld [vmem:[#allocation2 + $0x518] sm:$0xff]
    %v3547 = vld [vmem:[#allocation2 + $0x520] sm:$0xff]
    %v3548 = vld [vmem:[#allocation2 + $0x528] sm:$0xff]
    %v3549 = vld [vmem:[#allocation2 + $0x530] sm:$0xff]
    %v3550 = vld [vmem:[#allocation2 + $0x538] sm:$0xff]
    %v3551 = vld [vmem:[#allocation2 + $0x540] sm:$0xff]
    %v3552 = vld [vmem:[#allocation2 + $0x548] sm:$0xff]
    %v3553 = vld [vmem:[#allocation2 + $0x550] sm:$0xff]
    %v3554 = vld [vmem:[#allocation2 + $0x558] sm:$0xff]
    %v3555 = vld [vmem:[#allocation2 + $0x560] sm:$0xff]
    %v3556 = vld [vmem:[#allocation2 + $0x568] sm:$0xff]
    %v3557 = vld [vmem:[#allocation2 + $0x570] sm:$0xff]
    %v3558 = vld [vmem:[#allocation2 + $0x578] sm:$0xff]
    %v3559 = vld [vmem:[#allocation2 + $0x580] sm:$0xff]
    %v3560 = vld [vmem:[#allocation2 + $0x588] sm:$0xff]
    %v3561 = vld [vmem:[#allocation2 + $0x590] sm:$0xff]
    %v3562 = vld [vmem:[#allocation2 + $0x598] sm:$0xff]
    %v3563 = vld [vmem:[#allocation2 + $0x5a0] sm:$0xff]
    %v3564 = vld [vmem:[#allocation2 + $0x5a8] sm:$0xff]
    %v3565 = vld [vmem:[#allocation2 + $0x5b0] sm:$0xff]
    %v3566 = vld [vmem:[#allocation2 + $0x5b8] sm:$0xff]
    %v3567 = vld [vmem:[#allocation2 + $0x5c0] sm:$0xff]
    %v3568 = vld [vmem:[#allocation2 + $0x5c8] sm:$0xff]
    %v3569 = vld [vmem:[#allocation2 + $0x5d0] sm:$0xff]
    %v3570 = vld [vmem:[#allocation2 + $0x5d8] sm:$0xff]
    %v3571 = vld [vmem:[#allocation2 + $0x5e0] sm:$0xff]
    %v3572 = vld [vmem:[#allocation2 + $0x5e8] sm:$0xff]
    %v3573 = vld [vmem:[#allocation2 + $0x5f0] sm:$0xff]
    %v3574 = vld [vmem:[#allocation2 + $0x5f8] sm:$0xff]
    %v3575 = vld [vmem:[#allocation2 + $0x600] sm:$0xff]
    %v3576 = vld [vmem:[#allocation2 + $0x608] sm:$0xff]
    %v3577 = vld [vmem:[#allocation2 + $0x610] sm:$0xff]
    %v3578 = vld [vmem:[#allocation2 + $0x618] sm:$0xff]
    %v3579 = vld [vmem:[#allocation2 + $0x620] sm:$0xff]
    %v3580 = vld [vmem:[#allocation2 + $0x628] sm:$0xff]
    %v3581 = vld [vmem:[#allocation2 + $0x630] sm:$0xff]
    %v3582 = vld [vmem:[#allocation2 + $0x638] sm:$0xff]
    %v3583 = vld [vmem:[#allocation2 + $0x640] sm:$0xff]
    %v3584 = vld [vmem:[#allocation2 + $0x648] sm:$0xff]
    %v3585 = vld [vmem:[#allocation2 + $0x650] sm:$0xff]
    %v3586 = vld [vmem:[#allocation2 + $0x658] sm:$0xff]
    %v3587 = vld [vmem:[#allocation2 + $0x660] sm:$0xff]
    %v3588 = vld [vmem:[#allocation2 + $0x668] sm:$0xff]
    %v3589 = vld [vmem:[#allocation2 + $0x670] sm:$0xff]
    %v3590 = vld [vmem:[#allocation2 + $0x678] sm:$0xff]
    %v3591 = vld [vmem:[#allocation2 + $0x680] sm:$0xff]
    %v3592 = vld [vmem:[#allocation2 + $0x688] sm:$0xff]
    %v3593 = vld [vmem:[#allocation2 + $0x690] sm:$0xff]
    %v3594 = vld [vmem:[#allocation2 + $0x698] sm:$0xff]
    %v3595 = vld [vmem:[#allocation2 + $0x6a0] sm:$0xff]
    %v3596 = vld [vmem:[#allocation2 + $0x6a8] sm:$0xff]
    %v3597 = vld [vmem:[#allocation2 + $0x6b0] sm:$0xff]
    %v3598 = vld [vmem:[#allocation2 + $0x6b8] sm:$0xff]
    %v3599 = vld [vmem:[#allocation2 + $0x6c0] sm:$0xff]
    %v3600 = vld [vmem:[#allocation2 + $0x6c8] sm:$0xff]
    %v3601 = vld [vmem:[#allocation2 + $0x6d0] sm:$0xff]
    %v3602 = vld [vmem:[#allocation2 + $0x6d8] sm:$0xff]
    %v3603 = vld [vmem:[#allocation2 + $0x6e0] sm:$0xff]
    %v3604 = vld [vmem:[#allocation2 + $0x6e8] sm:$0xff]
    %v3605 = vld [vmem:[#allocation2 + $0x6f0] sm:$0xff]
    %v3606 = vld [vmem:[#allocation2 + $0x6f8] sm:$0xff]
    %v3607 = vld [vmem:[#allocation2 + $0x700] sm:$0xff]
    %v3608 = vld [vmem:[#allocation2 + $0x708] sm:$0xff]
    %v3609 = vld [vmem:[#allocation2 + $0x710] sm:$0xff]
    %v3610 = vld [vmem:[#allocation2 + $0x718] sm:$0xff]
    %v3611 = vld [vmem:[#allocation2 + $0x720] sm:$0xff]
    %v3612 = vld [vmem:[#allocation2 + $0x728] sm:$0xff]
    %v3613 = vld [vmem:[#allocation2 + $0x730] sm:$0xff]
    %v3614 = vld [vmem:[#allocation2 + $0x738] sm:$0xff]
    %v3615 = vld [vmem:[#allocation2 + $0x740] sm:$0xff]
    %v3616 = vld [vmem:[#allocation2 + $0x748] sm:$0xff]
    %v3617 = vld [vmem:[#allocation2 + $0x750] sm:$0xff]
    %v3618 = vld [vmem:[#allocation2 + $0x758] sm:$0xff]
    %v3619 = vld [vmem:[#allocation2 + $0x760] sm:$0xff]
    %v3620 = vld [vmem:[#allocation2 + $0x768] sm:$0xff]
    %v3621 = vld [vmem:[#allocation2 + $0x770] sm:$0xff]
    %v3622 = vld [vmem:[#allocation2 + $0x778] sm:$0xff]
    %v3623 = vld [vmem:[#allocation2 + $0x780] sm:$0xff]
    %v3624 = vld [vmem:[#allocation2 + $0x788] sm:$0xff]
    %v3625 = vld [vmem:[#allocation2 + $0x790] sm:$0xff]
    %v3626 = vld [vmem:[#allocation2 + $0x798] sm:$0xff]
    %v3627 = vld [vmem:[#allocation2 + $0x7a0] sm:$0xff]
    %v3628 = vld [vmem:[#allocation2 + $0x7a8] sm:$0xff]
    %v3629 = vld [vmem:[#allocation2 + $0x7b0] sm:$0xff]
    %v3630 = vld [vmem:[#allocation2 + $0x7b8] sm:$0xff]
    %v3631 = vld [vmem:[#allocation2 + $0x7c0] sm:$0xff]
    %v3632 = vld [vmem:[#allocation2 + $0x7c8] sm:$0xff]
    %v3633 = vld [vmem:[#allocation2 + $0x7d0] sm:$0xff]
    %v3634 = vld [vmem:[#allocation2 + $0x7d8] sm:$0xff]
    %v3635 = vld [vmem:[#allocation2 + $0x7e0] sm:$0xff]
    %v3636 = vld [vmem:[#allocation2 + $0x7e8] sm:$0xff]
    %v3637 = vld [vmem:[#allocation2 + $0x7f0] sm:$0xff]
    %v3638 = vld [vmem:[#allocation2 + $0x7f8] sm:$0xff]
    %v3639 = vld [vmem:[#allocation2 + $0x800] sm:$0xff]
    %v3640 = vld [vmem:[#allocation2 + $0x808] sm:$0xff]
    %v3641 = vld [vmem:[#allocation2 + $0x810] sm:$0xff]
    %v3642 = vld [vmem:[#allocation2 + $0x818] sm:$0xff]
    %v3643 = vld [vmem:[#allocation2 + $0x820] sm:$0xff]
    %v3644 = vld [vmem:[#allocation2 + $0x828] sm:$0xff]
    %v3645 = vld [vmem:[#allocation2 + $0x830] sm:$0xff]
    %v3646 = vld [vmem:[#allocation2 + $0x838] sm:$0xff]
    %v3647 = vld [vmem:[#allocation2 + $0x840] sm:$0xff]
    %v3648 = vld [vmem:[#allocation2 + $0x848] sm:$0xff]
    %v3649 = vld [vmem:[#allocation2 + $0x850] sm:$0xff]
    %v3650 = vld [vmem:[#allocation2 + $0x858] sm:$0xff]
    %v3651 = vld [vmem:[#allocation2 + $0x860] sm:$0xff]
    %v3652 = vld [vmem:[#allocation2 + $0x868] sm:$0xff]
    %v3653 = vld [vmem:[#allocation2 + $0x870] sm:$0xff]
    %v3654 = vld [vmem:[#allocation2 + $0x878] sm:$0xff]
    %v3655 = vld [vmem:[#allocation2 + $0x880] sm:$0xff]
    %v3656 = vld [vmem:[#allocation2 + $0x888] sm:$0xff]
    %v3657 = vld [vmem:[#allocation2 + $0x890] sm:$0xff]
    %v3658 = vld [vmem:[#allocation2 + $0x898] sm:$0xff]
    %v3659 = vld [vmem:[#allocation2 + $0x8a0] sm:$0xff]
    %v3660 = vld [vmem:[#allocation2 + $0x8a8] sm:$0xff]
    %v3661 = vld [vmem:[#allocation2 + $0x8b0] sm:$0xff]
    %v3662 = vld [vmem:[#allocation2 + $0x8b8] sm:$0xff]
    %v3663 = vld [vmem:[#allocation2 + $0x8c0] sm:$0xff]
    %v3664 = vld [vmem:[#allocation2 + $0x8c8] sm:$0xff]
    %v3665 = vld [vmem:[#allocation2 + $0x8d0] sm:$0xff]
    %v3666 = vld [vmem:[#allocation2 + $0x8d8] sm:$0xff]
    %v3667 = vld [vmem:[#allocation2 + $0x8e0] sm:$0xff]
    %v3668 = vld [vmem:[#allocation2 + $0x8e8] sm:$0xff]
    %v3669 = vld [vmem:[#allocation2 + $0x8f0] sm:$0xff]
    %v3670 = vld [vmem:[#allocation2 + $0x8f8] sm:$0xff]
    %v3671 = vld [vmem:[#allocation2 + $0x900] sm:$0xff]
    %v3672 = vld [vmem:[#allocation2 + $0x908] sm:$0xff]
    %v3673 = vld [vmem:[#allocation2 + $0x910] sm:$0xff]
    %v3674 = vld [vmem:[#allocation2 + $0x918] sm:$0xff]
    %v3675 = vld [vmem:[#allocation2 + $0x920] sm:$0xff]
    %v3676 = vld [vmem:[#allocation2 + $0x928] sm:$0xff]
    %v3677 = vld [vmem:[%s2] sm:$0xff]
    %v3678 = vld [vmem:[%s2 + $0x8] sm:$0xff]
    %3680 = vset.pattern.permute.xlu0 0
    %3681 = vperm.xlu0 %3680, %v3677
    %v3682 = vpop.permute.xlu0 %3681
    %3685 = vset.pattern.permute.xlu0 0
    %3686 = vperm.xlu0 %3685, %v3678
    %v3687 = vpop.permute.xlu0 %3686
    %v3697 = vunpack.c.l.b16 %v3375
    %v3698 = vunpack.c.h.b16 %v3375
    %v3699 = vunpack.c.l.b16 %v3376
    %v3700 = vunpack.c.h.b16 %v3376
    %v3701 = vunpack.c.l.b16 %v3377
    %v3702 = vunpack.c.h.b16 %v3377
    %v3703 = vunpack.c.l.b16 %v3378
    %v3704 = vunpack.c.l.b16 %v3379
    %v3705 = vunpack.c.h.b16 %v3379
    %v3706 = vunpack.c.l.b16 %v3380
    %v3707 = vunpack.c.h.b16 %v3380
    %v3708 = vunpack.c.l.b16 %v3381
    %v3709 = vunpack.c.h.b16 %v3381
    %v3710 = vunpack.c.l.b16 %v3382
    %v3711 = vpack.c.b16 %v3704, %v3697
    %v3712 = vpack.c.b16 %v3705, %v3698
    %v3713 = vpack.c.b16 %v3706, %v3699
    %v3714 = vpack.c.b16 %v3707, %v3700
    %v3715 = vpack.c.b16 %v3708, %v3701
    %v3716 = vpack.c.b16 %v3709, %v3702
    %v3717 = vpack.c.b16 %v3710, %v3703
    %v4018 = vunpack.c.l.b16 %v3383
    %v4019 = vunpack.c.h.b16 %v3383
    %v4020 = vunpack.c.l.b16 %v3384
    %v4021 = vunpack.c.h.b16 %v3384
    %v4022 = vunpack.c.l.b16 %v3385
    %v4023 = vunpack.c.h.b16 %v3385
    %v4024 = vunpack.c.l.b16 %v3386
    %v4025 = vunpack.c.h.b16 %v3386
    %v4026 = vunpack.c.l.b16 %v3387
    %v4027 = vunpack.c.h.b16 %v3387
    %v4028 = vunpack.c.l.b16 %v3388
    %v4029 = vunpack.c.h.b16 %v3388
    %v4030 = vunpack.c.l.b16 %v3389
    %v4031 = vunpack.c.h.b16 %v3389
    %v4032 = vunpack.c.l.b16 %v3390
    %v4033 = vunpack.c.h.b16 %v3390
    %v4034 = vunpack.c.l.b16 %v3391
    %v4035 = vunpack.c.h.b16 %v3391
    %v4036 = vunpack.c.l.b16 %v3392
    %v4037 = vunpack.c.h.b16 %v3392
    %v4038 = vunpack.c.l.b16 %v3393
    %v4039 = vunpack.c.h.b16 %v3393
    %v4040 = vunpack.c.l.b16 %v3394
    %v4041 = vunpack.c.h.b16 %v3394
    %v4042 = vunpack.c.l.b16 %v3395
    %v4043 = vunpack.c.h.b16 %v3395
    %v4044 = vunpack.c.l.b16 %v3396
    %v4045 = vunpack.c.h.b16 %v3396
    %v4046 = vunpack.c.l.b16 %v3397
    %v4047 = vunpack.c.h.b16 %v3397
    %v4048 = vunpack.c.l.b16 %v3398
    %v4049 = vunpack.c.h.b16 %v3398
    %v4050 = vunpack.c.l.b16 %v3399
    %v4051 = vunpack.c.h.b16 %v3399
    %v4052 = vunpack.c.l.b16 %v3400
    %v4053 = vunpack.c.h.b16 %v3400
    %v4054 = vunpack.c.l.b16 %v3401
    %v4055 = vunpack.c.h.b16 %v3401
    %v4056 = vunpack.c.l.b16 %v3402
    %v4057 = vunpack.c.h.b16 %v3402
    %v4058 = vunpack.c.l.b16 %v3403
    %v4059 = vunpack.c.h.b16 %v3403
    %v4060 = vunpack.c.l.b16 %v3404
    %v4061 = vunpack.c.h.b16 %v3404
    %v4062 = vunpack.c.l.b16 %v3405
    %v4063 = vunpack.c.h.b16 %v3405
    %v4064 = vunpack.c.l.b16 %v3406
    %v4065 = vunpack.c.h.b16 %v3406
    %v4066 = vunpack.c.l.b16 %v3407
    %v4067 = vunpack.c.h.b16 %v3407
    %v4068 = vunpack.c.l.b16 %v3408
    %v4069 = vunpack.c.h.b16 %v3408
    %v4070 = vunpack.c.l.b16 %v3409
    %v4071 = vunpack.c.h.b16 %v3409
    %v4072 = vunpack.c.l.b16 %v3410
    %v4073 = vunpack.c.h.b16 %v3410
    %v4074 = vunpack.c.l.b16 %v3411
    %v4075 = vunpack.c.h.b16 %v3411
    %v4076 = vunpack.c.l.b16 %v3412
    %v4077 = vunpack.c.h.b16 %v3412
    %v4078 = vunpack.c.l.b16 %v3413
    %v4079 = vunpack.c.h.b16 %v3413
    %v4080 = vunpack.c.l.b16 %v3414
    %v4081 = vunpack.c.h.b16 %v3414
    %v4082 = vunpack.c.l.b16 %v3415
    %v4083 = vunpack.c.h.b16 %v3415
    %v4084 = vunpack.c.l.b16 %v3416
    %v4085 = vunpack.c.h.b16 %v3416
    %v4086 = vunpack.c.l.b16 %v3417
    %v4087 = vunpack.c.h.b16 %v3417
    %v4088 = vunpack.c.l.b16 %v3418
    %v4089 = vunpack.c.h.b16 %v3418
    %v4090 = vunpack.c.l.b16 %v3419
    %v4091 = vunpack.c.h.b16 %v3419
    %v4092 = vunpack.c.l.b16 %v3420
    %v4093 = vunpack.c.h.b16 %v3420
    %v4094 = vunpack.c.l.b16 %v3421
    %v4095 = vunpack.c.h.b16 %v3421
    %v4096 = vunpack.c.l.b16 %v3422
    %v4097 = vunpack.c.h.b16 %v3422
    %v4098 = vunpack.c.l.b16 %v3423
    %v4099 = vunpack.c.h.b16 %v3423
    %v4100 = vunpack.c.l.b16 %v3424
    %v4101 = vunpack.c.h.b16 %v3424
    %v4102 = vunpack.c.l.b16 %v3425
    %v4103 = vunpack.c.h.b16 %v3425
    %v4104 = vunpack.c.l.b16 %v3426
    %v4105 = vunpack.c.h.b16 %v3426
    %v4106 = vunpack.c.l.b16 %v3427
    %v4107 = vunpack.c.h.b16 %v3427
    %v4108 = vunpack.c.l.b16 %v3428
    %v4109 = vunpack.c.h.b16 %v3428
    %v4110 = vunpack.c.l.b16 %v3429
    %v4111 = vunpack.c.h.b16 %v3429
    %v4112 = vunpack.c.l.b16 %v3430
    %v4113 = vunpack.c.h.b16 %v3430
    %v4114 = vunpack.c.l.b16 %v3431
    %v4115 = vunpack.c.h.b16 %v3431
    %v4116 = vunpack.c.l.b16 %v3432
    %v4117 = vunpack.c.h.b16 %v3432
    %v4118 = vunpack.c.l.b16 %v3433
    %v4119 = vunpack.c.h.b16 %v3433
    %v4120 = vunpack.c.l.b16 %v3434
    %v4121 = vunpack.c.h.b16 %v3434
    %v4122 = vunpack.c.l.b16 %v3435
    %v4123 = vunpack.c.h.b16 %v3435
    %v4124 = vunpack.c.l.b16 %v3436
    %v4125 = vunpack.c.h.b16 %v3436
    %v4126 = vunpack.c.l.b16 %v3437
    %v4127 = vunpack.c.h.b16 %v3437
    %v4128 = vunpack.c.l.b16 %v3438
    %v4129 = vunpack.c.h.b16 %v3438
    %v4130 = vunpack.c.l.b16 %v3439
    %v4131 = vunpack.c.h.b16 %v3439
    %v4132 = vunpack.c.l.b16 %v3440
    %v4133 = vunpack.c.h.b16 %v3440
    %v4134 = vunpack.c.l.b16 %v3441
    %v4135 = vunpack.c.h.b16 %v3441
    %v4136 = vunpack.c.l.b16 %v3442
    %v4137 = vunpack.c.h.b16 %v3442
    %v4138 = vunpack.c.l.b16 %v3443
    %v4139 = vunpack.c.h.b16 %v3443
    %v4140 = vunpack.c.l.b16 %v3444
    %v4141 = vunpack.c.h.b16 %v3444
    %v4142 = vunpack.c.l.b16 %v3445
    %v4143 = vunpack.c.h.b16 %v3445
    %v4144 = vunpack.c.l.b16 %v3446
    %v4145 = vunpack.c.h.b16 %v3446
    %v4146 = vunpack.c.l.b16 %v3447
    %v4147 = vunpack.c.h.b16 %v3447
    %v4148 = vunpack.c.l.b16 %v3448
    %v4149 = vunpack.c.h.b16 %v3448
    %v4150 = vunpack.c.l.b16 %v3449
    %v4151 = vunpack.c.h.b16 %v3449
    %v4152 = vunpack.c.l.b16 %v3450
    %v4153 = vunpack.c.h.b16 %v3450
    %v4154 = vunpack.c.l.b16 %v3451
    %v4155 = vunpack.c.h.b16 %v3451
    %v4156 = vunpack.c.l.b16 %v3452
    %v4157 = vunpack.c.h.b16 %v3452
    %v4158 = vunpack.c.l.b16 %v3453
    %v4159 = vunpack.c.h.b16 %v3453
    %v4160 = vunpack.c.l.b16 %v3454
    %v4161 = vunpack.c.h.b16 %v3454
    %v4162 = vunpack.c.l.b16 %v3455
    %v4163 = vunpack.c.h.b16 %v3455
    %v4164 = vunpack.c.l.b16 %v3456
    %v4165 = vunpack.c.h.b16 %v3456
    %v4166 = vunpack.c.l.b16 %v3457
    %v4167 = vunpack.c.h.b16 %v3457
    %v4168 = vunpack.c.l.b16 %v3458
    %v4169 = vunpack.c.h.b16 %v3458
    %v4170 = vunpack.c.l.b16 %v3459
    %v4171 = vunpack.c.h.b16 %v3459
    %v4172 = vunpack.c.l.b16 %v3460
    %v4173 = vunpack.c.h.b16 %v3460
    %v4174 = vunpack.c.l.b16 %v3461
    %v4175 = vunpack.c.h.b16 %v3461
    %v4176 = vunpack.c.l.b16 %v3462
    %v4177 = vunpack.c.h.b16 %v3462
    %v4178 = vunpack.c.l.b16 %v3463
    %v4179 = vunpack.c.h.b16 %v3463
    %v4180 = vunpack.c.l.b16 %v3464
    %v4181 = vunpack.c.h.b16 %v3464
    %v4182 = vunpack.c.l.b16 %v3465
    %v4183 = vunpack.c.h.b16 %v3465
    %v4184 = vunpack.c.l.b16 %v3466
    %v4185 = vunpack.c.h.b16 %v3466
    %v4186 = vunpack.c.l.b16 %v3467
    %v4187 = vunpack.c.h.b16 %v3467
    %v4188 = vunpack.c.l.b16 %v3468
    %v4189 = vunpack.c.h.b16 %v3468
    %v4190 = vunpack.c.l.b16 %v3469
    %v4191 = vunpack.c.h.b16 %v3469
    %v4192 = vunpack.c.l.b16 %v3470
    %v4193 = vunpack.c.h.b16 %v3470
    %v4194 = vunpack.c.l.b16 %v3471
    %v4195 = vunpack.c.h.b16 %v3471
    %v4196 = vunpack.c.l.b16 %v3472
    %v4197 = vunpack.c.h.b16 %v3472
    %v4198 = vunpack.c.l.b16 %v3473
    %v4199 = vunpack.c.h.b16 %v3473
    %v4200 = vunpack.c.l.b16 %v3474
    %v4201 = vunpack.c.h.b16 %v3474
    %v4202 = vunpack.c.l.b16 %v3475
    %v4203 = vunpack.c.h.b16 %v3475
    %v4204 = vunpack.c.l.b16 %v3476
    %v4205 = vunpack.c.h.b16 %v3476
    %v4206 = vunpack.c.l.b16 %v3477
    %v4207 = vunpack.c.h.b16 %v3477
    %v4208 = vunpack.c.l.b16 %v3478
    %v4209 = vunpack.c.h.b16 %v3478
    %v4210 = vunpack.c.l.b16 %v3479
    %v4211 = vunpack.c.h.b16 %v3479
    %v4212 = vunpack.c.l.b16 %v3480
    %v4213 = vunpack.c.h.b16 %v3480
    %v4214 = vunpack.c.l.b16 %v3481
    %v4215 = vunpack.c.h.b16 %v3481
    %v4216 = vunpack.c.l.b16 %v3482
    %v4217 = vunpack.c.h.b16 %v3482
    %v4218 = vunpack.c.l.b16 %v3483
    %v4219 = vunpack.c.h.b16 %v3483
    %v4220 = vunpack.c.l.b16 %v3484
    %v4221 = vunpack.c.h.b16 %v3484
    %v4222 = vunpack.c.l.b16 %v3485
    %v4223 = vunpack.c.h.b16 %v3485
    %v4224 = vunpack.c.l.b16 %v3486
    %v4225 = vunpack.c.h.b16 %v3486
    %v4226 = vunpack.c.l.b16 %v3487
    %v4227 = vunpack.c.h.b16 %v3487
    %v4228 = vunpack.c.l.b16 %v3488
    %v4229 = vunpack.c.h.b16 %v3488
    %v4230 = vunpack.c.l.b16 %v3489
    %v4231 = vunpack.c.h.b16 %v3489
    %v4232 = vunpack.c.l.b16 %v3490
    %v4233 = vunpack.c.h.b16 %v3490
    %v4234 = vunpack.c.l.b16 %v3491
    %v4235 = vunpack.c.h.b16 %v3491
    %v4236 = vunpack.c.l.b16 %v3492
    %v4237 = vunpack.c.h.b16 %v3492
    %v4238 = vunpack.c.l.b16 %v3493
    %v4239 = vunpack.c.h.b16 %v3493
    %v4240 = vunpack.c.l.b16 %v3494
    %v4241 = vunpack.c.h.b16 %v3494
    %v4242 = vunpack.c.l.b16 %v3495
    %v4243 = vunpack.c.h.b16 %v3495
    %v4244 = vunpack.c.l.b16 %v3496
    %v4245 = vunpack.c.h.b16 %v3496
    %v4246 = vunpack.c.l.b16 %v3497
    %v4247 = vunpack.c.h.b16 %v3497
    %v4248 = vunpack.c.l.b16 %v3498
    %v4249 = vunpack.c.h.b16 %v3498
    %v4250 = vunpack.c.l.b16 %v3499
    %v4251 = vunpack.c.h.b16 %v3499
    %v4252 = vunpack.c.l.b16 %v3500
    %v4253 = vunpack.c.h.b16 %v3500
    %v4254 = vunpack.c.l.b16 %v3501
    %v4255 = vunpack.c.h.b16 %v3501
    %v4256 = vunpack.c.l.b16 %v3502
    %v4257 = vunpack.c.h.b16 %v3502
    %v4258 = vunpack.c.l.b16 %v3503
    %v4259 = vunpack.c.h.b16 %v3503
    %v4260 = vunpack.c.l.b16 %v3504
    %v4261 = vunpack.c.h.b16 %v3504
    %v4262 = vunpack.c.l.b16 %v3505
    %v4263 = vunpack.c.h.b16 %v3505
    %v4264 = vunpack.c.l.b16 %v3506
    %v4265 = vunpack.c.h.b16 %v3506
    %v4266 = vunpack.c.l.b16 %v3507
    %v4267 = vunpack.c.h.b16 %v3507
    %v4268 = vunpack.c.l.b16 %v3508
    %v4269 = vunpack.c.h.b16 %v3508
    %v4270 = vunpack.c.l.b16 %v3509
    %v4271 = vunpack.c.h.b16 %v3509
    %v4272 = vunpack.c.l.b16 %v3510
    %v4273 = vunpack.c.h.b16 %v3510
    %v4274 = vunpack.c.l.b16 %v3511
    %v4275 = vunpack.c.h.b16 %v3511
    %v4276 = vunpack.c.l.b16 %v3512
    %v4277 = vunpack.c.h.b16 %v3512
    %v4278 = vunpack.c.l.b16 %v3513
    %v4279 = vunpack.c.h.b16 %v3513
    %v4280 = vunpack.c.l.b16 %v3514
    %v4281 = vunpack.c.h.b16 %v3514
    %v4282 = vunpack.c.l.b16 %v3515
    %v4283 = vunpack.c.h.b16 %v3515
    %v4284 = vunpack.c.l.b16 %v3516
    %v4285 = vunpack.c.h.b16 %v3516
    %v4286 = vunpack.c.l.b16 %v3517
    %v4287 = vunpack.c.h.b16 %v3517
    %v4288 = vunpack.c.l.b16 %v3518
    %v4289 = vunpack.c.h.b16 %v3518
    %v4290 = vunpack.c.l.b16 %v3519
    %v4291 = vunpack.c.h.b16 %v3519
    %v4292 = vunpack.c.l.b16 %v3520
    %v4293 = vunpack.c.h.b16 %v3520
    %v4294 = vunpack.c.l.b16 %v3521
    %v4295 = vunpack.c.h.b16 %v3521
    %v4296 = vunpack.c.l.b16 %v3522
    %v4297 = vunpack.c.h.b16 %v3522
    %v4298 = vunpack.c.l.b16 %v3523
    %v4299 = vunpack.c.h.b16 %v3523
    %v4300 = vunpack.c.l.b16 %v3524
    %v4301 = vunpack.c.h.b16 %v3524
    %v4302 = vunpack.c.l.b16 %v3525
    %v4303 = vunpack.c.h.b16 %v3525
    %v4304 = vunpack.c.l.b16 %v3526
    %v4305 = vunpack.c.h.b16 %v3526
    %v4306 = vunpack.c.l.b16 %v3527
    %v4307 = vunpack.c.h.b16 %v3527
    %v4308 = vunpack.c.l.b16 %v3528
    %v4309 = vunpack.c.h.b16 %v3528
    %v4310 = vunpack.c.l.b16 %v3529
    %v4311 = vunpack.c.h.b16 %v3529
    %v4312 = vunpack.c.l.b16 %v3530
    %v4313 = vunpack.c.h.b16 %v3530
    %v4314 = vunpack.c.l.b16 %v3531
    %v4315 = vunpack.c.h.b16 %v3531
    %v4316 = vunpack.c.l.b16 %v3532
    %v4317 = vunpack.c.h.b16 %v3532
    %v4318 = vunpack.c.l.b16 %v3533
    %v4319 = vunpack.c.h.b16 %v3533
    %v4320 = vunpack.c.l.b16 %v3534
    %v4321 = vunpack.c.h.b16 %v3534
    %v4322 = vunpack.c.l.b16 %v3535
    %v4323 = vunpack.c.h.b16 %v3535
    %v4324 = vunpack.c.l.b16 %v3536
    %v4325 = vunpack.c.h.b16 %v3536
    %v4326 = vunpack.c.l.b16 %v3537
    %v4327 = vunpack.c.h.b16 %v3537
    %v4328 = vunpack.c.l.b16 %v3538
    %v4329 = vunpack.c.h.b16 %v3538
    %v4330 = vunpack.c.l.b16 %v3539
    %v4331 = vunpack.c.h.b16 %v3539
    %v4332 = vunpack.c.l.b16 %v3540
    %v4333 = vunpack.c.h.b16 %v3540
    %v4334 = vunpack.c.l.b16 %v3541
    %v4335 = vunpack.c.h.b16 %v3541
    %v4336 = vunpack.c.l.b16 %v3542
    %v4337 = vunpack.c.h.b16 %v3542
    %v4338 = vunpack.c.l.b16 %v3543
    %v4339 = vunpack.c.h.b16 %v3543
    %v4340 = vunpack.c.l.b16 %v3544
    %v4341 = vunpack.c.h.b16 %v3544
    %v4342 = vunpack.c.l.b16 %v3545
    %v4343 = vunpack.c.h.b16 %v3545
    %v4344 = vunpack.c.l.b16 %v3546
    %v4345 = vunpack.c.h.b16 %v3546
    %v4346 = vunpack.c.l.b16 %v3547
    %v4347 = vunpack.c.h.b16 %v3547
    %v4348 = vunpack.c.l.b16 %v3548
    %v4349 = vunpack.c.h.b16 %v3548
    %v4350 = vunpack.c.l.b16 %v3549
    %v4351 = vunpack.c.h.b16 %v3549
    %v4352 = vunpack.c.l.b16 %v3550
    %v4353 = vunpack.c.h.b16 %v3550
    %v4354 = vunpack.c.l.b16 %v3551
    %v4355 = vunpack.c.h.b16 %v3551
    %v4356 = vunpack.c.l.b16 %v3552
    %v4357 = vunpack.c.h.b16 %v3552
    %v4358 = vunpack.c.l.b16 %v3553
    %v4359 = vunpack.c.h.b16 %v3553
    %v4360 = vunpack.c.l.b16 %v3554
    %v4361 = vunpack.c.h.b16 %v3554
    %v4362 = vunpack.c.l.b16 %v3555
    %v4363 = vunpack.c.h.b16 %v3555
    %v4364 = vunpack.c.l.b16 %v3556
    %v4365 = vunpack.c.h.b16 %v3556
    %v4366 = vunpack.c.l.b16 %v3557
    %v4367 = vunpack.c.h.b16 %v3557
    %v4368 = vunpack.c.l.b16 %v3558
    %v4369 = vunpack.c.h.b16 %v3558
    %v4370 = vunpack.c.l.b16 %v3559
    %v4371 = vunpack.c.h.b16 %v3559
    %v4372 = vunpack.c.l.b16 %v3560
    %v4373 = vunpack.c.h.b16 %v3560
    %v4374 = vunpack.c.l.b16 %v3561
    %v4375 = vunpack.c.h.b16 %v3561
    %v4376 = vunpack.c.l.b16 %v3562
    %v4377 = vunpack.c.h.b16 %v3562
    %v4378 = vunpack.c.l.b16 %v3563
    %v4379 = vunpack.c.h.b16 %v3563
    %v4380 = vunpack.c.l.b16 %v3564
    %v4381 = vunpack.c.h.b16 %v3564
    %v4382 = vunpack.c.l.b16 %v3565
    %v4383 = vunpack.c.h.b16 %v3565
    %v4384 = vunpack.c.l.b16 %v3566
    %v4385 = vunpack.c.h.b16 %v3566
    %v4386 = vunpack.c.l.b16 %v3567
    %v4387 = vunpack.c.h.b16 %v3567
    %v4388 = vunpack.c.l.b16 %v3568
    %v4389 = vunpack.c.h.b16 %v3568
    %v4390 = vunpack.c.l.b16 %v3569
    %v4391 = vunpack.c.h.b16 %v3569
    %v4392 = vunpack.c.l.b16 %v3570
    %v4393 = vunpack.c.h.b16 %v3570
    %v4394 = vunpack.c.l.b16 %v3571
    %v4395 = vunpack.c.h.b16 %v3571
    %v4396 = vunpack.c.l.b16 %v3572
    %v4397 = vunpack.c.h.b16 %v3572
    %v4398 = vunpack.c.l.b16 %v3573
    %v4399 = vunpack.c.h.b16 %v3573
    %v4400 = vunpack.c.l.b16 %v3574
    %v4401 = vunpack.c.h.b16 %v3574
    %v4402 = vunpack.c.l.b16 %v3575
    %v4403 = vunpack.c.h.b16 %v3575
    %v4404 = vunpack.c.l.b16 %v3576
    %v4405 = vunpack.c.h.b16 %v3576
    %v4406 = vunpack.c.l.b16 %v3577
    %v4407 = vunpack.c.h.b16 %v3577
    %v4408 = vunpack.c.l.b16 %v3578
    %v4409 = vunpack.c.h.b16 %v3578
    %v4410 = vunpack.c.l.b16 %v3579
    %v4411 = vunpack.c.h.b16 %v3579
    %v4412 = vunpack.c.l.b16 %v3580
    %v4413 = vunpack.c.h.b16 %v3580
    %v4414 = vunpack.c.l.b16 %v3581
    %v4415 = vunpack.c.h.b16 %v3581
    %v4416 = vunpack.c.l.b16 %v3582
    %v4417 = vunpack.c.h.b16 %v3582
    %v4418 = vunpack.c.l.b16 %v3583
    %v4419 = vunpack.c.h.b16 %v3583
    %v4420 = vunpack.c.l.b16 %v3584
    %v4421 = vunpack.c.h.b16 %v3584
    %v4422 = vunpack.c.l.b16 %v3585
    %v4423 = vunpack.c.h.b16 %v3585
    %v4424 = vunpack.c.l.b16 %v3586
    %v4425 = vunpack.c.h.b16 %v3586
    %v4426 = vunpack.c.l.b16 %v3587
    %v4427 = vunpack.c.h.b16 %v3587
    %v4428 = vunpack.c.l.b16 %v3588
    %v4429 = vunpack.c.h.b16 %v3588
    %v4430 = vunpack.c.l.b16 %v3589
    %v4431 = vunpack.c.h.b16 %v3589
    %v4432 = vunpack.c.l.b16 %v3590
    %v4433 = vunpack.c.h.b16 %v3590
    %v4434 = vunpack.c.l.b16 %v3591
    %v4435 = vunpack.c.h.b16 %v3591
    %v4436 = vunpack.c.l.b16 %v3592
    %v4437 = vunpack.c.h.b16 %v3592
    %v4438 = vunpack.c.l.b16 %v3593
    %v4439 = vunpack.c.h.b16 %v3593
    %v4440 = vunpack.c.l.b16 %v3594
    %v4441 = vunpack.c.h.b16 %v3594
    %v4442 = vunpack.c.l.b16 %v3595
    %v4443 = vunpack.c.h.b16 %v3595
    %v4444 = vunpack.c.l.b16 %v3596
    %v4445 = vunpack.c.h.b16 %v3596
    %v4446 = vunpack.c.l.b16 %v3597
    %v4447 = vunpack.c.h.b16 %v3597
    %v4448 = vunpack.c.l.b16 %v3598
    %v4449 = vunpack.c.h.b16 %v3598
    %v4450 = vunpack.c.l.b16 %v3599
    %v4451 = vunpack.c.h.b16 %v3599
    %v4452 = vunpack.c.l.b16 %v3600
    %v4453 = vunpack.c.h.b16 %v3600
    %v4454 = vunpack.c.l.b16 %v3601
    %v4455 = vunpack.c.h.b16 %v3601
    %v4456 = vunpack.c.l.b16 %v3602
    %v4457 = vunpack.c.h.b16 %v3602
    %v4458 = vunpack.c.l.b16 %v3603
    %v4459 = vunpack.c.h.b16 %v3603
    %v4460 = vunpack.c.l.b16 %v3604
    %v4461 = vunpack.c.h.b16 %v3604
    %v4462 = vunpack.c.l.b16 %v3605
    %v4463 = vunpack.c.h.b16 %v3605
    %v4464 = vunpack.c.l.b16 %v3606
    %v4465 = vunpack.c.h.b16 %v3606
    %v4466 = vunpack.c.l.b16 %v3607
    %v4467 = vunpack.c.h.b16 %v3607
    %v4468 = vunpack.c.l.b16 %v3608
    %v4469 = vunpack.c.h.b16 %v3608
    %v4470 = vunpack.c.l.b16 %v3609
    %v4471 = vunpack.c.h.b16 %v3609
    %v4472 = vunpack.c.l.b16 %v3610
    %v4473 = vunpack.c.h.b16 %v3610
    %v4474 = vunpack.c.l.b16 %v3611
    %v4475 = vunpack.c.h.b16 %v3611
    %v4476 = vunpack.c.l.b16 %v3612
    %v4477 = vunpack.c.h.b16 %v3612
    %v4478 = vunpack.c.l.b16 %v3613
    %v4479 = vunpack.c.h.b16 %v3613
    %v4480 = vunpack.c.l.b16 %v3614
    %v4481 = vunpack.c.h.b16 %v3614
    %v4482 = vunpack.c.l.b16 %v3615
    %v4483 = vunpack.c.h.b16 %v3615
    %v4484 = vunpack.c.l.b16 %v3616
    %v4485 = vunpack.c.h.b16 %v3616
    %v4486 = vunpack.c.l.b16 %v3617
    %v4487 = vunpack.c.h.b16 %v3617
    %v4488 = vunpack.c.l.b16 %v3618
    %v4489 = vunpack.c.h.b16 %v3618
    %v4490 = vunpack.c.l.b16 %v3619
    %v4491 = vunpack.c.h.b16 %v3619
    %v4492 = vunpack.c.l.b16 %v3620
    %v4493 = vunpack.c.h.b16 %v3620
    %v4494 = vunpack.c.l.b16 %v3621
    %v4495 = vunpack.c.h.b16 %v3621
    %v4496 = vunpack.c.l.b16 %v3622
    %v4497 = vunpack.c.h.b16 %v3622
    %v4498 = vunpack.c.l.b16 %v3623
    %v4499 = vunpack.c.h.b16 %v3623
    %v4500 = vunpack.c.l.b16 %v3624
    %v4501 = vunpack.c.h.b16 %v3624
    %v4502 = vunpack.c.l.b16 %v3625
    %v4503 = vunpack.c.h.b16 %v3625
    %v4504 = vunpack.c.l.b16 %v3626
    %v4505 = vunpack.c.h.b16 %v3626
    %v4506 = vunpack.c.l.b16 %v3627
    %v4507 = vunpack.c.h.b16 %v3627
    %v4508 = vunpack.c.l.b16 %v3628
    %v4509 = vunpack.c.h.b16 %v3628
    %v4510 = vunpack.c.l.b16 %v3629
    %v4511 = vunpack.c.h.b16 %v3629
    %v4512 = vunpack.c.l.b16 %v3630
    %v4513 = vunpack.c.h.b16 %v3630
    %v4514 = vunpack.c.l.b16 %v3631
    %v4515 = vunpack.c.h.b16 %v3631
    %v4516 = vunpack.c.l.b16 %v3632
    %v4517 = vunpack.c.h.b16 %v3632
    %v4518 = vunpack.c.l.b16 %v3633
    %v4519 = vunpack.c.h.b16 %v3633
    %v4520 = vunpack.c.l.b16 %v3634
    %v4521 = vunpack.c.h.b16 %v3634
    %v4522 = vunpack.c.l.b16 %v3635
    %v4523 = vunpack.c.h.b16 %v3635
    %v4524 = vunpack.c.l.b16 %v3636
    %v4525 = vunpack.c.h.b16 %v3636
    %v4526 = vunpack.c.l.b16 %v3637
    %v4527 = vunpack.c.h.b16 %v3637
    %v4528 = vunpack.c.l.b16 %v3638
    %v4529 = vunpack.c.h.b16 %v3638
    %v4530 = vunpack.c.l.b16 %v3639
    %v4531 = vunpack.c.h.b16 %v3639
    %v4532 = vunpack.c.l.b16 %v3640
    %v4533 = vunpack.c.h.b16 %v3640
    %v4534 = vunpack.c.l.b16 %v3641
    %v4535 = vunpack.c.h.b16 %v3641
    %v4536 = vunpack.c.l.b16 %v3642
    %v4537 = vunpack.c.h.b16 %v3642
    %v4538 = vunpack.c.l.b16 %v3643
    %v4539 = vunpack.c.h.b16 %v3643
    %v4540 = vunpack.c.l.b16 %v3644
    %v4541 = vunpack.c.h.b16 %v3644
    %v4542 = vunpack.c.l.b16 %v3645
    %v4543 = vunpack.c.h.b16 %v3645
    %v4544 = vunpack.c.l.b16 %v3646
    %v4545 = vunpack.c.h.b16 %v3646
    %v4546 = vunpack.c.l.b16 %v3647
    %v4547 = vunpack.c.h.b16 %v3647
    %v4548 = vunpack.c.l.b16 %v3648
    %v4549 = vunpack.c.h.b16 %v3648
    %v4550 = vunpack.c.l.b16 %v3649
    %v4551 = vunpack.c.h.b16 %v3649
    %v4552 = vunpack.c.l.b16 %v3650
    %v4553 = vunpack.c.h.b16 %v3650
    %v4554 = vunpack.c.l.b16 %v3651
    %v4555 = vunpack.c.h.b16 %v3651
    %v4556 = vunpack.c.l.b16 %v3652
    %v4557 = vunpack.c.h.b16 %v3652
    %v4558 = vunpack.c.l.b16 %v3653
    %v4559 = vunpack.c.h.b16 %v3653
    %v4560 = vunpack.c.l.b16 %v3654
    %v4561 = vunpack.c.h.b16 %v3654
    %v4562 = vunpack.c.l.b16 %v3655
    %v4563 = vunpack.c.h.b16 %v3655
    %v4564 = vunpack.c.l.b16 %v3656
    %v4565 = vunpack.c.h.b16 %v3656
    %v4566 = vunpack.c.l.b16 %v3657
    %v4567 = vunpack.c.h.b16 %v3657
    %v4568 = vunpack.c.l.b16 %v3658
    %v4569 = vunpack.c.h.b16 %v3658
    %v4570 = vunpack.c.l.b16 %v3659
    %v4571 = vunpack.c.h.b16 %v3659
    %v4572 = vunpack.c.l.b16 %v3660
    %v4573 = vunpack.c.h.b16 %v3660
    %v4574 = vunpack.c.l.b16 %v3661
    %v4575 = vunpack.c.h.b16 %v3661
    %v4576 = vunpack.c.l.b16 %v3662
    %v4577 = vunpack.c.h.b16 %v3662
    %v4578 = vunpack.c.l.b16 %v3663
    %v4579 = vunpack.c.h.b16 %v3663
    %v4580 = vunpack.c.l.b16 %v3664
    %v4581 = vunpack.c.h.b16 %v3664
    %v4582 = vunpack.c.l.b16 %v3665
    %v4583 = vunpack.c.h.b16 %v3665
    %v4584 = vunpack.c.l.b16 %v3666
    %v4585 = vunpack.c.h.b16 %v3666
    %v4586 = vunpack.c.l.b16 %v3667
    %v4587 = vunpack.c.h.b16 %v3667
    %v4588 = vunpack.c.l.b16 %v3668
    %v4589 = vunpack.c.h.b16 %v3668
    %v4590 = vunpack.c.l.b16 %v3669
    %v4591 = vunpack.c.h.b16 %v3669
    %v4592 = vunpack.c.l.b16 %v3670
    %v4593 = vunpack.c.h.b16 %v3670
    %v4594 = vunpack.c.l.b16 %v3671
    %v4595 = vunpack.c.h.b16 %v3671
    %v4596 = vunpack.c.l.b16 %v3672
    %v4597 = vunpack.c.h.b16 %v3672
    %v4598 = vunpack.c.l.b16 %v3673
    %v4599 = vunpack.c.h.b16 %v3673
    %v4600 = vunpack.c.l.b16 %v3674
    %v4601 = vunpack.c.h.b16 %v3674
    %v4602 = vunpack.c.l.b16 %v3675
    %v4603 = vunpack.c.h.b16 %v3675
    %v4604 = vunpack.c.l.b16 %v3676
    %v4605 = vunpack.c.h.b16 %v3676
    %v4606 = vpack.c.b16 %v4024, %v4018
    %v4607 = vpack.c.b16 %v4025, %v4019
    %v4608 = vpack.c.b16 %v4026, %v4020
    %v4609 = vpack.c.b16 %v4027, %v4021
    %v4610 = vpack.c.b16 %v4028, %v4022
    %v4611 = vpack.c.b16 %v4029, %v4023
    %v4612 = vpack.c.b16 %v4036, %v4030
    %v4613 = vpack.c.b16 %v4037, %v4031
    %v4614 = vpack.c.b16 %v4038, %v4032
    %v4615 = vpack.c.b16 %v4039, %v4033
    %v4616 = vpack.c.b16 %v4040, %v4034
    %v4617 = vpack.c.b16 %v4041, %v4035
    %v4618 = vpack.c.b16 %v4048, %v4042
    %v4619 = vpack.c.b16 %v4049, %v4043
    %v4620 = vpack.c.b16 %v4050, %v4044
    %v4621 = vpack.c.b16 %v4051, %v4045
    %v4622 = vpack.c.b16 %v4052, %v4046
    %v4623 = vpack.c.b16 %v4053, %v4047
    %v4624 = vpack.c.b16 %v4060, %v4054
    %v4625 = vpack.c.b16 %v4061, %v4055
    %v4626 = vpack.c.b16 %v4062, %v4056
    %v4627 = vpack.c.b16 %v4063, %v4057
    %v4628 = vpack.c.b16 %v4064, %v4058
    %v4629 = vpack.c.b16 %v4065, %v4059
    %v4630 = vpack.c.b16 %v4072, %v4066
    %v4631 = vpack.c.b16 %v4073, %v4067
    %v4632 = vpack.c.b16 %v4074, %v4068
    %v4633 = vpack.c.b16 %v4075, %v4069
    %v4634 = vpack.c.b16 %v4076, %v4070
    %v4635 = vpack.c.b16 %v4077, %v4071
    %v4636 = vpack.c.b16 %v4084, %v4078
    %v4637 = vpack.c.b16 %v4085, %v4079
    %v4638 = vpack.c.b16 %v4086, %v4080
    %v4639 = vpack.c.b16 %v4087, %v4081
    %v4640 = vpack.c.b16 %v4088, %v4082
    %v4641 = vpack.c.b16 %v4089, %v4083
    %v4642 = vpack.c.b16 %v4096, %v4090
    %v4643 = vpack.c.b16 %v4097, %v4091
    %v4644 = vpack.c.b16 %v4098, %v4092
    %v4645 = vpack.c.b16 %v4099, %v4093
    %v4646 = vpack.c.b16 %v4100, %v4094
    %v4647 = vpack.c.b16 %v4101, %v4095
    %v4648 = vpack.c.b16 %v4108, %v4102
    %v4649 = vpack.c.b16 %v4109, %v4103
    %v4650 = vpack.c.b16 %v4110, %v4104
    %v4651 = vpack.c.b16 %v4111, %v4105
    %v4652 = vpack.c.b16 %v4112, %v4106
    %v4653 = vpack.c.b16 %v4113, %v4107
    %v4654 = vpack.c.b16 %v4120, %v4114
    %v4655 = vpack.c.b16 %v4121, %v4115
    %v4656 = vpack.c.b16 %v4122, %v4116
    %v4657 = vpack.c.b16 %v4123, %v4117
    %v4658 = vpack.c.b16 %v4124, %v4118
    %v4659 = vpack.c.b16 %v4125, %v4119
    %v4660 = vpack.c.b16 %v4132, %v4126
    %v4661 = vpack.c.b16 %v4133, %v4127
    %v4662 = vpack.c.b16 %v4134, %v4128
    %v4663 = vpack.c.b16 %v4135, %v4129
    %v4664 = vpack.c.b16 %v4136, %v4130
    %v4665 = vpack.c.b16 %v4137, %v4131
    %v4666 = vpack.c.b16 %v4144, %v4138
    %v4667 = vpack.c.b16 %v4145, %v4139
    %v4668 = vpack.c.b16 %v4146, %v4140
    %v4669 = vpack.c.b16 %v4147, %v4141
    %v4670 = vpack.c.b16 %v4148, %v4142
    %v4671 = vpack.c.b16 %v4149, %v4143
    %v4672 = vpack.c.b16 %v4156, %v4150
    %v4673 = vpack.c.b16 %v4157, %v4151
    %v4674 = vpack.c.b16 %v4158, %v4152
    %v4675 = vpack.c.b16 %v4159, %v4153
    %v4676 = vpack.c.b16 %v4160, %v4154
    %v4677 = vpack.c.b16 %v4161, %v4155
    %v4678 = vpack.c.b16 %v4168, %v4162
    %v4679 = vpack.c.b16 %v4169, %v4163
    %v4680 = vpack.c.b16 %v4170, %v4164
    %v4681 = vpack.c.b16 %v4171, %v4165
    %v4682 = vpack.c.b16 %v4172, %v4166
    %v4683 = vpack.c.b16 %v4173, %v4167
    %v4684 = vpack.c.b16 %v4180, %v4174
    %v4685 = vpack.c.b16 %v4181, %v4175
    %v4686 = vpack.c.b16 %v4182, %v4176
    %v4687 = vpack.c.b16 %v4183, %v4177
    %v4688 = vpack.c.b16 %v4184, %v4178
    %v4689 = vpack.c.b16 %v4185, %v4179
    %v4690 = vpack.c.b16 %v4192, %v4186
    %v4691 = vpack.c.b16 %v4193, %v4187
    %v4692 = vpack.c.b16 %v4194, %v4188
    %v4693 = vpack.c.b16 %v4195, %v4189
    %v4694 = vpack.c.b16 %v4196, %v4190
    %v4695 = vpack.c.b16 %v4197, %v4191
    %v4696 = vpack.c.b16 %v4204, %v4198
    %v4697 = vpack.c.b16 %v4205, %v4199
    %v4698 = vpack.c.b16 %v4206, %v4200
    %v4699 = vpack.c.b16 %v4207, %v4201
    %v4700 = vpack.c.b16 %v4208, %v4202
    %v4701 = vpack.c.b16 %v4209, %v4203
    %v4702 = vpack.c.b16 %v4216, %v4210
    %v4703 = vpack.c.b16 %v4217, %v4211
    %v4704 = vpack.c.b16 %v4218, %v4212
    %v4705 = vpack.c.b16 %v4219, %v4213
    %v4706 = vpack.c.b16 %v4220, %v4214
    %v4707 = vpack.c.b16 %v4221, %v4215
    %v4708 = vpack.c.b16 %v4228, %v4222
    %v4709 = vpack.c.b16 %v4229, %v4223
    %v4710 = vpack.c.b16 %v4230, %v4224
    %v4711 = vpack.c.b16 %v4231, %v4225
    %v4712 = vpack.c.b16 %v4232, %v4226
    %v4713 = vpack.c.b16 %v4233, %v4227
    %v4714 = vpack.c.b16 %v4240, %v4234
    %v4715 = vpack.c.b16 %v4241, %v4235
    %v4716 = vpack.c.b16 %v4242, %v4236
    %v4717 = vpack.c.b16 %v4243, %v4237
    %v4718 = vpack.c.b16 %v4244, %v4238
    %v4719 = vpack.c.b16 %v4245, %v4239
    %v4720 = vpack.c.b16 %v4252, %v4246
    %v4721 = vpack.c.b16 %v4253, %v4247
    %v4722 = vpack.c.b16 %v4254, %v4248
    %v4723 = vpack.c.b16 %v4255, %v4249
    %v4724 = vpack.c.b16 %v4256, %v4250
    %v4725 = vpack.c.b16 %v4257, %v4251
    %v4726 = vpack.c.b16 %v4264, %v4258
    %v4727 = vpack.c.b16 %v4265, %v4259
    %v4728 = vpack.c.b16 %v4266, %v4260
    %v4729 = vpack.c.b16 %v4267, %v4261
    %v4730 = vpack.c.b16 %v4268, %v4262
    %v4731 = vpack.c.b16 %v4269, %v4263
    %v4732 = vpack.c.b16 %v4276, %v4270
    %v4733 = vpack.c.b16 %v4277, %v4271
    %v4734 = vpack.c.b16 %v4278, %v4272
    %v4735 = vpack.c.b16 %v4279, %v4273
    %v4736 = vpack.c.b16 %v4280, %v4274
    %v4737 = vpack.c.b16 %v4281, %v4275
    %v4738 = vpack.c.b16 %v4288, %v4282
    %v4739 = vpack.c.b16 %v4289, %v4283
    %v4740 = vpack.c.b16 %v4290, %v4284
    %v4741 = vpack.c.b16 %v4291, %v4285
    %v4742 = vpack.c.b16 %v4292, %v4286
    %v4743 = vpack.c.b16 %v4293, %v4287
    %v4744 = vpack.c.b16 %v4300, %v4294
    %v4745 = vpack.c.b16 %v4301, %v4295
    %v4746 = vpack.c.b16 %v4302, %v4296
    %v4747 = vpack.c.b16 %v4303, %v4297
    %v4748 = vpack.c.b16 %v4304, %v4298
    %v4749 = vpack.c.b16 %v4305, %v4299
    %v4750 = vpack.c.b16 %v4312, %v4306
    %v4751 = vpack.c.b16 %v4313, %v4307
    %v4752 = vpack.c.b16 %v4314, %v4308
    %v4753 = vpack.c.b16 %v4315, %v4309
    %v4754 = vpack.c.b16 %v4316, %v4310
    %v4755 = vpack.c.b16 %v4317, %v4311
    %v4756 = vpack.c.b16 %v4324, %v4318
    %v4757 = vpack.c.b16 %v4325, %v4319
    %v4758 = vpack.c.b16 %v4326, %v4320
    %v4759 = vpack.c.b16 %v4327, %v4321
    %v4760 = vpack.c.b16 %v4328, %v4322
    %v4761 = vpack.c.b16 %v4329, %v4323
    %v4762 = vpack.c.b16 %v4336, %v4330
    %v4763 = vpack.c.b16 %v4337, %v4331
    %v4764 = vpack.c.b16 %v4338, %v4332
    %v4765 = vpack.c.b16 %v4339, %v4333
    %v4766 = vpack.c.b16 %v4340, %v4334
    %v4767 = vpack.c.b16 %v4341, %v4335
    %v4768 = vpack.c.b16 %v4348, %v4342
    %v4769 = vpack.c.b16 %v4349, %v4343
    %v4770 = vpack.c.b16 %v4350, %v4344
    %v4771 = vpack.c.b16 %v4351, %v4345
    %v4772 = vpack.c.b16 %v4352, %v4346
    %v4773 = vpack.c.b16 %v4353, %v4347
    %v4774 = vpack.c.b16 %v4360, %v4354
    %v4775 = vpack.c.b16 %v4361, %v4355
    %v4776 = vpack.c.b16 %v4362, %v4356
    %v4777 = vpack.c.b16 %v4363, %v4357
    %v4778 = vpack.c.b16 %v4364, %v4358
    %v4779 = vpack.c.b16 %v4365, %v4359
    %v4780 = vpack.c.b16 %v4372, %v4366
    %v4781 = vpack.c.b16 %v4373, %v4367
    %v4782 = vpack.c.b16 %v4374, %v4368
    %v4783 = vpack.c.b16 %v4375, %v4369
    %v4784 = vpack.c.b16 %v4376, %v4370
    %v4785 = vpack.c.b16 %v4377, %v4371
    %v4786 = vpack.c.b16 %v4384, %v4378
    %v4787 = vpack.c.b16 %v4385, %v4379
    %v4788 = vpack.c.b16 %v4386, %v4380
    %v4789 = vpack.c.b16 %v4387, %v4381
    %v4790 = vpack.c.b16 %v4388, %v4382
    %v4791 = vpack.c.b16 %v4389, %v4383
    %v4792 = vpack.c.b16 %v4396, %v4390
    %v4793 = vpack.c.b16 %v4397, %v4391
    %v4794 = vpack.c.b16 %v4398, %v4392
    %v4795 = vpack.c.b16 %v4399, %v4393
    %v4796 = vpack.c.b16 %v4400, %v4394
    %v4797 = vpack.c.b16 %v4401, %v4395
    %v4798 = vpack.c.b16 %v4408, %v4402
    %v4799 = vpack.c.b16 %v4409, %v4403
    %v4800 = vpack.c.b16 %v4410, %v4404
    %v4801 = vpack.c.b16 %v4411, %v4405
    %v4802 = vpack.c.b16 %v4412, %v4406
    %v4803 = vpack.c.b16 %v4413, %v4407
    %v4804 = vpack.c.b16 %v4420, %v4414
    %v4805 = vpack.c.b16 %v4421, %v4415
    %v4806 = vpack.c.b16 %v4422, %v4416
    %v4807 = vpack.c.b16 %v4423, %v4417
    %v4808 = vpack.c.b16 %v4424, %v4418
    %v4809 = vpack.c.b16 %v4425, %v4419
    %v4810 = vpack.c.b16 %v4432, %v4426
    %v4811 = vpack.c.b16 %v4433, %v4427
    %v4812 = vpack.c.b16 %v4434, %v4428
    %v4813 = vpack.c.b16 %v4435, %v4429
    %v4814 = vpack.c.b16 %v4436, %v4430
    %v4815 = vpack.c.b16 %v4437, %v4431
    %v4816 = vpack.c.b16 %v4444, %v4438
    %v4817 = vpack.c.b16 %v4445, %v4439
    %v4818 = vpack.c.b16 %v4446, %v4440
    %v4819 = vpack.c.b16 %v4447, %v4441
    %v4820 = vpack.c.b16 %v4448, %v4442
    %v4821 = vpack.c.b16 %v4449, %v4443
    %v4822 = vpack.c.b16 %v4456, %v4450
    %v4823 = vpack.c.b16 %v4457, %v4451
    %v4824 = vpack.c.b16 %v4458, %v4452
    %v4825 = vpack.c.b16 %v4459, %v4453
    %v4826 = vpack.c.b16 %v4460, %v4454
    %v4827 = vpack.c.b16 %v4461, %v4455
    %v4828 = vpack.c.b16 %v4468, %v4462
    %v4829 = vpack.c.b16 %v4469, %v4463
    %v4830 = vpack.c.b16 %v4470, %v4464
    %v4831 = vpack.c.b16 %v4471, %v4465
    %v4832 = vpack.c.b16 %v4472, %v4466
    %v4833 = vpack.c.b16 %v4473, %v4467
    %v4834 = vpack.c.b16 %v4480, %v4474
    %v4835 = vpack.c.b16 %v4481, %v4475
    %v4836 = vpack.c.b16 %v4482, %v4476
    %v4837 = vpack.c.b16 %v4483, %v4477
    %v4838 = vpack.c.b16 %v4484, %v4478
    %v4839 = vpack.c.b16 %v4485, %v4479
    %v4840 = vpack.c.b16 %v4492, %v4486
    %v4841 = vpack.c.b16 %v4493, %v4487
    %v4842 = vpack.c.b16 %v4494, %v4488
    %v4843 = vpack.c.b16 %v4495, %v4489
    %v4844 = vpack.c.b16 %v4496, %v4490
    %v4845 = vpack.c.b16 %v4497, %v4491
    %v4846 = vpack.c.b16 %v4504, %v4498
    %v4847 = vpack.c.b16 %v4505, %v4499
    %v4848 = vpack.c.b16 %v4506, %v4500
    %v4849 = vpack.c.b16 %v4507, %v4501
    %v4850 = vpack.c.b16 %v4508, %v4502
    %v4851 = vpack.c.b16 %v4509, %v4503
    %v4852 = vpack.c.b16 %v4516, %v4510
    %v4853 = vpack.c.b16 %v4517, %v4511
    %v4854 = vpack.c.b16 %v4518, %v4512
    %v4855 = vpack.c.b16 %v4519, %v4513
    %v4856 = vpack.c.b16 %v4520, %v4514
    %v4857 = vpack.c.b16 %v4521, %v4515
    %v4858 = vpack.c.b16 %v4528, %v4522
    %v4859 = vpack.c.b16 %v4529, %v4523
    %v4860 = vpack.c.b16 %v4530, %v4524
    %v4861 = vpack.c.b16 %v4531, %v4525
    %v4862 = vpack.c.b16 %v4532, %v4526
    %v4863 = vpack.c.b16 %v4533, %v4527
    %v4864 = vpack.c.b16 %v4540, %v4534
    %v4865 = vpack.c.b16 %v4541, %v4535
    %v4866 = vpack.c.b16 %v4542, %v4536
    %v4867 = vpack.c.b16 %v4543, %v4537
    %v4868 = vpack.c.b16 %v4544, %v4538
    %v4869 = vpack.c.b16 %v4545, %v4539
    %v4870 = vpack.c.b16 %v4552, %v4546
    %v4871 = vpack.c.b16 %v4553, %v4547
    %v4872 = vpack.c.b16 %v4554, %v4548
    %v4873 = vpack.c.b16 %v4555, %v4549
    %v4874 = vpack.c.b16 %v4556, %v4550
    %v4875 = vpack.c.b16 %v4557, %v4551
    %v4876 = vpack.c.b16 %v4564, %v4558
    %v4877 = vpack.c.b16 %v4565, %v4559
    %v4878 = vpack.c.b16 %v4566, %v4560
    %v4879 = vpack.c.b16 %v4567, %v4561
    %v4880 = vpack.c.b16 %v4568, %v4562
    %v4881 = vpack.c.b16 %v4569, %v4563
    %v4882 = vpack.c.b16 %v4576, %v4570
    %v4883 = vpack.c.b16 %v4577, %v4571
    %v4884 = vpack.c.b16 %v4578, %v4572
    %v4885 = vpack.c.b16 %v4579, %v4573
    %v4886 = vpack.c.b16 %v4580, %v4574
    %v4887 = vpack.c.b16 %v4581, %v4575
    %v4888 = vpack.c.b16 %v4588, %v4582
    %v4889 = vpack.c.b16 %v4589, %v4583
    %v4890 = vpack.c.b16 %v4590, %v4584
    %v4891 = vpack.c.b16 %v4591, %v4585
    %v4892 = vpack.c.b16 %v4592, %v4586
    %v4893 = vpack.c.b16 %v4593, %v4587
    %v4894 = vpack.c.b16 %v4600, %v4594
    %v4895 = vpack.c.b16 %v4601, %v4595
    %v4896 = vpack.c.b16 %v4602, %v4596
    %v4897 = vpack.c.b16 %v4603, %v4597
    %v4898 = vpack.c.b16 %v4604, %v4598
    %v4899 = vpack.c.b16 %v4605, %v4599
    %vm5194 = vcmask 130048
    %v5196 = vsel %vm5194, %v3717, 0
    %5198 = vmatpush.bf16.msra.mxu0 %v4648
    %5199 = vmatpush.bf16.msra.mxu0 %v4642
    %5200 = vmatpush.bf16.msra.mxu0 %v4636
    %5201 = vmatpush.bf16.msra.mxu0 %v4630
    %5202 = vmatpush.bf16.msra.mxu0 %v4624
    %5203 = vmatpush.bf16.msra.mxu0 %v4618
    %5204 = vmatpush.bf16.msra.mxu0 %v4612
    %5205 = vmatpush.bf16.msra.mxu0 %v4606
    %5206 = vmatmul.bf16.gmra.mxu0 %v3711
    %v5207 = vpop.f32.mrf.mxu0
    %v5208 = vadd.f32 %v3682, %v5207
    %v5209 = vpop.f32.mrf.mxu0
    %v5210 = vadd.f32 %v3687, %v5209
    %5211 = vdwg.mxu0
    %5212 = vmatpush.bf16.msra.mxu0 %v4696
    %5213 = vmatpush.bf16.msra.mxu0 %v4690
    %5214 = vmatpush.bf16.msra.mxu0 %v4684
    %5215 = vmatpush.bf16.msra.mxu0 %v4678
    %5216 = vmatpush.bf16.msra.mxu0 %v4672
    %5217 = vmatpush.bf16.msra.mxu0 %v4666
    %5218 = vmatpush.bf16.msra.mxu0 %v4660
    %5219 = vmatpush.bf16.msra.mxu0 %v4654
    %5220 = vmatmul.bf16.gmra.mxu0 %v3712
    %v5221 = vpop.f32.mrf.mxu0
    %v5222 = vadd.f32 %v5208, %v5221
    %v5223 = vpop.f32.mrf.mxu0
    %v5224 = vadd.f32 %v5210, %v5223
    %5225 = vdwg.mxu0
    %5226 = vmatpush.bf16.msra.mxu0 %v4744
    %5227 = vmatpush.bf16.msra.mxu0 %v4738
    %5228 = vmatpush.bf16.msra.mxu0 %v4732
    %5229 = vmatpush.bf16.msra.mxu0 %v4726
    %5230 = vmatpush.bf16.msra.mxu0 %v4720
    %5231 = vmatpush.bf16.msra.mxu0 %v4714
    %5232 = vmatpush.bf16.msra.mxu0 %v4708
    %5233 = vmatpush.bf16.msra.mxu0 %v4702
    %5234 = vmatmul.bf16.gmra.mxu0 %v3713
    %v5235 = vpop.f32.mrf.mxu0
    %v5236 = vadd.f32 %v5222, %v5235
    %v5237 = vpop.f32.mrf.mxu0
    %v5238 = vadd.f32 %v5224, %v5237
    %5239 = vdwg.mxu0
    %5240 = vmatpush.bf16.msra.mxu0 %v4792
    %5241 = vmatpush.bf16.msra.mxu0 %v4786
    %5242 = vmatpush.bf16.msra.mxu0 %v4780
    %5243 = vmatpush.bf16.msra.mxu0 %v4774
    %5244 = vmatpush.bf16.msra.mxu0 %v4768
    %5245 = vmatpush.bf16.msra.mxu0 %v4762
    %5246 = vmatpush.bf16.msra.mxu0 %v4756
    %5247 = vmatpush.bf16.msra.mxu0 %v4750
    %5248 = vmatmul.bf16.gmra.mxu0 %v3714
    %v5249 = vpop.f32.mrf.mxu0
    %v5250 = vadd.f32 %v5236, %v5249
    %v5251 = vpop.f32.mrf.mxu0
    %v5252 = vadd.f32 %v5238, %v5251
    %5253 = vdwg.mxu0
    %5254 = vmatpush.bf16.msra.mxu0 %v4840
    %5255 = vmatpush.bf16.msra.mxu0 %v4834
    %5256 = vmatpush.bf16.msra.mxu0 %v4828
    %5257 = vmatpush.bf16.msra.mxu0 %v4822
    %5258 = vmatpush.bf16.msra.mxu0 %v4816
    %5259 = vmatpush.bf16.msra.mxu0 %v4810
    %5260 = vmatpush.bf16.msra.mxu0 %v4804
    %5261 = vmatpush.bf16.msra.mxu0 %v4798
    %5262 = vmatmul.bf16.gmra.mxu0 %v3715
    %v5263 = vpop.f32.mrf.mxu0
    %v5264 = vadd.f32 %v5250, %v5263
    %v5265 = vpop.f32.mrf.mxu0
    %v5266 = vadd.f32 %v5252, %v5265
    %5267 = vdwg.mxu0
    %5268 = vmatpush.bf16.msra.mxu0 %v4888
    %5269 = vmatpush.bf16.msra.mxu0 %v4882
    %5270 = vmatpush.bf16.msra.mxu0 %v4876
    %5271 = vmatpush.bf16.msra.mxu0 %v4870
    %5272 = vmatpush.bf16.msra.mxu0 %v4864
    %5273 = vmatpush.bf16.msra.mxu0 %v4858
    %5274 = vmatpush.bf16.msra.mxu0 %v4852
    %5275 = vmatpush.bf16.msra.mxu0 %v4846
    %5276 = vmatmul.bf16.gmra.mxu0 %v3716
    %v5277 = vpop.f32.mrf.mxu0
    %v5278 = vadd.f32 %v5264, %v5277
    %v5279 = vpop.f32.mrf.mxu0
    %v5280 = vadd.f32 %v5266, %v5279
    %5281 = vdwg.mxu0
    %5282 = vmatpush.bf16.msra.mxu0 0
    %5283 = vmatpush.bf16.msra.mxu0 0
    %5284 = vmatpush.bf16.msra.mxu0 0
    %5285 = vmatpush.bf16.msra.mxu0 0
    %5286 = vmatpush.bf16.msra.mxu0 0
    %5287 = vmatpush.bf16.msra.mxu0 0
    %5288 = vmatpush.bf16.msra.mxu0 0
    %5289 = vmatpush.bf16.msra.mxu0 %v4894
    %5290 = vmatmul.bf16.gmra.mxu0 %v5196
    %v5291 = vpop.f32.mrf.mxu0
    %v5292 = vadd.f32 %v5278, %v5291
    %v5293 = vpop.f32.mrf.mxu0
    %v5294 = vadd.f32 %v5280, %v5293
    %5295 = vdwg.mxu0
    %5296 = vmatpush.bf16.msra.mxu0 %v4649
    %5297 = vmatpush.bf16.msra.mxu0 %v4643
    %5298 = vmatpush.bf16.msra.mxu0 %v4637
    %5299 = vmatpush.bf16.msra.mxu0 %v4631
    %5300 = vmatpush.bf16.msra.mxu0 %v4625
    %5301 = vmatpush.bf16.msra.mxu0 %v4619
    %5302 = vmatpush.bf16.msra.mxu0 %v4613
    %5303 = vmatpush.bf16.msra.mxu0 %v4607
    %5304 = vmatmul.bf16.gmra.mxu0 %v3711
    %v5305 = vpop.f32.mrf.mxu0
    %v5306 = vadd.f32 %v3682, %v5305
    %v5307 = vpop.f32.mrf.mxu0
    %v5308 = vadd.f32 %v3687, %v5307
    %5309 = vdwg.mxu0
    %5310 = vmatpush.bf16.msra.mxu0 %v4697
    %5311 = vmatpush.bf16.msra.mxu0 %v4691
    %5312 = vmatpush.bf16.msra.mxu0 %v4685
    %5313 = vmatpush.bf16.msra.mxu0 %v4679
    %5314 = vmatpush.bf16.msra.mxu0 %v4673
    %5315 = vmatpush.bf16.msra.mxu0 %v4667
    %5316 = vmatpush.bf16.msra.mxu0 %v4661
    %5317 = vmatpush.bf16.msra.mxu0 %v4655
    %5318 = vmatmul.bf16.gmra.mxu0 %v3712
    %v5319 = vpop.f32.mrf.mxu0
    %v5320 = vadd.f32 %v5306, %v5319
    %v5321 = vpop.f32.mrf.mxu0
    %v5322 = vadd.f32 %v5308, %v5321
    %5323 = vdwg.mxu0
    %5324 = vmatpush.bf16.msra.mxu0 %v4745
    %5325 = vmatpush.bf16.msra.mxu0 %v4739
    %5326 = vmatpush.bf16.msra.mxu0 %v4733
    %5327 = vmatpush.bf16.msra.mxu0 %v4727
    %5328 = vmatpush.bf16.msra.mxu0 %v4721
    %5329 = vmatpush.bf16.msra.mxu0 %v4715
    %5330 = vmatpush.bf16.msra.mxu0 %v4709
    %5331 = vmatpush.bf16.msra.mxu0 %v4703
    %5332 = vmatmul.bf16.gmra.mxu0 %v3713
    %v5333 = vpop.f32.mrf.mxu0
    %v5334 = vadd.f32 %v5320, %v5333
    %v5335 = vpop.f32.mrf.mxu0
    %v5336 = vadd.f32 %v5322, %v5335
    %5337 = vdwg.mxu0
    %5338 = vmatpush.bf16.msra.mxu0 %v4793
    %5339 = vmatpush.bf16.msra.mxu0 %v4787
    %5340 = vmatpush.bf16.msra.mxu0 %v4781
    %5341 = vmatpush.bf16.msra.mxu0 %v4775
    %5342 = vmatpush.bf16.msra.mxu0 %v4769
    %5343 = vmatpush.bf16.msra.mxu0 %v4763
    %5344 = vmatpush.bf16.msra.mxu0 %v4757
    %5345 = vmatpush.bf16.msra.mxu0 %v4751
    %5346 = vmatmul.bf16.gmra.mxu0 %v3714
    %v5347 = vpop.f32.mrf.mxu0
    %v5348 = vadd.f32 %v5334, %v5347
    %v5349 = vpop.f32.mrf.mxu0
    %v5350 = vadd.f32 %v5336, %v5349
    %5351 = vdwg.mxu0
    %5352 = vmatpush.bf16.msra.mxu0 %v4841
    %5353 = vmatpush.bf16.msra.mxu0 %v4835
    %5354 = vmatpush.bf16.msra.mxu0 %v4829
    %5355 = vmatpush.bf16.msra.mxu0 %v4823
    %5356 = vmatpush.bf16.msra.mxu0 %v4817
    %5357 = vmatpush.bf16.msra.mxu0 %v4811
    %5358 = vmatpush.bf16.msra.mxu0 %v4805
    %5359 = vmatpush.bf16.msra.mxu0 %v4799
    %5360 = vmatmul.bf16.gmra.mxu0 %v3715
    %v5361 = vpop.f32.mrf.mxu0
    %v5362 = vadd.f32 %v5348, %v5361
    %v5363 = vpop.f32.mrf.mxu0
    %v5364 = vadd.f32 %v5350, %v5363
    %5365 = vdwg.mxu0
    %5366 = vmatpush.bf16.msra.mxu0 %v4889
    %5367 = vmatpush.bf16.msra.mxu0 %v4883
    %5368 = vmatpush.bf16.msra.mxu0 %v4877
    %5369 = vmatpush.bf16.msra.mxu0 %v4871
    %5370 = vmatpush.bf16.msra.mxu0 %v4865
    %5371 = vmatpush.bf16.msra.mxu0 %v4859
    %5372 = vmatpush.bf16.msra.mxu0 %v4853
    %5373 = vmatpush.bf16.msra.mxu0 %v4847
    %5374 = vmatmul.bf16.gmra.mxu0 %v3716
    %v5375 = vpop.f32.mrf.mxu0
    %v5376 = vadd.f32 %v5362, %v5375
    %v5377 = vpop.f32.mrf.mxu0
    %v5378 = vadd.f32 %v5364, %v5377
    %5379 = vdwg.mxu0
    %5380 = vmatpush.bf16.msra.mxu0 0
    %5381 = vmatpush.bf16.msra.mxu0 0
    %5382 = vmatpush.bf16.msra.mxu0 0
    %5383 = vmatpush.bf16.msra.mxu0 0
    %5384 = vmatpush.bf16.msra.mxu0 0
    %5385 = vmatpush.bf16.msra.mxu0 0
    %5386 = vmatpush.bf16.msra.mxu0 0
    %5387 = vmatpush.bf16.msra.mxu0 %v4895
    %5388 = vmatmul.bf16.gmra.mxu0 %v5196
    %v5389 = vpop.f32.mrf.mxu0
    %v5390 = vadd.f32 %v5376, %v5389
    %v5391 = vpop.f32.mrf.mxu0
    %v5392 = vadd.f32 %v5378, %v5391
    %5393 = vdwg.mxu0
    %5394 = vmatpush.bf16.msra.mxu0 %v4650
    %5395 = vmatpush.bf16.msra.mxu0 %v4644
    %5396 = vmatpush.bf16.msra.mxu0 %v4638
    %5397 = vmatpush.bf16.msra.mxu0 %v4632
    %5398 = vmatpush.bf16.msra.mxu0 %v4626
    %5399 = vmatpush.bf16.msra.mxu0 %v4620
    %5400 = vmatpush.bf16.msra.mxu0 %v4614
    %5401 = vmatpush.bf16.msra.mxu0 %v4608
    %5402 = vmatmul.bf16.gmra.mxu0 %v3711
    %v5403 = vpop.f32.mrf.mxu0
    %v5404 = vadd.f32 %v3682, %v5403
    %v5405 = vpop.f32.mrf.mxu0
    %v5406 = vadd.f32 %v3687, %v5405
    %5407 = vdwg.mxu0
    %5408 = vmatpush.bf16.msra.mxu0 %v4698
    %5409 = vmatpush.bf16.msra.mxu0 %v4692
    %5410 = vmatpush.bf16.msra.mxu0 %v4686
    %5411 = vmatpush.bf16.msra.mxu0 %v4680
    %5412 = vmatpush.bf16.msra.mxu0 %v4674
    %5413 = vmatpush.bf16.msra.mxu0 %v4668
    %5414 = vmatpush.bf16.msra.mxu0 %v4662
    %5415 = vmatpush.bf16.msra.mxu0 %v4656
    %5416 = vmatmul.bf16.gmra.mxu0 %v3712
    %v5417 = vpop.f32.mrf.mxu0
    %v5418 = vadd.f32 %v5404, %v5417
    %v5419 = vpop.f32.mrf.mxu0
    %v5420 = vadd.f32 %v5406, %v5419
    %5421 = vdwg.mxu0
    %5422 = vmatpush.bf16.msra.mxu0 %v4746
    %5423 = vmatpush.bf16.msra.mxu0 %v4740
    %5424 = vmatpush.bf16.msra.mxu0 %v4734
    %5425 = vmatpush.bf16.msra.mxu0 %v4728
    %5426 = vmatpush.bf16.msra.mxu0 %v4722
    %5427 = vmatpush.bf16.msra.mxu0 %v4716
    %5428 = vmatpush.bf16.msra.mxu0 %v4710
    %5429 = vmatpush.bf16.msra.mxu0 %v4704
    %5430 = vmatmul.bf16.gmra.mxu0 %v3713
    %v5431 = vpop.f32.mrf.mxu0
    %v5432 = vadd.f32 %v5418, %v5431
    %v5433 = vpop.f32.mrf.mxu0
    %v5434 = vadd.f32 %v5420, %v5433
    %5435 = vdwg.mxu0
    %5436 = vmatpush.bf16.msra.mxu0 %v4794
    %5437 = vmatpush.bf16.msra.mxu0 %v4788
    %5438 = vmatpush.bf16.msra.mxu0 %v4782
    %5439 = vmatpush.bf16.msra.mxu0 %v4776
    %5440 = vmatpush.bf16.msra.mxu0 %v4770
    %5441 = vmatpush.bf16.msra.mxu0 %v4764
    %5442 = vmatpush.bf16.msra.mxu0 %v4758
    %5443 = vmatpush.bf16.msra.mxu0 %v4752
    %5444 = vmatmul.bf16.gmra.mxu0 %v3714
    %v5445 = vpop.f32.mrf.mxu0
    %v5446 = vadd.f32 %v5432, %v5445
    %v5447 = vpop.f32.mrf.mxu0
    %v5448 = vadd.f32 %v5434, %v5447
    %5449 = vdwg.mxu0
    %5450 = vmatpush.bf16.msra.mxu0 %v4842
    %5451 = vmatpush.bf16.msra.mxu0 %v4836
    %5452 = vmatpush.bf16.msra.mxu0 %v4830
    %5453 = vmatpush.bf16.msra.mxu0 %v4824
    %5454 = vmatpush.bf16.msra.mxu0 %v4818
    %5455 = vmatpush.bf16.msra.mxu0 %v4812
    %5456 = vmatpush.bf16.msra.mxu0 %v4806
    %5457 = vmatpush.bf16.msra.mxu0 %v4800
    %5458 = vmatmul.bf16.gmra.mxu0 %v3715
    %v5459 = vpop.f32.mrf.mxu0
    %v5460 = vadd.f32 %v5446, %v5459
    %v5461 = vpop.f32.mrf.mxu0
    %v5462 = vadd.f32 %v5448, %v5461
    %5463 = vdwg.mxu0
    %5464 = vmatpush.bf16.msra.mxu0 %v4890
    %5465 = vmatpush.bf16.msra.mxu0 %v4884
    %5466 = vmatpush.bf16.msra.mxu0 %v4878
    %5467 = vmatpush.bf16.msra.mxu0 %v4872
    %5468 = vmatpush.bf16.msra.mxu0 %v4866
    %5469 = vmatpush.bf16.msra.mxu0 %v4860
    %5470 = vmatpush.bf16.msra.mxu0 %v4854
    %5471 = vmatpush.bf16.msra.mxu0 %v4848
    %5472 = vmatmul.bf16.gmra.mxu0 %v3716
    %v5473 = vpop.f32.mrf.mxu0
    %v5474 = vadd.f32 %v5460, %v5473
    %v5475 = vpop.f32.mrf.mxu0
    %v5476 = vadd.f32 %v5462, %v5475
    %5477 = vdwg.mxu0
    %5478 = vmatpush.bf16.msra.mxu0 0
    %5479 = vmatpush.bf16.msra.mxu0 0
    %5480 = vmatpush.bf16.msra.mxu0 0
    %5481 = vmatpush.bf16.msra.mxu0 0
    %5482 = vmatpush.bf16.msra.mxu0 0
    %5483 = vmatpush.bf16.msra.mxu0 0
    %5484 = vmatpush.bf16.msra.mxu0 0
    %5485 = vmatpush.bf16.msra.mxu0 %v4896
    %5486 = vmatmul.bf16.gmra.mxu0 %v5196
    %v5487 = vpop.f32.mrf.mxu0
    %v5488 = vadd.f32 %v5474, %v5487
    %v5489 = vpop.f32.mrf.mxu0
    %v5490 = vadd.f32 %v5476, %v5489
    %5491 = vdwg.mxu0
    %5492 = vmatpush.bf16.msra.mxu0 %v4651
    %5493 = vmatpush.bf16.msra.mxu0 %v4645
    %5494 = vmatpush.bf16.msra.mxu0 %v4639
    %5495 = vmatpush.bf16.msra.mxu0 %v4633
    %5496 = vmatpush.bf16.msra.mxu0 %v4627
    %5497 = vmatpush.bf16.msra.mxu0 %v4621
    %5498 = vmatpush.bf16.msra.mxu0 %v4615
    %5499 = vmatpush.bf16.msra.mxu0 %v4609
    %5500 = vmatmul.bf16.gmra.mxu0 %v3711
    %v5501 = vpop.f32.mrf.mxu0
    %v5502 = vadd.f32 %v3682, %v5501
    %v5503 = vpop.f32.mrf.mxu0
    %v5504 = vadd.f32 %v3687, %v5503
    %5505 = vdwg.mxu0
    %5506 = vmatpush.bf16.msra.mxu0 %v4699
    %5507 = vmatpush.bf16.msra.mxu0 %v4693
    %5508 = vmatpush.bf16.msra.mxu0 %v4687
    %5509 = vmatpush.bf16.msra.mxu0 %v4681
    %5510 = vmatpush.bf16.msra.mxu0 %v4675
    %5511 = vmatpush.bf16.msra.mxu0 %v4669
    %5512 = vmatpush.bf16.msra.mxu0 %v4663
    %5513 = vmatpush.bf16.msra.mxu0 %v4657
    %5514 = vmatmul.bf16.gmra.mxu0 %v3712
    %v5515 = vpop.f32.mrf.mxu0
    %v5516 = vadd.f32 %v5502, %v5515
    %v5517 = vpop.f32.mrf.mxu0
    %v5518 = vadd.f32 %v5504, %v5517
    %5519 = vdwg.mxu0
    %5520 = vmatpush.bf16.msra.mxu0 %v4747
    %5521 = vmatpush.bf16.msra.mxu0 %v4741
    %5522 = vmatpush.bf16.msra.mxu0 %v4735
    %5523 = vmatpush.bf16.msra.mxu0 %v4729
    %5524 = vmatpush.bf16.msra.mxu0 %v4723
    %5525 = vmatpush.bf16.msra.mxu0 %v4717
    %5526 = vmatpush.bf16.msra.mxu0 %v4711
    %5527 = vmatpush.bf16.msra.mxu0 %v4705
    %5528 = vmatmul.bf16.gmra.mxu0 %v3713
    %v5529 = vpop.f32.mrf.mxu0
    %v5530 = vadd.f32 %v5516, %v5529
    %v5531 = vpop.f32.mrf.mxu0
    %v5532 = vadd.f32 %v5518, %v5531
    %5533 = vdwg.mxu0
    %5534 = vmatpush.bf16.msra.mxu0 %v4795
    %5535 = vmatpush.bf16.msra.mxu0 %v4789
    %5536 = vmatpush.bf16.msra.mxu0 %v4783
    %5537 = vmatpush.bf16.msra.mxu0 %v4777
    %5538 = vmatpush.bf16.msra.mxu0 %v4771
    %5539 = vmatpush.bf16.msra.mxu0 %v4765
    %5540 = vmatpush.bf16.msra.mxu0 %v4759
    %5541 = vmatpush.bf16.msra.mxu0 %v4753
    %5542 = vmatmul.bf16.gmra.mxu0 %v3714
    %v5543 = vpop.f32.mrf.mxu0
    %v5544 = vadd.f32 %v5530, %v5543
    %v5545 = vpop.f32.mrf.mxu0
    %v5546 = vadd.f32 %v5532, %v5545
    %5547 = vdwg.mxu0
    %5548 = vmatpush.bf16.msra.mxu0 %v4843
    %5549 = vmatpush.bf16.msra.mxu0 %v4837
    %5550 = vmatpush.bf16.msra.mxu0 %v4831
    %5551 = vmatpush.bf16.msra.mxu0 %v4825
    %5552 = vmatpush.bf16.msra.mxu0 %v4819
    %5553 = vmatpush.bf16.msra.mxu0 %v4813
    %5554 = vmatpush.bf16.msra.mxu0 %v4807
    %5555 = vmatpush.bf16.msra.mxu0 %v4801
    %5556 = vmatmul.bf16.gmra.mxu0 %v3715
    %v5557 = vpop.f32.mrf.mxu0
    %v5558 = vadd.f32 %v5544, %v5557
    %v5559 = vpop.f32.mrf.mxu0
    %v5560 = vadd.f32 %v5546, %v5559
    %5561 = vdwg.mxu0
    %5562 = vmatpush.bf16.msra.mxu0 %v4891
    %5563 = vmatpush.bf16.msra.mxu0 %v4885
    %5564 = vmatpush.bf16.msra.mxu0 %v4879
    %5565 = vmatpush.bf16.msra.mxu0 %v4873
    %5566 = vmatpush.bf16.msra.mxu0 %v4867
    %5567 = vmatpush.bf16.msra.mxu0 %v4861
    %5568 = vmatpush.bf16.msra.mxu0 %v4855
    %5569 = vmatpush.bf16.msra.mxu0 %v4849
    %5570 = vmatmul.bf16.gmra.mxu0 %v3716
    %v5571 = vpop.f32.mrf.mxu0
    %v5572 = vadd.f32 %v5558, %v5571
    %v5573 = vpop.f32.mrf.mxu0
    %v5574 = vadd.f32 %v5560, %v5573
    %5575 = vdwg.mxu0
    %5576 = vmatpush.bf16.msra.mxu0 0
    %5577 = vmatpush.bf16.msra.mxu0 0
    %5578 = vmatpush.bf16.msra.mxu0 0
    %5579 = vmatpush.bf16.msra.mxu0 0
    %5580 = vmatpush.bf16.msra.mxu0 0
    %5581 = vmatpush.bf16.msra.mxu0 0
    %5582 = vmatpush.bf16.msra.mxu0 0
    %5583 = vmatpush.bf16.msra.mxu0 %v4897
    %5584 = vmatmul.bf16.gmra.mxu0 %v5196
    %v5585 = vpop.f32.mrf.mxu0
    %v5586 = vadd.f32 %v5572, %v5585
    %v5587 = vpop.f32.mrf.mxu0
    %v5588 = vadd.f32 %v5574, %v5587
    %5589 = vdwg.mxu0
    %5590 = vmatpush.bf16.msra.mxu0 %v4652
    %5591 = vmatpush.bf16.msra.mxu0 %v4646
    %5592 = vmatpush.bf16.msra.mxu0 %v4640
    %5593 = vmatpush.bf16.msra.mxu0 %v4634
    %5594 = vmatpush.bf16.msra.mxu0 %v4628
    %5595 = vmatpush.bf16.msra.mxu0 %v4622
    %5596 = vmatpush.bf16.msra.mxu0 %v4616
    %5597 = vmatpush.bf16.msra.mxu0 %v4610
    %5598 = vmatmul.bf16.gmra.mxu0 %v3711
    %v5599 = vpop.f32.mrf.mxu0
    %v5600 = vadd.f32 %v3682, %v5599
    %v5601 = vpop.f32.mrf.mxu0
    %v5602 = vadd.f32 %v3687, %v5601
    %5603 = vdwg.mxu0
    %5604 = vmatpush.bf16.msra.mxu0 %v4700
    %5605 = vmatpush.bf16.msra.mxu0 %v4694
    %5606 = vmatpush.bf16.msra.mxu0 %v4688
    %5607 = vmatpush.bf16.msra.mxu0 %v4682
    %5608 = vmatpush.bf16.msra.mxu0 %v4676
    %5609 = vmatpush.bf16.msra.mxu0 %v4670
    %5610 = vmatpush.bf16.msra.mxu0 %v4664
    %5611 = vmatpush.bf16.msra.mxu0 %v4658
    %5612 = vmatmul.bf16.gmra.mxu0 %v3712
    %v5613 = vpop.f32.mrf.mxu0
    %v5614 = vadd.f32 %v5600, %v5613
    %v5615 = vpop.f32.mrf.mxu0
    %v5616 = vadd.f32 %v5602, %v5615
    %5617 = vdwg.mxu0
    %5618 = vmatpush.bf16.msra.mxu0 %v4748
    %5619 = vmatpush.bf16.msra.mxu0 %v4742
    %5620 = vmatpush.bf16.msra.mxu0 %v4736
    %5621 = vmatpush.bf16.msra.mxu0 %v4730
    %5622 = vmatpush.bf16.msra.mxu0 %v4724
    %5623 = vmatpush.bf16.msra.mxu0 %v4718
    %5624 = vmatpush.bf16.msra.mxu0 %v4712
    %5625 = vmatpush.bf16.msra.mxu0 %v4706
    %5626 = vmatmul.bf16.gmra.mxu0 %v3713
    %v5627 = vpop.f32.mrf.mxu0
    %v5628 = vadd.f32 %v5614, %v5627
    %v5629 = vpop.f32.mrf.mxu0
    %v5630 = vadd.f32 %v5616, %v5629
    %5631 = vdwg.mxu0
    %5632 = vmatpush.bf16.msra.mxu0 %v4796
    %5633 = vmatpush.bf16.msra.mxu0 %v4790
    %5634 = vmatpush.bf16.msra.mxu0 %v4784
    %5635 = vmatpush.bf16.msra.mxu0 %v4778
    %5636 = vmatpush.bf16.msra.mxu0 %v4772
    %5637 = vmatpush.bf16.msra.mxu0 %v4766
    %5638 = vmatpush.bf16.msra.mxu0 %v4760
    %5639 = vmatpush.bf16.msra.mxu0 %v4754
    %5640 = vmatmul.bf16.gmra.mxu0 %v3714
    %v5641 = vpop.f32.mrf.mxu0
    %v5642 = vadd.f32 %v5628, %v5641
    %v5643 = vpop.f32.mrf.mxu0
    %v5644 = vadd.f32 %v5630, %v5643
    %5645 = vdwg.mxu0
    %5646 = vmatpush.bf16.msra.mxu0 %v4844
    %5647 = vmatpush.bf16.msra.mxu0 %v4838
    %5648 = vmatpush.bf16.msra.mxu0 %v4832
    %5649 = vmatpush.bf16.msra.mxu0 %v4826
    %5650 = vmatpush.bf16.msra.mxu0 %v4820
    %5651 = vmatpush.bf16.msra.mxu0 %v4814
    %5652 = vmatpush.bf16.msra.mxu0 %v4808
    %5653 = vmatpush.bf16.msra.mxu0 %v4802
    %5654 = vmatmul.bf16.gmra.mxu0 %v3715
    %v5655 = vpop.f32.mrf.mxu0
    %v5656 = vadd.f32 %v5642, %v5655
    %v5657 = vpop.f32.mrf.mxu0
    %v5658 = vadd.f32 %v5644, %v5657
    %5659 = vdwg.mxu0
    %5660 = vmatpush.bf16.msra.mxu0 %v4892
    %5661 = vmatpush.bf16.msra.mxu0 %v4886
    %5662 = vmatpush.bf16.msra.mxu0 %v4880
    %5663 = vmatpush.bf16.msra.mxu0 %v4874
    %5664 = vmatpush.bf16.msra.mxu0 %v4868
    %5665 = vmatpush.bf16.msra.mxu0 %v4862
    %5666 = vmatpush.bf16.msra.mxu0 %v4856
    %5667 = vmatpush.bf16.msra.mxu0 %v4850
    %5668 = vmatmul.bf16.gmra.mxu0 %v3716
    %v5669 = vpop.f32.mrf.mxu0
    %v5670 = vadd.f32 %v5656, %v5669
    %v5671 = vpop.f32.mrf.mxu0
    %v5672 = vadd.f32 %v5658, %v5671
    %5673 = vdwg.mxu0
    %5674 = vmatpush.bf16.msra.mxu0 0
    %5675 = vmatpush.bf16.msra.mxu0 0
    %5676 = vmatpush.bf16.msra.mxu0 0
    %5677 = vmatpush.bf16.msra.mxu0 0
    %5678 = vmatpush.bf16.msra.mxu0 0
    %5679 = vmatpush.bf16.msra.mxu0 0
    %5680 = vmatpush.bf16.msra.mxu0 0
    %5681 = vmatpush.bf16.msra.mxu0 %v4898
    %5682 = vmatmul.bf16.gmra.mxu0 %v5196
    %v5683 = vpop.f32.mrf.mxu0
    %v5684 = vadd.f32 %v5670, %v5683
    %v5685 = vpop.f32.mrf.mxu0
    %v5686 = vadd.f32 %v5672, %v5685
    %5687 = vdwg.mxu0
    %5688 = vmatpush.bf16.msra.mxu0 %v4653
    %5689 = vmatpush.bf16.msra.mxu0 %v4647
    %5690 = vmatpush.bf16.msra.mxu0 %v4641
    %5691 = vmatpush.bf16.msra.mxu0 %v4635
    %5692 = vmatpush.bf16.msra.mxu0 %v4629
    %5693 = vmatpush.bf16.msra.mxu0 %v4623
    %5694 = vmatpush.bf16.msra.mxu0 %v4617
    %5695 = vmatpush.bf16.msra.mxu0 %v4611
    %5696 = vmatmul.bf16.gmra.mxu0 %v3711
    %v5697 = vpop.f32.mrf.mxu0
    %v5698 = vadd.f32 %v3682, %v5697
    %v5699 = vpop.f32.mrf.mxu0
    %v5700 = vadd.f32 %v3687, %v5699
    %5701 = vdwg.mxu0
    %5702 = vmatpush.bf16.msra.mxu0 %v4701
    %5703 = vmatpush.bf16.msra.mxu0 %v4695
    %5704 = vmatpush.bf16.msra.mxu0 %v4689
    %5705 = vmatpush.bf16.msra.mxu0 %v4683
    %5706 = vmatpush.bf16.msra.mxu0 %v4677
    %5707 = vmatpush.bf16.msra.mxu0 %v4671
    %5708 = vmatpush.bf16.msra.mxu0 %v4665
    %5709 = vmatpush.bf16.msra.mxu0 %v4659
    %5710 = vmatmul.bf16.gmra.mxu0 %v3712
    %v5711 = vpop.f32.mrf.mxu0
    %v5712 = vadd.f32 %v5698, %v5711
    %v5713 = vpop.f32.mrf.mxu0
    %v5714 = vadd.f32 %v5700, %v5713
    %5715 = vdwg.mxu0
    %5716 = vmatpush.bf16.msra.mxu0 %v4749
    %5717 = vmatpush.bf16.msra.mxu0 %v4743
    %5718 = vmatpush.bf16.msra.mxu0 %v4737
    %5719 = vmatpush.bf16.msra.mxu0 %v4731
    %5720 = vmatpush.bf16.msra.mxu0 %v4725
    %5721 = vmatpush.bf16.msra.mxu0 %v4719
    %5722 = vmatpush.bf16.msra.mxu0 %v4713
    %5723 = vmatpush.bf16.msra.mxu0 %v4707
    %5724 = vmatmul.bf16.gmra.mxu0 %v3713
    %v5725 = vpop.f32.mrf.mxu0
    %v5726 = vadd.f32 %v5712, %v5725
    %v5727 = vpop.f32.mrf.mxu0
    %v5728 = vadd.f32 %v5714, %v5727
    %5729 = vdwg.mxu0
    %5730 = vmatpush.bf16.msra.mxu0 %v4797
    %5731 = vmatpush.bf16.msra.mxu0 %v4791
    %5732 = vmatpush.bf16.msra.mxu0 %v4785
    %5733 = vmatpush.bf16.msra.mxu0 %v4779
    %5734 = vmatpush.bf16.msra.mxu0 %v4773
    %5735 = vmatpush.bf16.msra.mxu0 %v4767
    %5736 = vmatpush.bf16.msra.mxu0 %v4761
    %5737 = vmatpush.bf16.msra.mxu0 %v4755
    %5738 = vmatmul.bf16.gmra.mxu0 %v3714
    %v5739 = vpop.f32.mrf.mxu0
    %v5740 = vadd.f32 %v5726, %v5739
    %v5741 = vpop.f32.mrf.mxu0
    %v5742 = vadd.f32 %v5728, %v5741
    %5743 = vdwg.mxu0
    %5744 = vmatpush.bf16.msra.mxu0 %v4845
    %5745 = vmatpush.bf16.msra.mxu0 %v4839
    %5746 = vmatpush.bf16.msra.mxu0 %v4833
    %5747 = vmatpush.bf16.msra.mxu0 %v4827
    %5748 = vmatpush.bf16.msra.mxu0 %v4821
    %5749 = vmatpush.bf16.msra.mxu0 %v4815
    %5750 = vmatpush.bf16.msra.mxu0 %v4809
    %5751 = vmatpush.bf16.msra.mxu0 %v4803
    %5752 = vmatmul.bf16.gmra.mxu0 %v3715
    %v5753 = vpop.f32.mrf.mxu0
    %v5754 = vadd.f32 %v5740, %v5753
    %v5755 = vpop.f32.mrf.mxu0
    %v5756 = vadd.f32 %v5742, %v5755
    %5757 = vdwg.mxu0
    %5758 = vmatpush.bf16.msra.mxu0 %v4893
    %5759 = vmatpush.bf16.msra.mxu0 %v4887
    %5760 = vmatpush.bf16.msra.mxu0 %v4881
    %5761 = vmatpush.bf16.msra.mxu0 %v4875
    %5762 = vmatpush.bf16.msra.mxu0 %v4869
    %5763 = vmatpush.bf16.msra.mxu0 %v4863
    %5764 = vmatpush.bf16.msra.mxu0 %v4857
    %5765 = vmatpush.bf16.msra.mxu0 %v4851
    %5766 = vmatmul.bf16.gmra.mxu0 %v3716
    %v5767 = vpop.f32.mrf.mxu0
    %v5768 = vadd.f32 %v5754, %v5767
    %v5769 = vpop.f32.mrf.mxu0
    %v5770 = vadd.f32 %v5756, %v5769
    %5771 = vdwg.mxu0
    %5772 = vmatpush.bf16.msra.mxu0 0
    %5773 = vmatpush.bf16.msra.mxu0 0
    %5774 = vmatpush.bf16.msra.mxu0 0
    %5775 = vmatpush.bf16.msra.mxu0 0
    %5776 = vmatpush.bf16.msra.mxu0 0
    %5777 = vmatpush.bf16.msra.mxu0 0
    %5778 = vmatpush.bf16.msra.mxu0 0
    %5779 = vmatpush.bf16.msra.mxu0 %v4899
    %5780 = vmatmul.bf16.gmra.mxu0 %v5196
    %v5781 = vpop.f32.mrf.mxu0
    %v5782 = vadd.f32 %v5768, %v5781
    %v5783 = vpop.f32.mrf.mxu0
    %v5784 = vadd.f32 %v5770, %v5783
    %5785 = vdwg.mxu0
    %v5786 = vxor.u32 %v5294, 2147483648
    %v5787 = vxor.u32 %v5392, 2147483648
    %v5788 = vxor.u32 %v5490, 2147483648
    %v5789 = vxor.u32 %v5588, 2147483648
    %v5790 = vxor.u32 %v5686, 2147483648
    %v5791 = vxor.u32 %v5784, 2147483648
    %v5792 = vmul.f32 %v5786, 1.442695
    %v5793 = vpow.pop %v5792
    %v5794 = vmul.f32 %v5787, 1.442695
    %v5795 = vpow.pop %v5794
    %v5796 = vmul.f32 %v5788, 1.442695
    %v5797 = vpow.pop %v5796
    %v5798 = vmul.f32 %v5789, 1.442695
    %v5799 = vpow.pop %v5798
    %v5800 = vmul.f32 %v5790, 1.442695
    %v5801 = vpow.pop %v5800
    %v5802 = vmul.f32 %v5791, 1.442695
    %v5803 = vpow.pop %v5802
    %v5804 = vadd.f32 %v5793, 1.0
    %v5805 = vadd.f32 %v5795, 1.0
    %v5806 = vadd.f32 %v5797, 1.0
    %v5807 = vadd.f32 %v5799, 1.0
    %v5808 = vadd.f32 %v5801, 1.0
    %v5809 = vadd.f32 %v5803, 1.0
    %v5810 = vrcp.pop %v5804
    %v5811 = vmul.f32 %v5804, %v5810
    %v5812 = vsub.f32 1.0, %v5811
    %v5813 = vmul.f32 %v5810, %v5812
    %v5814 = vadd.f32 %v5810, %v5813
    %vm5815 = vweird.f32 %v5804
    %vm5816 = vweird.f32 %v5810
    %vm5817 = vmor %vm5815, %vm5816
    %v5818 = vsel %vm5817, %v5810, %v5814
    %v5819 = vand.u32 2147483647, %v5804
    %vm5820 = vcmp.eq.f32.partialorder %v5819, 8.507059e+37
    %v5821 = vand.u32 %v5804, 2147483648
    %v5822 = vor.u32 1.1754944e-38, %v5821
    %v5823 = vsel %vm5820, %v5822, %v5818
    %v5824 = vmul.f32 1.0, %v5823
    %v5825 = vrcp.pop %v5805
    %v5826 = vmul.f32 %v5805, %v5825
    %v5827 = vsub.f32 1.0, %v5826
    %v5828 = vmul.f32 %v5825, %v5827
    %v5829 = vadd.f32 %v5825, %v5828
    %vm5830 = vweird.f32 %v5805
    %vm5831 = vweird.f32 %v5825
    %vm5832 = vmor %vm5830, %vm5831
    %v5833 = vsel %vm5832, %v5825, %v5829
    %v5834 = vand.u32 2147483647, %v5805
    %vm5835 = vcmp.eq.f32.partialorder %v5834, 8.507059e+37
    %v5836 = vand.u32 %v5805, 2147483648
    %v5837 = vor.u32 1.1754944e-38, %v5836
    %v5838 = vsel %vm5835, %v5837, %v5833
    %v5839 = vmul.f32 1.0, %v5838
    %v5840 = vrcp.pop %v5806
    %v5841 = vmul.f32 %v5806, %v5840
    %v5842 = vsub.f32 1.0, %v5841
    %v5843 = vmul.f32 %v5840, %v5842
    %v5844 = vadd.f32 %v5840, %v5843
    %vm5845 = vweird.f32 %v5806
    %vm5846 = vweird.f32 %v5840
    %vm5847 = vmor %vm5845, %vm5846
    %v5848 = vsel %vm5847, %v5840, %v5844
    %v5849 = vand.u32 2147483647, %v5806
    %vm5850 = vcmp.eq.f32.partialorder %v5849, 8.507059e+37
    %v5851 = vand.u32 %v5806, 2147483648
    %v5852 = vor.u32 1.1754944e-38, %v5851
    %v5853 = vsel %vm5850, %v5852, %v5848
    %v5854 = vmul.f32 1.0, %v5853
    %v5855 = vrcp.pop %v5807
    %v5856 = vmul.f32 %v5807, %v5855
    %v5857 = vsub.f32 1.0, %v5856
    %v5858 = vmul.f32 %v5855, %v5857
    %v5859 = vadd.f32 %v5855, %v5858
    %vm5860 = vweird.f32 %v5807
    %vm5861 = vweird.f32 %v5855
    %vm5862 = vmor %vm5860, %vm5861
    %v5863 = vsel %vm5862, %v5855, %v5859
    %v5864 = vand.u32 2147483647, %v5807
    %vm5865 = vcmp.eq.f32.partialorder %v5864, 8.507059e+37
    %v5866 = vand.u32 %v5807, 2147483648
    %v5867 = vor.u32 1.1754944e-38, %v5866
    %v5868 = vsel %vm5865, %v5867, %v5863
    %v5869 = vmul.f32 1.0, %v5868
    %v5870 = vrcp.pop %v5808
    %v5871 = vmul.f32 %v5808, %v5870
    %v5872 = vsub.f32 1.0, %v5871
    %v5873 = vmul.f32 %v5870, %v5872
    %v5874 = vadd.f32 %v5870, %v5873
    %vm5875 = vweird.f32 %v5808
    %vm5876 = vweird.f32 %v5870
    %vm5877 = vmor %vm5875, %vm5876
    %v5878 = vsel %vm5877, %v5870, %v5874
    %v5879 = vand.u32 2147483647, %v5808
    %vm5880 = vcmp.eq.f32.partialorder %v5879, 8.507059e+37
    %v5881 = vand.u32 %v5808, 2147483648
    %v5882 = vor.u32 1.1754944e-38, %v5881
    %v5883 = vsel %vm5880, %v5882, %v5878
    %v5884 = vmul.f32 1.0, %v5883
    %v5885 = vrcp.pop %v5809
    %v5886 = vmul.f32 %v5809, %v5885
    %v5887 = vsub.f32 1.0, %v5886
    %v5888 = vmul.f32 %v5885, %v5887
    %v5889 = vadd.f32 %v5885, %v5888
    %vm5890 = vweird.f32 %v5809
    %vm5891 = vweird.f32 %v5885
    %vm5892 = vmor %vm5890, %vm5891
    %v5893 = vsel %vm5892, %v5885, %v5889
    %v5894 = vand.u32 2147483647, %v5809
    %vm5895 = vcmp.eq.f32.partialorder %v5894, 8.507059e+37
    %v5896 = vand.u32 %v5809, 2147483648
    %v5897 = vor.u32 1.1754944e-38, %v5896
    %v5898 = vsel %vm5895, %v5897, %v5893
    %v5899 = vmul.f32 1.0, %v5898
    %v5900 = vmul.f32 %v5292, %v5824
    %v5901 = vmul.f32 %v5390, %v5839
    %v5902 = vmul.f32 %v5488, %v5854
    %v5903 = vmul.f32 %v5586, %v5869
    %v5904 = vmul.f32 %v5684, %v5884
    %v5905 = vmul.f32 %v5782, %v5899
    %5906 = vst [vmem:[#allocation8] sm:$0xff] %v5900
    %5907 = vst [vmem:[#allocation8 + $0x8] sm:$0xff] %v5901
    %5908 = vst [vmem:[#allocation8 + $0x10] sm:$0xff] %v5902
    %s5909 = scalar_lea.vmem [#allocation8], 24
    %5910 = vst [vmem:[%s5909] sm:$0xff] %v5903
    %5911 = vst [vmem:[%s5909 + $0x8] sm:$0xff] %v5904
    %5912 = vst [vmem:[%s5909 + $0x10] sm:$0xff] %v5905
    // Predicated region
    $region22: #{tpu_custom_call.1} parent=1 // pred_check
      _
    $region23: #{tpu_custom_call.1} parent=1 // pred_check_branch
      %5914 = sbr.rel (0) target = $region25
    $region24: #{tpu_custom_call.1} parent=1 // pred_region
      %5916 = vsyncadd [#allocation5], 0
      %s5917 = sshll.u32 [#allocation8], 4
      %s5918 = int_to_ptr.vmem [resolvable:$true] %s5917
      %s5919 = sshll.u32 %s3, 4
      %s5920 = int_to_ptr.hbm [resolvable:$true] %s5919
      %5925 = dma.vmem_to_hbm [thread:$0]  %s5918, 768, %s5920, [#allocation5], 384, 384, 24
    $region25: #{tpu_custom_call.1} parent=1 // pred_fallthru
      _
    // Predicated region
    $region26: #{tpu_custom_call.1} parent=1 // pred_check
      _
    $region27: #{tpu_custom_call.1} parent=1 // pred_check_branch
      %5927 = sbr.rel (0) target = $region29
    $region28: #{tpu_custom_call.1} parent=1 // pred_region
      %5929 = dma.done [#allocation5], 768
    $region29: #{tpu_custom_call.1} parent=1 // pred_fallthru
      _
    %5930 = vsyncpa [#allocation4], 1
    %5931 = vsyncpa [#allocation7], 1
    %5932 = vsyncpa [#allocation5], 1

</llo_original>
